<compile_context>
chip_gen: v7x
topology: tpu7x:2x2x1
jax: 0.10.0
libtpu: 0.0.40
codegen_flags: <defaults>
</compile_context>

<pallas_src>
import functools

import numpy as np
import jax
import jax.numpy as jnp
from jax.experimental import pallas as pl
from jax.experimental.pallas import tpu as pltpu

SMALL_NUMBER = 1e-8


def _round_up(x, m):
    return ((x + m - 1) // m) * m


def _vmem_limit_bytes():
    # Per-generation scoped-VMEM budget: ~75% of physical VMEM, with a conservative fallback.
    try:
        cap = int(pltpu.get_tpu_info().vmem_capacity_bytes)
        return max(cap * 3 // 4, 32 * 1024 * 1024)
    except Exception:
        return 64 * 1024 * 1024


# ----------------------------------------------------------------------------
# Fused Pallas kernel: all GGNN propagation timesteps + gated readout.
#   msgs = (sum_e (A_e @ h) @ W_e  +  sum_e rowsum(A_e) b_e) * inv_div
#   h'   = GRUCell(msgs, h)                       (PyTorch nn.GRUCell semantics)
#   out  = sigmoid(raw_in @ Wg_a + h @ Wg_b + bg) * (h @ Wt + bt)
# Everything is padded to DP = round_up(D, 128) lanes; padded lanes are exact zeros.
# ----------------------------------------------------------------------------
def _ggnn_fused_kernel(layer_timesteps, e_total, n_nodes,
                       raw_in_ref, a_rows_ref, inv_ref, bias_ref,
                       w_msg_ref, w_ih_ref, b_ih_ref, w_hh_ref, b_hh_ref,
                       graph_ref, wg_a_ref, wg_b_ref, b_gate_ref,
                       w_trans_ref, b_trans_ref,
                       nodewise_ref, graphwise_ref):
    f32, bf16 = jnp.float32, jnp.bfloat16
    dp = raw_in_ref.shape[1]                         # lane-padded hidden size

    raw_in = raw_in_ref[...]                         # (N, DP) f32, pad lanes are zero
    h = raw_in

    for layer_idx, steps in enumerate(layer_timesteps):
        for _ in range(steps):
            h_bf = h.astype(bf16)

            # GRU hidden-side gates: (N, DP) @ (DP, 3*DP); each gate block is 128-lane aligned.
            gh = jnp.dot(h_bf, w_hh_ref[layer_idx],
                         preferred_element_type=f32) + b_hh_ref[layer_idx]

            # Reordered aggregation:  AH = A_rows @ h  (one MXU push, K = N).
            ah = jnp.dot(a_rows_ref[...], h_bf, preferred_element_type=f32)   # (E*N, DP)
            ah_bf = ah.astype(bf16)

            # msgs = sum_e AH_e @ W_e + hoisted edge-bias term, then hoisted mean divisor.
            acc = bias_ref[layer_idx]                                          # (N, DP) f32
            for e in range(e_total):
                acc = acc + jnp.dot(ah_bf[e * n_nodes:(e + 1) * n_nodes, :],
                                    w_msg_ref[layer_idx * e_total + e],
                                    preferred_element_type=f32)
            msgs = acc * inv_ref[...]

            # GRU input-side gates + update (PyTorch gate order r, z, n).
            gi = jnp.dot(msgs.astype(bf16), w_ih_ref[layer_idx],
                         preferred_element_type=f32) + b_ih_ref[layer_idx]
            r = jax.nn.sigmoid(gi[:, :dp] + gh[:, :dp])
            z = jax.nn.sigmoid(gi[:, dp:2 * dp] + gh[:, dp:2 * dp])
            n = jnp.tanh(gi[:, 2 * dp:] + r * gh[:, 2 * dp:])
            h = (1.0 - z) * n + z * h

    # Gated readout (W_gate split into raw_in / h halves: no (N, 2D) concat scratch).
    h_bf = h.astype(bf16)
    gating = jax.nn.sigmoid(
        jnp.dot(raw_in.astype(bf16), wg_a_ref[...], preferred_element_type=f32)
        + jnp.dot(h_bf, wg_b_ref[...], preferred_element_type=f32)
        + b_gate_ref[...])
    trans = jnp.dot(h_bf, w_trans_ref[...], preferred_element_type=f32) + b_trans_ref[...]
    nodewise = gating * trans                                                  # (N, CPAD) f32
    nodewise_ref[...] = nodewise
    graphwise_ref[...] = jnp.dot(graph_ref[...], nodewise, preferred_element_type=f32)


def ggnn_fused_forward(kp, raw_in_pad, layer_timesteps, num_classes):
    """Runs all propagation timesteps + readout as one (grid-less) pallas_call."""
    N, DP = raw_in_pad.shape
    EN = kp["a_rows"].shape[0]
    E = EN // N
    G = kp["graph_mat"].shape[0]
    CP = kp["wg_a"].shape[1]

    kernel = functools.partial(_ggnn_fused_kernel, tuple(layer_timesteps), E, N)
    vmem_spec = pl.BlockSpec(memory_space=pltpu.MemorySpace.VMEM)

    nodewise_pad, graphwise_pad = pl.pallas_call(
        kernel,
        out_shape=(jax.ShapeDtypeStruct((N, CP), jnp.float32),
                   jax.ShapeDtypeStruct((G, CP), jnp.float32)),
        in_specs=[vmem_spec] * 15,
        out_specs=(vmem_spec, vmem_spec),
        compiler_params=pltpu.CompilerParams(vmem_limit_bytes=_vmem_limit_bytes()),
    )(raw_in_pad, kp["a_rows"], kp["inv_div"], kp["bias_agg"],
      kp["w_msg"], kp["w_ih"], kp["b_ih"], kp["w_hh"], kp["b_hh"],
      kp["graph_mat"], kp["wg_a"], kp["wg_b"], kp["b_gate"],
      kp["w_trans"], kp["b_trans"])
    return nodewise_pad[:, :num_classes], graphwise_pad[:, :num_classes]


# ----------------------------------------------------------------------------
# Parameter init (torch layout, deterministic) and kernel-side preparation
# ----------------------------------------------------------------------------
def xavier_uniform(key, shape):
    fan_out, fan_in = shape
    bound = float(np.sqrt(6.0 / (fan_in + fan_out)))
    return jax.random.uniform(key, shape, jnp.float32, -bound, bound)


def init_params(key, *, vocab_size, emb_size, selector_size, hidden,
                edge_types_fb, num_layers, num_classes):
    del selector_size
    keys = iter(jax.random.split(key, 64))
    params = {}
    # NodeEmbeddings ('random' inst2vec + fixed selector embeddings)
    params["node_embs"] = jax.random.normal(next(keys), (vocab_size, emb_size),
                                            jnp.float32) * 0.1
    params["selector_embs"] = jnp.array([[0.0, 50.0], [50.0, 0.0]], jnp.float32)

    layers = []
    for _ in range(num_layers):
        w_msg = xavier_uniform(next(keys), (hidden * edge_types_fb, hidden))   # torch (out,in)
        # torch LinearNet zero-inits this bias; use small random values so the rowsum-folded
        # edge-bias path is actually exercised by the correctness check.
        b_msg = jax.random.uniform(next(keys), (1, hidden * edge_types_fb),
                                   jnp.float32, -0.1, 0.1)
        k = 1.0 / np.sqrt(hidden)
        w_ih = jax.random.uniform(next(keys), (3 * hidden, hidden), jnp.float32, -k, k)
        w_hh = jax.random.uniform(next(keys), (3 * hidden, hidden), jnp.float32, -k, k)
        b_ih = jax.random.uniform(next(keys), (1, 3 * hidden), jnp.float32, -k, k)
        b_hh = jax.random.uniform(next(keys), (1, 3 * hidden), jnp.float32, -k, k)
        layers.append(dict(w_msg_t=w_msg.T, b_msg=b_msg,
                           w_ih_t=w_ih.T, b_ih=b_ih, w_hh_t=w_hh.T, b_hh=b_hh))
    params["layers"] = layers

    # Readout
    w_gate = xavier_uniform(next(keys), (num_classes, 2 * hidden))
    w_trans = xavier_uniform(next(keys), (num_classes, hidden))
    params["readout"] = dict(
        wg_t=w_gate.T,                                    # (2D, C)
        b_gate=jnp.zeros((1, num_classes), jnp.float32),
        wt_t=w_trans.T,                                   # (D, C)
        b_trans=jnp.zeros((1, num_classes), jnp.float32))
    return params


def _pad_gru_w(w, d, dp):
    """(D, 3D) -> (DP, 3*DP) with each gate block independently 128-lane aligned."""
    w3 = w.reshape(d, 3, d)
    return jnp.pad(w3, ((0, dp - d), (0, 0), (0, dp - d))).reshape(dp, 3 * dp)


def _pad_gru_b(b, d, dp):
    b3 = b.reshape(1, 3, d)
    return jnp.pad(b3, ((0, 0), (0, 0), (0, dp - d))).reshape(1, 3 * dp)


def prepare_kernel_inputs(params, adjacency, graph_mat, hidden, num_classes):
    """Builds the stacked / padded / hoisted arrays the fused Pallas kernel consumes."""
    E, N, _ = adjacency.shape
    D = hidden
    DP = _round_up(D, 128)
    CP = _round_up(num_classes, 128)
    f32, bf16 = jnp.float32, jnp.bfloat16

    # Row-major stacked adjacency: a_rows[e*N + t, s] = adj[e, t, s].
    # NOTE: bf16 counts are exact only up to 256 edge multiplicity.
    a_rows = adjacency.reshape(E * N, N).astype(bf16)

    # Hoisted mean-aggregation divisor + per-layer aggregated edge bias (all f32).
    rowsums = jnp.sum(adjacency, axis=2).T                     # (N, E)
    bincount = jnp.sum(rowsums, axis=1, keepdims=True)         # (N, 1)
    inv_div = 1.0 / (jnp.where(bincount == 0.0, 1.0, bincount) + SMALL_NUMBER)

    w_msg_l, bias_l, w_ih_l, b_ih_l, w_hh_l, b_hh_l = [], [], [], [], [], []
    for p in params["layers"]:
        w_e = jnp.transpose(p["w_msg_t"].reshape(D, E, D), (1, 0, 2))      # (E, D, D)
        w_msg_l.append(jnp.pad(w_e, ((0, 0), (0, DP - D), (0, DP - D))))
        b_e = p["b_msg"].reshape(E, D)
        bias_l.append(jnp.pad(jnp.dot(rowsums, b_e), ((0, 0), (0, DP - D))))   # (N, DP)
        w_ih_l.append(_pad_gru_w(p["w_ih_t"], D, DP))
        b_ih_l.append(_pad_gru_b(p["b_ih"], D, DP))
        w_hh_l.append(_pad_gru_w(p["w_hh_t"], D, DP))
        b_hh_l.append(_pad_gru_b(p["b_hh"], D, DP))

    L = len(params["layers"])
    ro = params["readout"]
    wg = ro["wg_t"]                                            # (2D, C)
    return dict(
        a_rows=a_rows,
        inv_div=inv_div,
        bias_agg=jnp.stack(bias_l),                                        # (L, N, DP) f32
        w_msg=jnp.stack(w_msg_l).reshape(L * E, DP, DP).astype(bf16),      # (L*E, DP, DP)
        w_ih=jnp.stack(w_ih_l).astype(bf16),                               # (L, DP, 3*DP)
        b_ih=jnp.stack(b_ih_l),                                            # (L, 1, 3*DP) f32
        w_hh=jnp.stack(w_hh_l).astype(bf16),
        b_hh=jnp.stack(b_hh_l),
        graph_mat=graph_mat.astype(f32),                                   # (G, N)
        wg_a=jnp.pad(wg[:D], ((0, DP - D), (0, CP - num_classes))).astype(bf16),
        wg_b=jnp.pad(wg[D:], ((0, DP - D), (0, CP - num_classes))).astype(bf16),
        b_gate=jnp.pad(ro["b_gate"], ((0, 0), (0, CP - num_classes))),
        w_trans=jnp.pad(ro["wt_t"], ((0, DP - D), (0, CP - num_classes))).astype(bf16),
        b_trans=jnp.pad(ro["b_trans"], ((0, 0), (0, CP - num_classes))),
    )


def build_adjacency(edge_lists, num_nodes, backward_edges=True):
    """edge_lists: list of (M_i, 2) int arrays with columns (source, target)."""
    mats = []
    for el in edge_lists:
        a = jnp.zeros((num_nodes, num_nodes), jnp.float32)
        a = a.at[el[:, 1], el[:, 0]].add(1.0)          # adj[target, source] += 1
        mats.append(a)
    if backward_edges:
        mats = mats + [m.T for m in mats]              # flipped edge lists
    return jnp.stack(mats, axis=0)                     # (E, N, N)


def ggnn_model_forward(params, vocab_ids, labels, adjacency, selector_ids,
                       graph_mat, layer_timesteps, num_classes):
    # NodeEmbeddings (gather glue, outside the kernel)
    embs = params["node_embs"][vocab_ids]
    sel = params["selector_embs"][selector_ids]
    raw_in = jnp.concatenate([embs, sel], axis=1)      # (N, hidden)
    D = raw_in.shape[1]
    DP = _round_up(D, 128)
    raw_in_pad = jnp.pad(raw_in, ((0, 0), (0, DP - D)))

    # GGNNProper message passing + Readout: one fused Pallas kernel
    kp = prepare_kernel_inputs(params, adjacency, graph_mat, D, num_classes)
    nodewise, graphwise = ggnn_fused_forward(kp, raw_in_pad, layer_timesteps, num_classes)
    logits = graphwise                                  # has_graph_labels=True

    # Metrics glue
    targets = labels
    pred_targets = jnp.argmax(logits, axis=1)
    correct_preds = (pred_targets == targets).astype(jnp.float32)
    accuracy = jnp.mean(correct_preds)
    return (logits, accuracy, logits, correct_preds, targets, graphwise), (raw_in, nodewise)


# ----------------------------------------------------------------------------
# Pure-JAX reference (same math, same bf16-in / f32-accumulate cast points,
# same reordered aggregation; runs on XLA:TPU for comparison).
# ----------------------------------------------------------------------------
def reference_forward(params, raw_in, adjacency, graph_mat, layer_timesteps):
    f32, bf16 = jnp.float32, jnp.bfloat16
    E, N, _ = adjacency.shape
    D = raw_in.shape[1]
    a_bf = adjacency.astype(bf16)
    rowsums = jnp.sum(adjacency, axis=2).T
    bincount = jnp.sum(rowsums, axis=1, keepdims=True)
    inv_div = 1.0 / (jnp.where(bincount == 0.0, 1.0, bincount) + SMALL_NUMBER)

    h = raw_in
    for layer_idx, timesteps in enumerate(layer_timesteps):
        p = params["layers"][layer_idx]
        bias = jnp.dot(rowsums, p["b_msg"].reshape(E, D))            # (N, D) f32
        for _ in range(timesteps):
            hb = h.astype(bf16)
            gh = jnp.dot(hb, p["w_hh_t"].astype(bf16),
                         preferred_element_type=f32) + p["b_hh"]
            acc = bias
            for e in range(E):
                ah = jnp.dot(a_bf[e], hb, preferred_element_type=f32).astype(bf16)
                acc = acc + jnp.dot(ah, p["w_msg_t"][:, e * D:(e + 1) * D].astype(bf16),
                                    preferred_element_type=f32)
            msgs = acc * inv_div
            gi = jnp.dot(msgs.astype(bf16), p["w_ih_t"].astype(bf16),
                         preferred_element_type=f32) + p["b_ih"]
            r = jax.nn.sigmoid(gi[:, :D] + gh[:, :D])
            z = jax.nn.sigmoid(gi[:, D:2 * D] + gh[:, D:2 * D])
            n = jnp.tanh(gi[:, 2 * D:] + r * gh[:, 2 * D:])
            h = (1.0 - z) * n + z * h

    ro = params["readout"]
    rb = raw_in.astype(bf16)
    hb = h.astype(bf16)
    gating = jax.nn.sigmoid(
        jnp.dot(rb, ro["wg_t"][:D].astype(bf16), preferred_element_type=f32)
        + jnp.dot(hb, ro["wg_t"][D:].astype(bf16), preferred_element_type=f32)
        + ro["b_gate"])
    trans = jnp.dot(hb, ro["wt_t"].astype(bf16), preferred_element_type=f32) + ro["b_trans"]
    nodewise = gating * trans
    graphwise = jnp.dot(graph_mat.astype(f32), nodewise, preferred_element_type=f32)
    return graphwise, nodewise


if __name__ == "__main__":
    # Small deterministic problem
    N = 64                 # nodes
    EMB = 30
    SELECTOR = 2
    HIDDEN = EMB + SELECTOR            # 32
    EDGE_TYPES = 2
    BACKWARD = True
    E_FB = EDGE_TYPES * (2 if BACKWARD else 1)   # 4
    NUM_CLASSES = 4
    NUM_GRAPHS = 2
    VOCAB = 100
    LAYER_TIMESTEPS = [2, 1]
    M_EDGES = 96

    key = jax.random.PRNGKey(0)
    k_par, k_vocab, k_sel, k_e0, k_e1 = jax.random.split(key, 5)

    params = init_params(k_par, vocab_size=VOCAB, emb_size=EMB,
                         selector_size=SELECTOR, hidden=HIDDEN,
                         edge_types_fb=E_FB, num_layers=len(LAYER_TIMESTEPS),
                         num_classes=NUM_CLASSES)

    vocab_ids = jax.random.randint(k_vocab, (N,), 0, VOCAB, jnp.int32)
    selector_ids = jax.random.randint(k_sel, (N,), 0, 2, jnp.int32)
    edge_lists = [jax.random.randint(k_e0, (M_EDGES, 2), 0, N, jnp.int32),
                  jax.random.randint(k_e1, (M_EDGES, 2), 0, N, jnp.int32)]
    adjacency = build_adjacency(edge_lists, N, backward_edges=BACKWARD)   # (4, N, N)
    # bf16 adjacency storage is exact only for edge multiplicities <= 256.
    assert float(jnp.max(adjacency)) <= 256.0

    graph_nodes_list = jnp.concatenate(
        [jnp.zeros((N // 2,), jnp.int32), jnp.ones((N - N // 2,), jnp.int32)])
    graph_mat = (graph_nodes_list[None, :] ==
                 jnp.arange(NUM_GRAPHS, dtype=jnp.int32)[:, None]).astype(jnp.float32)
    labels = jnp.array([1, 3], jnp.int32)

    outputs, (raw_in, nodewise) = ggnn_model_forward(
        params, vocab_ids, labels, adjacency, selector_ids, graph_mat,
        LAYER_TIMESTEPS, NUM_CLASSES)
    logits, accuracy, _, correct_preds, targets, graphwise = outputs
    jax.block_until_ready(logits)
    jax.block_until_ready(accuracy)

    # verify against the pure-JAX reference (same bf16-in / f32-accumulate math)
    ref_graphwise, ref_nodewise = reference_forward(
        params, raw_in, adjacency, graph_mat, LAYER_TIMESTEPS)
    np.testing.assert_allclose(np.asarray(nodewise), np.asarray(ref_nodewise),
                               rtol=5e-3, atol=5e-3)
    np.testing.assert_allclose(np.asarray(graphwise), np.asarray(ref_graphwise),
                               rtol=5e-3, atol=5e-3)

    print("KERNEL_OK")
</pallas_src>

<mosaic_0001>
module attributes {stable_mosaic.version = 11 : i64} {
  func.func @_ggnn_fused_kernel(%arg0: memref<64x128xf32, #tpu.memory_space<vmem>>, %arg1: memref<256x64xbf16, #tpu.memory_space<vmem>>, %arg2: memref<64x1xf32, #tpu.memory_space<vmem>>, %arg3: memref<2x64x128xf32, #tpu.memory_space<vmem>>, %arg4: memref<8x128x128xbf16, #tpu.memory_space<vmem>>, %arg5: memref<2x128x384xbf16, #tpu.memory_space<vmem>>, %arg6: memref<2x1x384xf32, #tpu.memory_space<vmem>>, %arg7: memref<2x128x384xbf16, #tpu.memory_space<vmem>>, %arg8: memref<2x1x384xf32, #tpu.memory_space<vmem>>, %arg9: memref<2x64xf32, #tpu.memory_space<vmem>>, %arg10: memref<128x128xbf16, #tpu.memory_space<vmem>>, %arg11: memref<128x128xbf16, #tpu.memory_space<vmem>>, %arg12: memref<1x128xf32, #tpu.memory_space<vmem>>, %arg13: memref<128x128xbf16, #tpu.memory_space<vmem>>, %arg14: memref<1x128xf32, #tpu.memory_space<vmem>>, %arg15: memref<64x128xf32, #tpu.memory_space<vmem>>, %arg16: memref<2x128xf32, #tpu.memory_space<vmem>>) attributes {dimension_semantics = [], scalar_prefetch = 0 : i64, scratch_operands = 0 : i64, tpu.core_type = #tpu.core_type<tc>} {
    %c0 = arith.constant 0 : index
    %c0_0 = arith.constant 0 : index
    %0 = vector.load %arg0[%c0, %c0_0] : memref<64x128xf32, #tpu.memory_space<vmem>>, vector<64x128xf32>
    %1 = arith.truncf %0 : vector<64x128xf32> to vector<64x128xbf16>
    %c0_1 = arith.constant 0 : index
    %c0_2 = arith.constant 0 : index
    %c0_3 = arith.constant 0 : index
    %2 = vector.load %arg7[%c0_1, %c0_2, %c0_3] : memref<2x128x384xbf16, #tpu.memory_space<vmem>>, vector<1x128x384xbf16>
    %3 = vector.shape_cast %2 : vector<1x128x384xbf16> to vector<128x384xbf16>
    %cst = arith.constant dense<0.000000e+00> : vector<64x384xf32>
    %4 = tpu.matmul %1, %3, %cst {dimension_numbers = #tpu.dot_dimension_numbers<[1], [0], [0], [1], [0, 0, 1, 1], [], []>} : vector<64x128xbf16>, vector<128x384xbf16>, vector<64x384xf32> -> vector<64x384xf32>
    %c0_4 = arith.constant 0 : index
    %c0_5 = arith.constant 0 : index
    %c0_6 = arith.constant 0 : index
    %5 = vector.load %arg8[%c0_4, %c0_5, %c0_6] : memref<2x1x384xf32, #tpu.memory_space<vmem>>, vector<1x1x384xf32>
    %6 = vector.shape_cast %5 : vector<1x1x384xf32> to vector<1x384xf32>
    %7 = vector.broadcast %6 : vector<1x384xf32> to vector<64x384xf32>
    %8 = arith.addf %4, %7 : vector<64x384xf32>
    %c0_7 = arith.constant 0 : index
    %c0_8 = arith.constant 0 : index
    %9 = vector.load %arg1[%c0_7, %c0_8] : memref<256x64xbf16, #tpu.memory_space<vmem>>, vector<256x64xbf16>
    %cst_9 = arith.constant dense<0.000000e+00> : vector<256x128xf32>
    %10 = tpu.matmul %9, %1, %cst_9 {dimension_numbers = #tpu.dot_dimension_numbers<[1], [0], [0], [1], [0, 0, 1, 1], [], []>} : vector<256x64xbf16>, vector<64x128xbf16>, vector<256x128xf32> -> vector<256x128xf32>
    %11 = arith.truncf %10 : vector<256x128xf32> to vector<256x128xbf16>
    %c0_10 = arith.constant 0 : index
    %c0_11 = arith.constant 0 : index
    %c0_12 = arith.constant 0 : index
    %12 = vector.load %arg3[%c0_10, %c0_11, %c0_12] : memref<2x64x128xf32, #tpu.memory_space<vmem>>, vector<1x64x128xf32>
    %13 = vector.shape_cast %12 : vector<1x64x128xf32> to vector<64x128xf32>
    %14 = vector.extract_strided_slice %11 {offsets = [0, 0], sizes = [64, 128], strides = [1, 1]} : vector<256x128xbf16> to vector<64x128xbf16>
    %c0_13 = arith.constant 0 : index
    %c0_14 = arith.constant 0 : index
    %c0_15 = arith.constant 0 : index
    %15 = vector.load %arg4[%c0_13, %c0_14, %c0_15] : memref<8x128x128xbf16, #tpu.memory_space<vmem>>, vector<1x128x128xbf16>
    %16 = vector.shape_cast %15 : vector<1x128x128xbf16> to vector<128x128xbf16>
    %cst_16 = arith.constant dense<0.000000e+00> : vector<64x128xf32>
    %17 = tpu.matmul %14, %16, %cst_16 {dimension_numbers = #tpu.dot_dimension_numbers<[1], [0], [0], [1], [0, 0, 1, 1], [], []>} : vector<64x128xbf16>, vector<128x128xbf16>, vector<64x128xf32> -> vector<64x128xf32>
    %18 = arith.addf %13, %17 : vector<64x128xf32>
    %19 = vector.extract_strided_slice %11 {offsets = [64, 0], sizes = [64, 128], strides = [1, 1]} : vector<256x128xbf16> to vector<64x128xbf16>
    %c1 = arith.constant 1 : index
    %c0_17 = arith.constant 0 : index
    %c0_18 = arith.constant 0 : index
    %20 = vector.load %arg4[%c1, %c0_17, %c0_18] : memref<8x128x128xbf16, #tpu.memory_space<vmem>>, vector<1x128x128xbf16>
    %21 = vector.shape_cast %20 : vector<1x128x128xbf16> to vector<128x128xbf16>
    %cst_19 = arith.constant dense<0.000000e+00> : vector<64x128xf32>
    %22 = tpu.matmul %19, %21, %cst_19 {dimension_numbers = #tpu.dot_dimension_numbers<[1], [0], [0], [1], [0, 0, 1, 1], [], []>} : vector<64x128xbf16>, vector<128x128xbf16>, vector<64x128xf32> -> vector<64x128xf32>
    %23 = arith.addf %18, %22 : vector<64x128xf32>
    %24 = vector.extract_strided_slice %11 {offsets = [128, 0], sizes = [64, 128], strides = [1, 1]} : vector<256x128xbf16> to vector<64x128xbf16>
    %c2 = arith.constant 2 : index
    %c0_20 = arith.constant 0 : index
    %c0_21 = arith.constant 0 : index
    %25 = vector.load %arg4[%c2, %c0_20, %c0_21] : memref<8x128x128xbf16, #tpu.memory_space<vmem>>, vector<1x128x128xbf16>
    %26 = vector.shape_cast %25 : vector<1x128x128xbf16> to vector<128x128xbf16>
    %cst_22 = arith.constant dense<0.000000e+00> : vector<64x128xf32>
    %27 = tpu.matmul %24, %26, %cst_22 {dimension_numbers = #tpu.dot_dimension_numbers<[1], [0], [0], [1], [0, 0, 1, 1], [], []>} : vector<64x128xbf16>, vector<128x128xbf16>, vector<64x128xf32> -> vector<64x128xf32>
    %28 = arith.addf %23, %27 : vector<64x128xf32>
    %29 = vector.extract_strided_slice %11 {offsets = [192, 0], sizes = [64, 128], strides = [1, 1]} : vector<256x128xbf16> to vector<64x128xbf16>
    %c3 = arith.constant 3 : index
    %c0_23 = arith.constant 0 : index
    %c0_24 = arith.constant 0 : index
    %30 = vector.load %arg4[%c3, %c0_23, %c0_24] : memref<8x128x128xbf16, #tpu.memory_space<vmem>>, vector<1x128x128xbf16>
    %31 = vector.shape_cast %30 : vector<1x128x128xbf16> to vector<128x128xbf16>
    %cst_25 = arith.constant dense<0.000000e+00> : vector<64x128xf32>
    %32 = tpu.matmul %29, %31, %cst_25 {dimension_numbers = #tpu.dot_dimension_numbers<[1], [0], [0], [1], [0, 0, 1, 1], [], []>} : vector<64x128xbf16>, vector<128x128xbf16>, vector<64x128xf32> -> vector<64x128xf32>
    %33 = arith.addf %28, %32 : vector<64x128xf32>
    %c0_26 = arith.constant 0 : index
    %c0_27 = arith.constant 0 : index
    %34 = vector.load %arg2[%c0_26, %c0_27] : memref<64x1xf32, #tpu.memory_space<vmem>>, vector<64x1xf32>
    %35 = vector.broadcast %34 : vector<64x1xf32> to vector<64x128xf32>
    %36 = arith.mulf %33, %35 : vector<64x128xf32>
    %37 = arith.truncf %36 : vector<64x128xf32> to vector<64x128xbf16>
    %c0_28 = arith.constant 0 : index
    %c0_29 = arith.constant 0 : index
    %c0_30 = arith.constant 0 : index
    %38 = vector.load %arg5[%c0_28, %c0_29, %c0_30] : memref<2x128x384xbf16, #tpu.memory_space<vmem>>, vector<1x128x384xbf16>
    %39 = vector.shape_cast %38 : vector<1x128x384xbf16> to vector<128x384xbf16>
    %cst_31 = arith.constant dense<0.000000e+00> : vector<64x384xf32>
    %40 = tpu.matmul %37, %39, %cst_31 {dimension_numbers = #tpu.dot_dimension_numbers<[1], [0], [0], [1], [0, 0, 1, 1], [], []>} : vector<64x128xbf16>, vector<128x384xbf16>, vector<64x384xf32> -> vector<64x384xf32>
    %c0_32 = arith.constant 0 : index
    %c0_33 = arith.constant 0 : index
    %c0_34 = arith.constant 0 : index
    %41 = vector.load %arg6[%c0_32, %c0_33, %c0_34] : memref<2x1x384xf32, #tpu.memory_space<vmem>>, vector<1x1x384xf32>
    %42 = vector.shape_cast %41 : vector<1x1x384xf32> to vector<1x384xf32>
    %43 = vector.broadcast %42 : vector<1x384xf32> to vector<64x384xf32>
    %44 = arith.addf %40, %43 : vector<64x384xf32>
    %45 = vector.extract_strided_slice %44 {offsets = [0, 0], sizes = [64, 128], strides = [1, 1]} : vector<64x384xf32> to vector<64x128xf32>
    %46 = vector.extract_strided_slice %8 {offsets = [0, 0], sizes = [64, 128], strides = [1, 1]} : vector<64x384xf32> to vector<64x128xf32>
    %47 = arith.addf %45, %46 : vector<64x128xf32>
    %48 = arith.negf %47 : vector<64x128xf32>
    %49 = math.exp %48 : vector<64x128xf32>
    %cst_35 = arith.constant 1.000000e+00 : f32
    %50 = vector.broadcast %cst_35 : f32 to vector<64x128xf32>
    %51 = arith.addf %50, %49 : vector<64x128xf32>
    %52 = arith.divf %50, %51 : vector<64x128xf32>
    %53 = vector.extract_strided_slice %44 {offsets = [0, 128], sizes = [64, 128], strides = [1, 1]} : vector<64x384xf32> to vector<64x128xf32>
    %54 = vector.extract_strided_slice %8 {offsets = [0, 128], sizes = [64, 128], strides = [1, 1]} : vector<64x384xf32> to vector<64x128xf32>
    %55 = arith.addf %53, %54 : vector<64x128xf32>
    %56 = arith.negf %55 : vector<64x128xf32>
    %57 = math.exp %56 : vector<64x128xf32>
    %cst_36 = arith.constant 1.000000e+00 : f32
    %58 = vector.broadcast %cst_36 : f32 to vector<64x128xf32>
    %59 = arith.addf %58, %57 : vector<64x128xf32>
    %60 = arith.divf %58, %59 : vector<64x128xf32>
    %61 = vector.extract_strided_slice %44 {offsets = [0, 256], sizes = [64, 128], strides = [1, 1]} : vector<64x384xf32> to vector<64x128xf32>
    %62 = vector.extract_strided_slice %8 {offsets = [0, 256], sizes = [64, 128], strides = [1, 1]} : vector<64x384xf32> to vector<64x128xf32>
    %63 = arith.mulf %52, %62 : vector<64x128xf32>
    %64 = arith.addf %61, %63 : vector<64x128xf32>
    %65 = math.tanh %64 : vector<64x128xf32>
    %cst_37 = arith.constant 1.000000e+00 : f32
    %66 = vector.broadcast %cst_37 : f32 to vector<64x128xf32>
    %67 = arith.subf %66, %60 : vector<64x128xf32>
    %68 = arith.mulf %67, %65 : vector<64x128xf32>
    %69 = arith.mulf %60, %0 : vector<64x128xf32>
    %70 = arith.addf %68, %69 : vector<64x128xf32>
    %71 = arith.truncf %70 : vector<64x128xf32> to vector<64x128xbf16>
    %c0_38 = arith.constant 0 : index
    %c0_39 = arith.constant 0 : index
    %c0_40 = arith.constant 0 : index
    %72 = vector.load %arg7[%c0_38, %c0_39, %c0_40] : memref<2x128x384xbf16, #tpu.memory_space<vmem>>, vector<1x128x384xbf16>
    %73 = vector.shape_cast %72 : vector<1x128x384xbf16> to vector<128x384xbf16>
    %cst_41 = arith.constant dense<0.000000e+00> : vector<64x384xf32>
    %74 = tpu.matmul %71, %73, %cst_41 {dimension_numbers = #tpu.dot_dimension_numbers<[1], [0], [0], [1], [0, 0, 1, 1], [], []>} : vector<64x128xbf16>, vector<128x384xbf16>, vector<64x384xf32> -> vector<64x384xf32>
    %c0_42 = arith.constant 0 : index
    %c0_43 = arith.constant 0 : index
    %c0_44 = arith.constant 0 : index
    %75 = vector.load %arg8[%c0_42, %c0_43, %c0_44] : memref<2x1x384xf32, #tpu.memory_space<vmem>>, vector<1x1x384xf32>
    %76 = vector.shape_cast %75 : vector<1x1x384xf32> to vector<1x384xf32>
    %77 = vector.broadcast %76 : vector<1x384xf32> to vector<64x384xf32>
    %78 = arith.addf %74, %77 : vector<64x384xf32>
    %c0_45 = arith.constant 0 : index
    %c0_46 = arith.constant 0 : index
    %79 = vector.load %arg1[%c0_45, %c0_46] : memref<256x64xbf16, #tpu.memory_space<vmem>>, vector<256x64xbf16>
    %cst_47 = arith.constant dense<0.000000e+00> : vector<256x128xf32>
    %80 = tpu.matmul %79, %71, %cst_47 {dimension_numbers = #tpu.dot_dimension_numbers<[1], [0], [0], [1], [0, 0, 1, 1], [], []>} : vector<256x64xbf16>, vector<64x128xbf16>, vector<256x128xf32> -> vector<256x128xf32>
    %81 = arith.truncf %80 : vector<256x128xf32> to vector<256x128xbf16>
    %c0_48 = arith.constant 0 : index
    %c0_49 = arith.constant 0 : index
    %c0_50 = arith.constant 0 : index
    %82 = vector.load %arg3[%c0_48, %c0_49, %c0_50] : memref<2x64x128xf32, #tpu.memory_space<vmem>>, vector<1x64x128xf32>
    %83 = vector.shape_cast %82 : vector<1x64x128xf32> to vector<64x128xf32>
    %84 = vector.extract_strided_slice %81 {offsets = [0, 0], sizes = [64, 128], strides = [1, 1]} : vector<256x128xbf16> to vector<64x128xbf16>
    %c0_51 = arith.constant 0 : index
    %c0_52 = arith.constant 0 : index
    %c0_53 = arith.constant 0 : index
    %85 = vector.load %arg4[%c0_51, %c0_52, %c0_53] : memref<8x128x128xbf16, #tpu.memory_space<vmem>>, vector<1x128x128xbf16>
    %86 = vector.shape_cast %85 : vector<1x128x128xbf16> to vector<128x128xbf16>
    %cst_54 = arith.constant dense<0.000000e+00> : vector<64x128xf32>
    %87 = tpu.matmul %84, %86, %cst_54 {dimension_numbers = #tpu.dot_dimension_numbers<[1], [0], [0], [1], [0, 0, 1, 1], [], []>} : vector<64x128xbf16>, vector<128x128xbf16>, vector<64x128xf32> -> vector<64x128xf32>
    %88 = arith.addf %83, %87 : vector<64x128xf32>
    %89 = vector.extract_strided_slice %81 {offsets = [64, 0], sizes = [64, 128], strides = [1, 1]} : vector<256x128xbf16> to vector<64x128xbf16>
    %c1_55 = arith.constant 1 : index
    %c0_56 = arith.constant 0 : index
    %c0_57 = arith.constant 0 : index
    %90 = vector.load %arg4[%c1_55, %c0_56, %c0_57] : memref<8x128x128xbf16, #tpu.memory_space<vmem>>, vector<1x128x128xbf16>
    %91 = vector.shape_cast %90 : vector<1x128x128xbf16> to vector<128x128xbf16>
    %cst_58 = arith.constant dense<0.000000e+00> : vector<64x128xf32>
    %92 = tpu.matmul %89, %91, %cst_58 {dimension_numbers = #tpu.dot_dimension_numbers<[1], [0], [0], [1], [0, 0, 1, 1], [], []>} : vector<64x128xbf16>, vector<128x128xbf16>, vector<64x128xf32> -> vector<64x128xf32>
    %93 = arith.addf %88, %92 : vector<64x128xf32>
    %94 = vector.extract_strided_slice %81 {offsets = [128, 0], sizes = [64, 128], strides = [1, 1]} : vector<256x128xbf16> to vector<64x128xbf16>
    %c2_59 = arith.constant 2 : index
    %c0_60 = arith.constant 0 : index
    %c0_61 = arith.constant 0 : index
    %95 = vector.load %arg4[%c2_59, %c0_60, %c0_61] : memref<8x128x128xbf16, #tpu.memory_space<vmem>>, vector<1x128x128xbf16>
    %96 = vector.shape_cast %95 : vector<1x128x128xbf16> to vector<128x128xbf16>
    %cst_62 = arith.constant dense<0.000000e+00> : vector<64x128xf32>
    %97 = tpu.matmul %94, %96, %cst_62 {dimension_numbers = #tpu.dot_dimension_numbers<[1], [0], [0], [1], [0, 0, 1, 1], [], []>} : vector<64x128xbf16>, vector<128x128xbf16>, vector<64x128xf32> -> vector<64x128xf32>
    %98 = arith.addf %93, %97 : vector<64x128xf32>
    %99 = vector.extract_strided_slice %81 {offsets = [192, 0], sizes = [64, 128], strides = [1, 1]} : vector<256x128xbf16> to vector<64x128xbf16>
    %c3_63 = arith.constant 3 : index
    %c0_64 = arith.constant 0 : index
    %c0_65 = arith.constant 0 : index
    %100 = vector.load %arg4[%c3_63, %c0_64, %c0_65] : memref<8x128x128xbf16, #tpu.memory_space<vmem>>, vector<1x128x128xbf16>
    %101 = vector.shape_cast %100 : vector<1x128x128xbf16> to vector<128x128xbf16>
    %cst_66 = arith.constant dense<0.000000e+00> : vector<64x128xf32>
    %102 = tpu.matmul %99, %101, %cst_66 {dimension_numbers = #tpu.dot_dimension_numbers<[1], [0], [0], [1], [0, 0, 1, 1], [], []>} : vector<64x128xbf16>, vector<128x128xbf16>, vector<64x128xf32> -> vector<64x128xf32>
    %103 = arith.addf %98, %102 : vector<64x128xf32>
    %c0_67 = arith.constant 0 : index
    %c0_68 = arith.constant 0 : index
    %104 = vector.load %arg2[%c0_67, %c0_68] : memref<64x1xf32, #tpu.memory_space<vmem>>, vector<64x1xf32>
    %105 = vector.broadcast %104 : vector<64x1xf32> to vector<64x128xf32>
    %106 = arith.mulf %103, %105 : vector<64x128xf32>
    %107 = arith.truncf %106 : vector<64x128xf32> to vector<64x128xbf16>
    %c0_69 = arith.constant 0 : index
    %c0_70 = arith.constant 0 : index
    %c0_71 = arith.constant 0 : index
    %108 = vector.load %arg5[%c0_69, %c0_70, %c0_71] : memref<2x128x384xbf16, #tpu.memory_space<vmem>>, vector<1x128x384xbf16>
    %109 = vector.shape_cast %108 : vector<1x128x384xbf16> to vector<128x384xbf16>
    %cst_72 = arith.constant dense<0.000000e+00> : vector<64x384xf32>
    %110 = tpu.matmul %107, %109, %cst_72 {dimension_numbers = #tpu.dot_dimension_numbers<[1], [0], [0], [1], [0, 0, 1, 1], [], []>} : vector<64x128xbf16>, vector<128x384xbf16>, vector<64x384xf32> -> vector<64x384xf32>
    %c0_73 = arith.constant 0 : index
    %c0_74 = arith.constant 0 : index
    %c0_75 = arith.constant 0 : index
    %111 = vector.load %arg6[%c0_73, %c0_74, %c0_75] : memref<2x1x384xf32, #tpu.memory_space<vmem>>, vector<1x1x384xf32>
    %112 = vector.shape_cast %111 : vector<1x1x384xf32> to vector<1x384xf32>
    %113 = vector.broadcast %112 : vector<1x384xf32> to vector<64x384xf32>
    %114 = arith.addf %110, %113 : vector<64x384xf32>
    %115 = vector.extract_strided_slice %114 {offsets = [0, 0], sizes = [64, 128], strides = [1, 1]} : vector<64x384xf32> to vector<64x128xf32>
    %116 = vector.extract_strided_slice %78 {offsets = [0, 0], sizes = [64, 128], strides = [1, 1]} : vector<64x384xf32> to vector<64x128xf32>
    %117 = arith.addf %115, %116 : vector<64x128xf32>
    %118 = arith.negf %117 : vector<64x128xf32>
    %119 = math.exp %118 : vector<64x128xf32>
    %cst_76 = arith.constant 1.000000e+00 : f32
    %120 = vector.broadcast %cst_76 : f32 to vector<64x128xf32>
    %121 = arith.addf %120, %119 : vector<64x128xf32>
    %122 = arith.divf %120, %121 : vector<64x128xf32>
    %123 = vector.extract_strided_slice %114 {offsets = [0, 128], sizes = [64, 128], strides = [1, 1]} : vector<64x384xf32> to vector<64x128xf32>
    %124 = vector.extract_strided_slice %78 {offsets = [0, 128], sizes = [64, 128], strides = [1, 1]} : vector<64x384xf32> to vector<64x128xf32>
    %125 = arith.addf %123, %124 : vector<64x128xf32>
    %126 = arith.negf %125 : vector<64x128xf32>
    %127 = math.exp %126 : vector<64x128xf32>
    %cst_77 = arith.constant 1.000000e+00 : f32
    %128 = vector.broadcast %cst_77 : f32 to vector<64x128xf32>
    %129 = arith.addf %128, %127 : vector<64x128xf32>
    %130 = arith.divf %128, %129 : vector<64x128xf32>
    %131 = vector.extract_strided_slice %114 {offsets = [0, 256], sizes = [64, 128], strides = [1, 1]} : vector<64x384xf32> to vector<64x128xf32>
    %132 = vector.extract_strided_slice %78 {offsets = [0, 256], sizes = [64, 128], strides = [1, 1]} : vector<64x384xf32> to vector<64x128xf32>
    %133 = arith.mulf %122, %132 : vector<64x128xf32>
    %134 = arith.addf %131, %133 : vector<64x128xf32>
    %135 = math.tanh %134 : vector<64x128xf32>
    %cst_78 = arith.constant 1.000000e+00 : f32
    %136 = vector.broadcast %cst_78 : f32 to vector<64x128xf32>
    %137 = arith.subf %136, %130 : vector<64x128xf32>
    %138 = arith.mulf %137, %135 : vector<64x128xf32>
    %139 = arith.mulf %130, %70 : vector<64x128xf32>
    %140 = arith.addf %138, %139 : vector<64x128xf32>
    %141 = arith.truncf %140 : vector<64x128xf32> to vector<64x128xbf16>
    %c1_79 = arith.constant 1 : index
    %c0_80 = arith.constant 0 : index
    %c0_81 = arith.constant 0 : index
    %142 = vector.load %arg7[%c1_79, %c0_80, %c0_81] : memref<2x128x384xbf16, #tpu.memory_space<vmem>>, vector<1x128x384xbf16>
    %143 = vector.shape_cast %142 : vector<1x128x384xbf16> to vector<128x384xbf16>
    %cst_82 = arith.constant dense<0.000000e+00> : vector<64x384xf32>
    %144 = tpu.matmul %141, %143, %cst_82 {dimension_numbers = #tpu.dot_dimension_numbers<[1], [0], [0], [1], [0, 0, 1, 1], [], []>} : vector<64x128xbf16>, vector<128x384xbf16>, vector<64x384xf32> -> vector<64x384xf32>
    %c1_83 = arith.constant 1 : index
    %c0_84 = arith.constant 0 : index
    %c0_85 = arith.constant 0 : index
    %145 = vector.load %arg8[%c1_83, %c0_84, %c0_85] : memref<2x1x384xf32, #tpu.memory_space<vmem>>, vector<1x1x384xf32>
    %146 = vector.shape_cast %145 : vector<1x1x384xf32> to vector<1x384xf32>
    %147 = vector.broadcast %146 : vector<1x384xf32> to vector<64x384xf32>
    %148 = arith.addf %144, %147 : vector<64x384xf32>
    %c0_86 = arith.constant 0 : index
    %c0_87 = arith.constant 0 : index
    %149 = vector.load %arg1[%c0_86, %c0_87] : memref<256x64xbf16, #tpu.memory_space<vmem>>, vector<256x64xbf16>
    %cst_88 = arith.constant dense<0.000000e+00> : vector<256x128xf32>
    %150 = tpu.matmul %149, %141, %cst_88 {dimension_numbers = #tpu.dot_dimension_numbers<[1], [0], [0], [1], [0, 0, 1, 1], [], []>} : vector<256x64xbf16>, vector<64x128xbf16>, vector<256x128xf32> -> vector<256x128xf32>
    %151 = arith.truncf %150 : vector<256x128xf32> to vector<256x128xbf16>
    %c1_89 = arith.constant 1 : index
    %c0_90 = arith.constant 0 : index
    %c0_91 = arith.constant 0 : index
    %152 = vector.load %arg3[%c1_89, %c0_90, %c0_91] : memref<2x64x128xf32, #tpu.memory_space<vmem>>, vector<1x64x128xf32>
    %153 = vector.shape_cast %152 : vector<1x64x128xf32> to vector<64x128xf32>
    %154 = vector.extract_strided_slice %151 {offsets = [0, 0], sizes = [64, 128], strides = [1, 1]} : vector<256x128xbf16> to vector<64x128xbf16>
    %c4 = arith.constant 4 : index
    %c0_92 = arith.constant 0 : index
    %c0_93 = arith.constant 0 : index
    %155 = vector.load %arg4[%c4, %c0_92, %c0_93] : memref<8x128x128xbf16, #tpu.memory_space<vmem>>, vector<1x128x128xbf16>
    %156 = vector.shape_cast %155 : vector<1x128x128xbf16> to vector<128x128xbf16>
    %cst_94 = arith.constant dense<0.000000e+00> : vector<64x128xf32>
    %157 = tpu.matmul %154, %156, %cst_94 {dimension_numbers = #tpu.dot_dimension_numbers<[1], [0], [0], [1], [0, 0, 1, 1], [], []>} : vector<64x128xbf16>, vector<128x128xbf16>, vector<64x128xf32> -> vector<64x128xf32>
    %158 = arith.addf %153, %157 : vector<64x128xf32>
    %159 = vector.extract_strided_slice %151 {offsets = [64, 0], sizes = [64, 128], strides = [1, 1]} : vector<256x128xbf16> to vector<64x128xbf16>
    %c5 = arith.constant 5 : index
    %c0_95 = arith.constant 0 : index
    %c0_96 = arith.constant 0 : index
    %160 = vector.load %arg4[%c5, %c0_95, %c0_96] : memref<8x128x128xbf16, #tpu.memory_space<vmem>>, vector<1x128x128xbf16>
    %161 = vector.shape_cast %160 : vector<1x128x128xbf16> to vector<128x128xbf16>
    %cst_97 = arith.constant dense<0.000000e+00> : vector<64x128xf32>
    %162 = tpu.matmul %159, %161, %cst_97 {dimension_numbers = #tpu.dot_dimension_numbers<[1], [0], [0], [1], [0, 0, 1, 1], [], []>} : vector<64x128xbf16>, vector<128x128xbf16>, vector<64x128xf32> -> vector<64x128xf32>
    %163 = arith.addf %158, %162 : vector<64x128xf32>
    %164 = vector.extract_strided_slice %151 {offsets = [128, 0], sizes = [64, 128], strides = [1, 1]} : vector<256x128xbf16> to vector<64x128xbf16>
    %c6 = arith.constant 6 : index
    %c0_98 = arith.constant 0 : index
    %c0_99 = arith.constant 0 : index
    %165 = vector.load %arg4[%c6, %c0_98, %c0_99] : memref<8x128x128xbf16, #tpu.memory_space<vmem>>, vector<1x128x128xbf16>
    %166 = vector.shape_cast %165 : vector<1x128x128xbf16> to vector<128x128xbf16>
    %cst_100 = arith.constant dense<0.000000e+00> : vector<64x128xf32>
    %167 = tpu.matmul %164, %166, %cst_100 {dimension_numbers = #tpu.dot_dimension_numbers<[1], [0], [0], [1], [0, 0, 1, 1], [], []>} : vector<64x128xbf16>, vector<128x128xbf16>, vector<64x128xf32> -> vector<64x128xf32>
    %168 = arith.addf %163, %167 : vector<64x128xf32>
    %169 = vector.extract_strided_slice %151 {offsets = [192, 0], sizes = [64, 128], strides = [1, 1]} : vector<256x128xbf16> to vector<64x128xbf16>
    %c7 = arith.constant 7 : index
    %c0_101 = arith.constant 0 : index
    %c0_102 = arith.constant 0 : index
    %170 = vector.load %arg4[%c7, %c0_101, %c0_102] : memref<8x128x128xbf16, #tpu.memory_space<vmem>>, vector<1x128x128xbf16>
    %171 = vector.shape_cast %170 : vector<1x128x128xbf16> to vector<128x128xbf16>
    %cst_103 = arith.constant dense<0.000000e+00> : vector<64x128xf32>
    %172 = tpu.matmul %169, %171, %cst_103 {dimension_numbers = #tpu.dot_dimension_numbers<[1], [0], [0], [1], [0, 0, 1, 1], [], []>} : vector<64x128xbf16>, vector<128x128xbf16>, vector<64x128xf32> -> vector<64x128xf32>
    %173 = arith.addf %168, %172 : vector<64x128xf32>
    %c0_104 = arith.constant 0 : index
    %c0_105 = arith.constant 0 : index
    %174 = vector.load %arg2[%c0_104, %c0_105] : memref<64x1xf32, #tpu.memory_space<vmem>>, vector<64x1xf32>
    %175 = vector.broadcast %174 : vector<64x1xf32> to vector<64x128xf32>
    %176 = arith.mulf %173, %175 : vector<64x128xf32>
    %177 = arith.truncf %176 : vector<64x128xf32> to vector<64x128xbf16>
    %c1_106 = arith.constant 1 : index
    %c0_107 = arith.constant 0 : index
    %c0_108 = arith.constant 0 : index
    %178 = vector.load %arg5[%c1_106, %c0_107, %c0_108] : memref<2x128x384xbf16, #tpu.memory_space<vmem>>, vector<1x128x384xbf16>
    %179 = vector.shape_cast %178 : vector<1x128x384xbf16> to vector<128x384xbf16>
    %cst_109 = arith.constant dense<0.000000e+00> : vector<64x384xf32>
    %180 = tpu.matmul %177, %179, %cst_109 {dimension_numbers = #tpu.dot_dimension_numbers<[1], [0], [0], [1], [0, 0, 1, 1], [], []>} : vector<64x128xbf16>, vector<128x384xbf16>, vector<64x384xf32> -> vector<64x384xf32>
    %c1_110 = arith.constant 1 : index
    %c0_111 = arith.constant 0 : index
    %c0_112 = arith.constant 0 : index
    %181 = vector.load %arg6[%c1_110, %c0_111, %c0_112] : memref<2x1x384xf32, #tpu.memory_space<vmem>>, vector<1x1x384xf32>
    %182 = vector.shape_cast %181 : vector<1x1x384xf32> to vector<1x384xf32>
    %183 = vector.broadcast %182 : vector<1x384xf32> to vector<64x384xf32>
    %184 = arith.addf %180, %183 : vector<64x384xf32>
    %185 = vector.extract_strided_slice %184 {offsets = [0, 0], sizes = [64, 128], strides = [1, 1]} : vector<64x384xf32> to vector<64x128xf32>
    %186 = vector.extract_strided_slice %148 {offsets = [0, 0], sizes = [64, 128], strides = [1, 1]} : vector<64x384xf32> to vector<64x128xf32>
    %187 = arith.addf %185, %186 : vector<64x128xf32>
    %188 = arith.negf %187 : vector<64x128xf32>
    %189 = math.exp %188 : vector<64x128xf32>
    %cst_113 = arith.constant 1.000000e+00 : f32
    %190 = vector.broadcast %cst_113 : f32 to vector<64x128xf32>
    %191 = arith.addf %190, %189 : vector<64x128xf32>
    %192 = arith.divf %190, %191 : vector<64x128xf32>
    %193 = vector.extract_strided_slice %184 {offsets = [0, 128], sizes = [64, 128], strides = [1, 1]} : vector<64x384xf32> to vector<64x128xf32>
    %194 = vector.extract_strided_slice %148 {offsets = [0, 128], sizes = [64, 128], strides = [1, 1]} : vector<64x384xf32> to vector<64x128xf32>
    %195 = arith.addf %193, %194 : vector<64x128xf32>
    %196 = arith.negf %195 : vector<64x128xf32>
    %197 = math.exp %196 : vector<64x128xf32>
    %cst_114 = arith.constant 1.000000e+00 : f32
    %198 = vector.broadcast %cst_114 : f32 to vector<64x128xf32>
    %199 = arith.addf %198, %197 : vector<64x128xf32>
    %200 = arith.divf %198, %199 : vector<64x128xf32>
    %201 = vector.extract_strided_slice %184 {offsets = [0, 256], sizes = [64, 128], strides = [1, 1]} : vector<64x384xf32> to vector<64x128xf32>
    %202 = vector.extract_strided_slice %148 {offsets = [0, 256], sizes = [64, 128], strides = [1, 1]} : vector<64x384xf32> to vector<64x128xf32>
    %203 = arith.mulf %192, %202 : vector<64x128xf32>
    %204 = arith.addf %201, %203 : vector<64x128xf32>
    %205 = math.tanh %204 : vector<64x128xf32>
    %cst_115 = arith.constant 1.000000e+00 : f32
    %206 = vector.broadcast %cst_115 : f32 to vector<64x128xf32>
    %207 = arith.subf %206, %200 : vector<64x128xf32>
    %208 = arith.mulf %207, %205 : vector<64x128xf32>
    %209 = arith.mulf %200, %140 : vector<64x128xf32>
    %210 = arith.addf %208, %209 : vector<64x128xf32>
    %211 = arith.truncf %210 : vector<64x128xf32> to vector<64x128xbf16>
    %212 = arith.truncf %0 : vector<64x128xf32> to vector<64x128xbf16>
    %c0_116 = arith.constant 0 : index
    %c0_117 = arith.constant 0 : index
    %213 = vector.load %arg10[%c0_116, %c0_117] : memref<128x128xbf16, #tpu.memory_space<vmem>>, vector<128x128xbf16>
    %cst_118 = arith.constant dense<0.000000e+00> : vector<64x128xf32>
    %214 = tpu.matmul %212, %213, %cst_118 {dimension_numbers = #tpu.dot_dimension_numbers<[1], [0], [0], [1], [0, 0, 1, 1], [], []>} : vector<64x128xbf16>, vector<128x128xbf16>, vector<64x128xf32> -> vector<64x128xf32>
    %c0_119 = arith.constant 0 : index
    %c0_120 = arith.constant 0 : index
    %215 = vector.load %arg11[%c0_119, %c0_120] : memref<128x128xbf16, #tpu.memory_space<vmem>>, vector<128x128xbf16>
    %cst_121 = arith.constant dense<0.000000e+00> : vector<64x128xf32>
    %216 = tpu.matmul %211, %215, %cst_121 {dimension_numbers = #tpu.dot_dimension_numbers<[1], [0], [0], [1], [0, 0, 1, 1], [], []>} : vector<64x128xbf16>, vector<128x128xbf16>, vector<64x128xf32> -> vector<64x128xf32>
    %217 = arith.addf %214, %216 : vector<64x128xf32>
    %c0_122 = arith.constant 0 : index
    %c0_123 = arith.constant 0 : index
    %218 = vector.load %arg12[%c0_122, %c0_123] : memref<1x128xf32, #tpu.memory_space<vmem>>, vector<1x128xf32>
    %219 = vector.broadcast %218 : vector<1x128xf32> to vector<64x128xf32>
    %220 = arith.addf %217, %219 : vector<64x128xf32>
    %221 = arith.negf %220 : vector<64x128xf32>
    %222 = math.exp %221 : vector<64x128xf32>
    %cst_124 = arith.constant 1.000000e+00 : f32
    %223 = vector.broadcast %cst_124 : f32 to vector<64x128xf32>
    %224 = arith.addf %223, %222 : vector<64x128xf32>
    %225 = arith.divf %223, %224 : vector<64x128xf32>
    %c0_125 = arith.constant 0 : index
    %c0_126 = arith.constant 0 : index
    %226 = vector.load %arg13[%c0_125, %c0_126] : memref<128x128xbf16, #tpu.memory_space<vmem>>, vector<128x128xbf16>
    %cst_127 = arith.constant dense<0.000000e+00> : vector<64x128xf32>
    %227 = tpu.matmul %211, %226, %cst_127 {dimension_numbers = #tpu.dot_dimension_numbers<[1], [0], [0], [1], [0, 0, 1, 1], [], []>} : vector<64x128xbf16>, vector<128x128xbf16>, vector<64x128xf32> -> vector<64x128xf32>
    %c0_128 = arith.constant 0 : index
    %c0_129 = arith.constant 0 : index
    %228 = vector.load %arg14[%c0_128, %c0_129] : memref<1x128xf32, #tpu.memory_space<vmem>>, vector<1x128xf32>
    %229 = vector.broadcast %228 : vector<1x128xf32> to vector<64x128xf32>
    %230 = arith.addf %227, %229 : vector<64x128xf32>
    %231 = arith.mulf %225, %230 : vector<64x128xf32>
    %c0_130 = arith.constant 0 : index
    %c0_131 = arith.constant 0 : index
    %232 = vector.load %arg15[%c0_130, %c0_131] : memref<64x128xf32, #tpu.memory_space<vmem>>, vector<64x128xf32>
    tpu.vector_store %arg15[%c0_130, %c0_131], %231 {strides = array<i32>} : memref<64x128xf32, #tpu.memory_space<vmem>>, vector<64x128xf32>,
    %c0_132 = arith.constant 0 : index
    %c0_133 = arith.constant 0 : index
    %233 = vector.load %arg9[%c0_132, %c0_133] : memref<2x64xf32, #tpu.memory_space<vmem>>, vector<2x64xf32>
    %cst_134 = arith.constant dense<0.000000e+00> : vector<2x128xf32>
    %234 = tpu.matmul %233, %231, %cst_134 {dimension_numbers = #tpu.dot_dimension_numbers<[1], [0], [0], [1], [0, 0, 1, 1], [], []>} : vector<2x64xf32>, vector<64x128xf32>, vector<2x128xf32> -> vector<2x128xf32>
    %c0_135 = arith.constant 0 : index
    %c0_136 = arith.constant 0 : index
    %235 = vector.load %arg16[%c0_135, %c0_136] : memref<2x128xf32, #tpu.memory_space<vmem>>, vector<2x128xf32>
    tpu.vector_store %arg16[%c0_135, %c0_136], %234 {strides = array<i32>} : memref<2x128xf32, #tpu.memory_space<vmem>>, vector<2x128xf32>,
    return
  }
}

</mosaic_0001>

<llo_original>
// kernel: tpu_custom_call.1
$region0: #{tpu_custom_call.1}
  #allocation0 [shape = 'u32[]', space=smem, size = 0x4, offset = 0x4, fixed_abs, tag = 'smem constant byte address 0x4 - core index']
  #allocation1 [shape = 'u32[144,128]{1,0:T(1,128)}', space=vmem, size = 0x12000, scoped, tag = 'internal scratch']
  %s0 = inlined_call_operand.hbm [shape: f32[64,128], index: 0, kind: input, shape index: {}]
  %s1 = inlined_call_operand.hbm [shape: bf16[256,64], index: 1, kind: input, shape index: {}]
  %s2 = inlined_call_operand.hbm [shape: f32[64,1], index: 2, kind: input, shape index: {}]
  %s3 = inlined_call_operand.hbm [shape: f32[2,64,128], index: 3, kind: input, shape index: {}]
  %s4 = inlined_call_operand.hbm [shape: bf16[8,128,128], index: 4, kind: input, shape index: {}]
  %s5 = inlined_call_operand.hbm [shape: bf16[2,128,384], index: 5, kind: input, shape index: {}]
  %s6 = inlined_call_operand.hbm [shape: f32[2,1,384], index: 6, kind: input, shape index: {}]
  %s7 = inlined_call_operand.hbm [shape: bf16[2,128,384], index: 7, kind: input, shape index: {}]
  %s8 = inlined_call_operand.hbm [shape: f32[2,1,384], index: 8, kind: input, shape index: {}]
  %s9 = inlined_call_operand.hbm [shape: f32[2,64], index: 9, kind: input, shape index: {}]
  %s10 = inlined_call_operand.hbm [shape: bf16[128,128], index: 10, kind: input, shape index: {}]
  %s11 = inlined_call_operand.hbm [shape: bf16[128,128], index: 11, kind: input, shape index: {}]
  %s12 = inlined_call_operand.hbm [shape: f32[1,128], index: 12, kind: input, shape index: {}]
  %s13 = inlined_call_operand.hbm [shape: bf16[128,128], index: 13, kind: input, shape index: {}]
  %s14 = inlined_call_operand.hbm [shape: f32[1,128], index: 14, kind: input, shape index: {}]
  %s15 = inlined_call_operand.hbm [shape: f32[64,128], index: 15, kind: output, shape index: {0}]
  %s16 = inlined_call_operand.hbm [shape: f32[2,128], index: 16, kind: output, shape index: {1}]
  %17 = xla_tuple %s15, %s16
  %s18 = sld [smem:[#allocation0]]
  $region138: #{tpu_custom_call.1} parent=0
    _
  %s20 = ssub.s32 1, %s18
  %s21 = scalar_select 0, %s20, %s18
  $region1: #{tpu_custom_call.1} parent=0
    #allocation2 [shape = 'u8[32768]{0}', space=vmem, size = 0x8000, scoped, tag = 'input window, operand 0, single buffered']
    #allocation3 [shape = 's32[1]{0}', space=sflag, size = 0x4, scoped, tag = 'scoped memory for tpu_custom_call.1']
    #allocation4 [shape = 's32[1]{0}', space=sflag, size = 0x4, scoped, tag = 'scoped memory for tpu_custom_call.1']
    #allocation5 [shape = 'u8[65536]{0}', space=vmem, size = 0x10000, scoped, tag = 'input window, operand 1, single buffered']
    #allocation6 [shape = 's32[1]{0}', space=sflag, size = 0x4, scoped, tag = 'scoped memory for tpu_custom_call.1']
    #allocation7 [shape = 'u8[32768]{0}', space=vmem, size = 0x8000, scoped, tag = 'input window, operand 2, single buffered']
    #allocation8 [shape = 'u8[65536]{0}', space=vmem, size = 0x10000, scoped, tag = 'input window, operand 3, single buffered']
    #allocation9 [shape = 's32[1]{0}', space=sflag, size = 0x4, scoped, tag = 'scoped memory for tpu_custom_call.1']
    #allocation10 [shape = 'u8[262144]{0}', space=vmem, size = 0x40000, scoped, tag = 'input window, operand 4, single buffered']
    #allocation11 [shape = 'u8[196608]{0}', space=vmem, size = 0x30000, scoped, tag = 'input window, operand 5, single buffered']
    #allocation12 [shape = 's32[1]{0}', space=sflag, size = 0x4, scoped, tag = 'scoped memory for tpu_custom_call.1']
    #allocation13 [shape = 'u8[3072]{0}', space=vmem, size = 0xc00, scoped, tag = 'input window, operand 6, single buffered']
    #allocation14 [shape = 'u8[196608]{0}', space=vmem, size = 0x30000, scoped, tag = 'input window, operand 7, single buffered']
    #allocation15 [shape = 's32[1]{0}', space=sflag, size = 0x4, scoped, tag = 'scoped memory for tpu_custom_call.1']
    #allocation16 [shape = 'u8[3072]{0}', space=vmem, size = 0xc00, scoped, tag = 'input window, operand 8, single buffered']
    #allocation17 [shape = 'u8[1024]{0}', space=vmem, size = 0x400, scoped, tag = 'input window, operand 9, single buffered']
    #allocation18 [shape = 's32[1]{0}', space=sflag, size = 0x4, scoped, tag = 'scoped memory for tpu_custom_call.1']
    #allocation19 [shape = 'u8[32768]{0}', space=vmem, size = 0x8000, scoped, tag = 'input window, operand 10, single buffered']
    #allocation20 [shape = 'u8[32768]{0}', space=vmem, size = 0x8000, scoped, tag = 'input window, operand 11, single buffered']
    #allocation21 [shape = 's32[1]{0}', space=sflag, size = 0x4, scoped, tag = 'scoped memory for tpu_custom_call.1']
    #allocation22 [shape = 'u8[512]{0}', space=vmem, size = 0x400, scoped, tag = 'input window, operand 12, single buffered']
    #allocation23 [shape = 'u8[32768]{0}', space=vmem, size = 0x8000, scoped, tag = 'input window, operand 13, single buffered']
    #allocation24 [shape = 's32[1]{0}', space=sflag, size = 0x4, scoped, tag = 'scoped memory for tpu_custom_call.1']
    #allocation25 [shape = 'u8[512]{0}', space=vmem, size = 0x400, scoped, tag = 'input window, operand 14, single buffered']
    #allocation26 [shape = 'u8[32768]{0}', space=vmem, size = 0x8000, scoped, tag = 'output window, operand 0, single buffered']
    #allocation27 [shape = 'u8[1024]{0}', space=vmem, size = 0x400, scoped, tag = 'output window, operand 1, single buffered']
    #allocation28 [shape = 's32[1]{0}', space=sflag, size = 0x4, scoped, tag = 'scoped memory for tpu_custom_call.1']
    %22 = vsyncpa [#allocation3], 0
    %23 = vsyncpa [#allocation6], 0
    %24 = vsyncpa [#allocation9], 0
    %25 = vsyncpa [#allocation12], 0
    %26 = vsyncpa [#allocation15], 0
    %27 = vsyncpa [#allocation18], 0
    %28 = vsyncpa [#allocation21], 0
    %29 = vsyncpa [#allocation24], 0
    %30 = vsyncpa [#allocation4], 0
    %31 = vsyncpa [#allocation28], 0
    // Predicated region
    $region2: #{tpu_custom_call.1} parent=1 // pred_check
      _
    $region3: #{tpu_custom_call.1} parent=1 // pred_check_branch
      %33 = sbr.rel (0) target = $region5
    $region4: #{tpu_custom_call.1} parent=1 // pred_region
      %s35 = ssub.s32 1024, 1024
      %36 = vsyncadd [#allocation3], %s35
      %s37 = sshll.u32 [#allocation2], 4
      %s38 = int_to_ptr.vmem [resolvable:$true] %s37
      %43 = dma.hbm_to_vmem [thread:$0]  %s0, 1024, %s38, [#allocation3], 128, 128, 8
    $region5: #{tpu_custom_call.1} parent=1 // pred_fallthru
      _
    // Predicated region
    $region6: #{tpu_custom_call.1} parent=1 // pred_check
      _
    $region7: #{tpu_custom_call.1} parent=1 // pred_check_branch
      %45 = sbr.rel (0) target = $region9
    $region8: #{tpu_custom_call.1} parent=1 // pred_region
      %s47 = ssub.s32 2048, 2048
      %48 = vsyncadd [#allocation6], %s47
      %s49 = sshll.u32 [#allocation5], 4
      %s50 = int_to_ptr.vmem [resolvable:$true] %s49
      %55 = dma.hbm_to_vmem [thread:$0]  %s1, 2048, %s50, [#allocation6], 64, 64, 4
    $region9: #{tpu_custom_call.1} parent=1 // pred_fallthru
      _
    // Predicated region
    $region10: #{tpu_custom_call.1} parent=1 // pred_check
      _
    $region11: #{tpu_custom_call.1} parent=1 // pred_check_branch
      %57 = sbr.rel (0) target = $region13
    $region12: #{tpu_custom_call.1} parent=1 // pred_region
      %s59 = ssub.s32 1024, 1024
      %60 = vsyncadd [#allocation6], %s59
      %s61 = sshll.u32 [#allocation7], 4
      %s62 = int_to_ptr.vmem [resolvable:$true] %s61
      %67 = dma.hbm_to_vmem [thread:$0]  %s2, 1024, %s62, [#allocation6], 128, 128, 8
    $region13: #{tpu_custom_call.1} parent=1 // pred_fallthru
      _
    // Predicated region
    $region14: #{tpu_custom_call.1} parent=1 // pred_check
      _
    $region15: #{tpu_custom_call.1} parent=1 // pred_check_branch
      %69 = sbr.rel (0) target = $region17
    $region16: #{tpu_custom_call.1} parent=1 // pred_region
      %s71 = ssub.s32 2048, 2048
      %72 = vsyncadd [#allocation9], %s71
      %s73 = sshll.u32 [#allocation8], 4
      %s74 = int_to_ptr.vmem [resolvable:$true] %s73
      %79 = dma.hbm_to_vmem [thread:$0]  %s3, 2048, %s74, [#allocation9], 128, 128, 8
    $region17: #{tpu_custom_call.1} parent=1 // pred_fallthru
      _
    // Predicated region
    $region18: #{tpu_custom_call.1} parent=1 // pred_check
      _
    $region19: #{tpu_custom_call.1} parent=1 // pred_check_branch
      %81 = sbr.rel (0) target = $region21
    $region20: #{tpu_custom_call.1} parent=1 // pred_region
      %s83 = ssub.s32 8192, 8192
      %84 = vsyncadd [#allocation9], %s83
      %s85 = sshll.u32 [#allocation10], 4
      %s86 = int_to_ptr.vmem [resolvable:$true] %s85
      %91 = dma.hbm_to_vmem [thread:$0]  %s4, 8192, %s86, [#allocation9], 64, 64, 4
    $region21: #{tpu_custom_call.1} parent=1 // pred_fallthru
      _
    // Predicated region
    $region22: #{tpu_custom_call.1} parent=1 // pred_check
      _
    $region23: #{tpu_custom_call.1} parent=1 // pred_check_branch
      %93 = sbr.rel (0) target = $region25
    $region24: #{tpu_custom_call.1} parent=1 // pred_region
      %s95 = ssub.s32 6144, 6144
      %96 = vsyncadd [#allocation12], %s95
      %s97 = sshll.u32 [#allocation11], 4
      %s98 = int_to_ptr.vmem [resolvable:$true] %s97
      %103 = dma.hbm_to_vmem [thread:$0]  %s5, 6144, %s98, [#allocation12], 192, 192, 12
    $region25: #{tpu_custom_call.1} parent=1 // pred_fallthru
      _
    // Predicated region
    $region26: #{tpu_custom_call.1} parent=1 // pred_check
      _
    $region27: #{tpu_custom_call.1} parent=1 // pred_check_branch
      %105 = sbr.rel (0) target = $region29
    $region28: #{tpu_custom_call.1} parent=1 // pred_region
      %s107 = ssub.s32 96, 96
      %108 = vsyncadd [#allocation12], %s107
      %s109 = sshll.u32 [#allocation13], 4
      %s110 = int_to_ptr.vmem [resolvable:$true] %s109
      %115 = dma.hbm_to_vmem [thread:$0]  %s6, 96, %s110, [#allocation12], 48, 48, 3
    $region29: #{tpu_custom_call.1} parent=1 // pred_fallthru
      _
    // Predicated region
    $region30: #{tpu_custom_call.1} parent=1 // pred_check
      _
    $region31: #{tpu_custom_call.1} parent=1 // pred_check_branch
      %117 = sbr.rel (0) target = $region33
    $region32: #{tpu_custom_call.1} parent=1 // pred_region
      %s119 = ssub.s32 6144, 6144
      %120 = vsyncadd [#allocation15], %s119
      %s121 = sshll.u32 [#allocation14], 4
      %s122 = int_to_ptr.vmem [resolvable:$true] %s121
      %127 = dma.hbm_to_vmem [thread:$0]  %s7, 6144, %s122, [#allocation15], 192, 192, 12
    $region33: #{tpu_custom_call.1} parent=1 // pred_fallthru
      _
    // Predicated region
    $region34: #{tpu_custom_call.1} parent=1 // pred_check
      _
    $region35: #{tpu_custom_call.1} parent=1 // pred_check_branch
      %129 = sbr.rel (0) target = $region37
    $region36: #{tpu_custom_call.1} parent=1 // pred_region
      %s131 = ssub.s32 96, 96
      %132 = vsyncadd [#allocation15], %s131
      %s133 = sshll.u32 [#allocation16], 4
      %s134 = int_to_ptr.vmem [resolvable:$true] %s133
      %139 = dma.hbm_to_vmem [thread:$0]  %s8, 96, %s134, [#allocation15], 48, 48, 3
    $region37: #{tpu_custom_call.1} parent=1 // pred_fallthru
      _
    // Predicated region
    $region38: #{tpu_custom_call.1} parent=1 // pred_check
      _
    $region39: #{tpu_custom_call.1} parent=1 // pred_check_branch
      %141 = sbr.rel (0) target = $region41
    $region40: #{tpu_custom_call.1} parent=1 // pred_region
      %s143 = ssub.s32 32, 32
      %144 = vsyncadd [#allocation18], %s143
      %s146 = sshll.u32 [#allocation17], 4
      %s147 = int_to_ptr.vmem [resolvable:$true] %s146
      %149 = dma.hbm_to_vmem [thread:$0]  %s9, 32, %s147, [#allocation18]
    $region41: #{tpu_custom_call.1} parent=1 // pred_fallthru
      _
    // Predicated region
    $region42: #{tpu_custom_call.1} parent=1 // pred_check
      _
    $region43: #{tpu_custom_call.1} parent=1 // pred_check_branch
      %151 = sbr.rel (0) target = $region45
    $region44: #{tpu_custom_call.1} parent=1 // pred_region
      %s153 = ssub.s32 1024, 1024
      %154 = vsyncadd [#allocation18], %s153
      %s155 = sshll.u32 [#allocation19], 4
      %s156 = int_to_ptr.vmem [resolvable:$true] %s155
      %161 = dma.hbm_to_vmem [thread:$0]  %s10, 1024, %s156, [#allocation18], 64, 64, 4
    $region45: #{tpu_custom_call.1} parent=1 // pred_fallthru
      _
    // Predicated region
    $region46: #{tpu_custom_call.1} parent=1 // pred_check
      _
    $region47: #{tpu_custom_call.1} parent=1 // pred_check_branch
      %163 = sbr.rel (0) target = $region49
    $region48: #{tpu_custom_call.1} parent=1 // pred_region
      %s165 = ssub.s32 1024, 1024
      %166 = vsyncadd [#allocation21], %s165
      %s167 = sshll.u32 [#allocation20], 4
      %s168 = int_to_ptr.vmem [resolvable:$true] %s167
      %173 = dma.hbm_to_vmem [thread:$0]  %s11, 1024, %s168, [#allocation21], 64, 64, 4
    $region49: #{tpu_custom_call.1} parent=1 // pred_fallthru
      _
    // Predicated region
    $region50: #{tpu_custom_call.1} parent=1 // pred_check
      _
    $region51: #{tpu_custom_call.1} parent=1 // pred_check_branch
      %175 = sbr.rel (0) target = $region53
    $region52: #{tpu_custom_call.1} parent=1 // pred_region
      %s177 = ssub.s32 16, 16
      %178 = vsyncadd [#allocation21], %s177
      %s180 = sshll.u32 [#allocation22], 4
      %s181 = int_to_ptr.vmem [resolvable:$true] %s180
      %183 = dma.hbm_to_vmem [thread:$0]  %s12, 16, %s181, [#allocation21]
    $region53: #{tpu_custom_call.1} parent=1 // pred_fallthru
      _
    // Predicated region
    $region54: #{tpu_custom_call.1} parent=1 // pred_check
      _
    $region55: #{tpu_custom_call.1} parent=1 // pred_check_branch
      %185 = sbr.rel (0) target = $region57
    $region56: #{tpu_custom_call.1} parent=1 // pred_region
      %s187 = ssub.s32 1024, 1024
      %188 = vsyncadd [#allocation24], %s187
      %s189 = sshll.u32 [#allocation23], 4
      %s190 = int_to_ptr.vmem [resolvable:$true] %s189
      %195 = dma.hbm_to_vmem [thread:$0]  %s13, 1024, %s190, [#allocation24], 64, 64, 4
    $region57: #{tpu_custom_call.1} parent=1 // pred_fallthru
      _
    // Predicated region
    $region58: #{tpu_custom_call.1} parent=1 // pred_check
      _
    $region59: #{tpu_custom_call.1} parent=1 // pred_check_branch
      %197 = sbr.rel (0) target = $region61
    $region60: #{tpu_custom_call.1} parent=1 // pred_region
      %s199 = ssub.s32 16, 16
      %200 = vsyncadd [#allocation24], %s199
      %s202 = sshll.u32 [#allocation25], 4
      %s203 = int_to_ptr.vmem [resolvable:$true] %s202
      %205 = dma.hbm_to_vmem [thread:$0]  %s14, 16, %s203, [#allocation24]
    $region61: #{tpu_custom_call.1} parent=1 // pred_fallthru
      _
    // Predicated region
    $region62: #{tpu_custom_call.1} parent=1 // pred_check
      _
    $region63: #{tpu_custom_call.1} parent=1 // pred_check_branch
      %207 = sbr.rel (0) target = $region65
    $region64: #{tpu_custom_call.1} parent=1 // pred_region
      %208 = dma.done [#allocation3], 1024
    $region65: #{tpu_custom_call.1} parent=1 // pred_fallthru
      _
    // Predicated region
    $region66: #{tpu_custom_call.1} parent=1 // pred_check
      _
    $region67: #{tpu_custom_call.1} parent=1 // pred_check_branch
      %210 = sbr.rel (0) target = $region69
    $region68: #{tpu_custom_call.1} parent=1 // pred_region
      %211 = dma.done [#allocation6], 2048
    $region69: #{tpu_custom_call.1} parent=1 // pred_fallthru
      _
    // Predicated region
    $region70: #{tpu_custom_call.1} parent=1 // pred_check
      _
    $region71: #{tpu_custom_call.1} parent=1 // pred_check_branch
      %213 = sbr.rel (0) target = $region73
    $region72: #{tpu_custom_call.1} parent=1 // pred_region
      %214 = dma.done [#allocation6], 1024
    $region73: #{tpu_custom_call.1} parent=1 // pred_fallthru
      _
    // Predicated region
    $region74: #{tpu_custom_call.1} parent=1 // pred_check
      _
    $region75: #{tpu_custom_call.1} parent=1 // pred_check_branch
      %216 = sbr.rel (0) target = $region77
    $region76: #{tpu_custom_call.1} parent=1 // pred_region
      %217 = dma.done [#allocation9], 2048
    $region77: #{tpu_custom_call.1} parent=1 // pred_fallthru
      _
    // Predicated region
    $region78: #{tpu_custom_call.1} parent=1 // pred_check
      _
    $region79: #{tpu_custom_call.1} parent=1 // pred_check_branch
      %219 = sbr.rel (0) target = $region81
    $region80: #{tpu_custom_call.1} parent=1 // pred_region
      %220 = dma.done [#allocation9], 8192
    $region81: #{tpu_custom_call.1} parent=1 // pred_fallthru
      _
    // Predicated region
    $region82: #{tpu_custom_call.1} parent=1 // pred_check
      _
    $region83: #{tpu_custom_call.1} parent=1 // pred_check_branch
      %222 = sbr.rel (0) target = $region85
    $region84: #{tpu_custom_call.1} parent=1 // pred_region
      %223 = dma.done [#allocation12], 6144
    $region85: #{tpu_custom_call.1} parent=1 // pred_fallthru
      _
    // Predicated region
    $region86: #{tpu_custom_call.1} parent=1 // pred_check
      _
    $region87: #{tpu_custom_call.1} parent=1 // pred_check_branch
      %225 = sbr.rel (0) target = $region89
    $region88: #{tpu_custom_call.1} parent=1 // pred_region
      %226 = dma.done [#allocation12], 96
    $region89: #{tpu_custom_call.1} parent=1 // pred_fallthru
      _
    // Predicated region
    $region90: #{tpu_custom_call.1} parent=1 // pred_check
      _
    $region91: #{tpu_custom_call.1} parent=1 // pred_check_branch
      %228 = sbr.rel (0) target = $region93
    $region92: #{tpu_custom_call.1} parent=1 // pred_region
      %229 = dma.done [#allocation15], 6144
    $region93: #{tpu_custom_call.1} parent=1 // pred_fallthru
      _
    // Predicated region
    $region94: #{tpu_custom_call.1} parent=1 // pred_check
      _
    $region95: #{tpu_custom_call.1} parent=1 // pred_check_branch
      %231 = sbr.rel (0) target = $region97
    $region96: #{tpu_custom_call.1} parent=1 // pred_region
      %232 = dma.done [#allocation15], 96
    $region97: #{tpu_custom_call.1} parent=1 // pred_fallthru
      _
    // Predicated region
    $region98: #{tpu_custom_call.1} parent=1 // pred_check
      _
    $region99: #{tpu_custom_call.1} parent=1 // pred_check_branch
      %234 = sbr.rel (0) target = $region101
    $region100: #{tpu_custom_call.1} parent=1 // pred_region
      %235 = dma.done [#allocation18], 32
    $region101: #{tpu_custom_call.1} parent=1 // pred_fallthru
      _
    // Predicated region
    $region102: #{tpu_custom_call.1} parent=1 // pred_check
      _
    $region103: #{tpu_custom_call.1} parent=1 // pred_check_branch
      %237 = sbr.rel (0) target = $region105
    $region104: #{tpu_custom_call.1} parent=1 // pred_region
      %238 = dma.done [#allocation18], 1024
    $region105: #{tpu_custom_call.1} parent=1 // pred_fallthru
      _
    // Predicated region
    $region106: #{tpu_custom_call.1} parent=1 // pred_check
      _
    $region107: #{tpu_custom_call.1} parent=1 // pred_check_branch
      %240 = sbr.rel (0) target = $region109
    $region108: #{tpu_custom_call.1} parent=1 // pred_region
      %241 = dma.done [#allocation21], 1024
    $region109: #{tpu_custom_call.1} parent=1 // pred_fallthru
      _
    // Predicated region
    $region110: #{tpu_custom_call.1} parent=1 // pred_check
      _
    $region111: #{tpu_custom_call.1} parent=1 // pred_check_branch
      %243 = sbr.rel (0) target = $region113
    $region112: #{tpu_custom_call.1} parent=1 // pred_region
      %244 = dma.done [#allocation21], 16
    $region113: #{tpu_custom_call.1} parent=1 // pred_fallthru
      _
    // Predicated region
    $region114: #{tpu_custom_call.1} parent=1 // pred_check
      _
    $region115: #{tpu_custom_call.1} parent=1 // pred_check_branch
      %246 = sbr.rel (0) target = $region117
    $region116: #{tpu_custom_call.1} parent=1 // pred_region
      %247 = dma.done [#allocation24], 1024
    $region117: #{tpu_custom_call.1} parent=1 // pred_fallthru
      _
    // Predicated region
    $region118: #{tpu_custom_call.1} parent=1 // pred_check
      _
    $region119: #{tpu_custom_call.1} parent=1 // pred_check_branch
      %249 = sbr.rel (0) target = $region121
    $region120: #{tpu_custom_call.1} parent=1 // pred_region
      %250 = dma.done [#allocation24], 16
    $region121: #{tpu_custom_call.1} parent=1 // pred_fallthru
      _
    %v252 = vld [vmem:[#allocation2] sm:$0xff]
    %v253 = vld [vmem:[#allocation2 + $0x8] sm:$0xff]
    %v254 = vld [vmem:[#allocation2 + $0x10] sm:$0xff]
    %v255 = vld [vmem:[#allocation2 + $0x18] sm:$0xff]
    %v256 = vld [vmem:[#allocation2 + $0x20] sm:$0xff]
    %v257 = vld [vmem:[#allocation2 + $0x28] sm:$0xff]
    %v258 = vld [vmem:[#allocation2 + $0x30] sm:$0xff]
    %v259 = vld [vmem:[#allocation2 + $0x38] sm:$0xff]
    %v260 = vpack.c.bf16 %v253, %v252
    %v261 = vpack.c.bf16 %v255, %v254
    %v262 = vpack.c.bf16 %v257, %v256
    %v263 = vpack.c.bf16 %v259, %v258
    %v264 = vld [vmem:[#allocation14] sm:$0xff]
    %v265 = vld [vmem:[#allocation14 + $0x8] sm:$0xf]
    %v266 = vld [vmem:[#allocation14 + $0xc] sm:$0xff]
    %v267 = vld [vmem:[#allocation14 + $0x14] sm:$0xf]
    %v268 = vld [vmem:[#allocation14 + $0x18] sm:$0xff]
    %v269 = vld [vmem:[#allocation14 + $0x20] sm:$0xf]
    %v270 = vld [vmem:[#allocation14 + $0x24] sm:$0xff]
    %v271 = vld [vmem:[#allocation14 + $0x2c] sm:$0xf]
    %v272 = vld [vmem:[#allocation14 + $0x30] sm:$0xff]
    %v273 = vld [vmem:[#allocation14 + $0x38] sm:$0xf]
    %v274 = vld [vmem:[#allocation14 + $0x3c] sm:$0xff]
    %v275 = vld [vmem:[#allocation14 + $0x44] sm:$0xf]
    %v276 = vld [vmem:[#allocation14 + $0x48] sm:$0xff]
    %v277 = vld [vmem:[#allocation14 + $0x50] sm:$0xf]
    %v278 = vld [vmem:[#allocation14 + $0x54] sm:$0xff]
    %v279 = vld [vmem:[#allocation14 + $0x5c] sm:$0xf]
    %v280 = vld [vmem:[#allocation14 + $0x60] sm:$0xff]
    %v281 = vld [vmem:[#allocation14 + $0x68] sm:$0xf]
    %v282 = vld [vmem:[#allocation14 + $0x6c] sm:$0xff]
    %v283 = vld [vmem:[#allocation14 + $0x74] sm:$0xf]
    %v284 = vld [vmem:[#allocation14 + $0x78] sm:$0xff]
    %v285 = vld [vmem:[#allocation14 + $0x80] sm:$0xf]
    %v286 = vld [vmem:[#allocation14 + $0x84] sm:$0xff]
    %v287 = vld [vmem:[#allocation14 + $0x8c] sm:$0xf]
    %v288 = vld [vmem:[#allocation14 + $0x90] sm:$0xff]
    %v289 = vld [vmem:[#allocation14 + $0x98] sm:$0xf]
    %v290 = vld [vmem:[#allocation14 + $0x9c] sm:$0xff]
    %v291 = vld [vmem:[#allocation14 + $0xa4] sm:$0xf]
    %v292 = vld [vmem:[#allocation14 + $0xa8] sm:$0xff]
    %v293 = vld [vmem:[#allocation14 + $0xb0] sm:$0xf]
    %v294 = vld [vmem:[#allocation14 + $0xb4] sm:$0xff]
    %v295 = vld [vmem:[#allocation14 + $0xbc] sm:$0xf]
    %v296 = vld [vmem:[#allocation16] sm:$0x7]
    %v298 = vlaneseq
    %v299 = vshrl.u32 %v298, 7
    %v300 = vsub.s32 0, %v299
    %v301 = vrot.slane %v296, %v300
    %v302 = vlaneseq
    %v303 = vshrl.u32 %v302, 7
    %v304 = vsub.s32 1, %v303
    %v305 = vrot.slane %v296, %v304
    %v306 = vlaneseq
    %v307 = vshrl.u32 %v306, 7
    %v308 = vsub.s32 2, %v307
    %v309 = vrot.slane %v296, %v308
    %v345 = vunpack.c.l.b16 %v264
    %v346 = vunpack.c.h.b16 %v264
    %v347 = vunpack.c.l.b16 %v265
    %v348 = vunpack.c.l.b16 %v266
    %v349 = vunpack.c.h.b16 %v266
    %v350 = vunpack.c.l.b16 %v267
    %v351 = vunpack.c.l.b16 %v268
    %v352 = vunpack.c.h.b16 %v268
    %v353 = vunpack.c.l.b16 %v269
    %v354 = vunpack.c.l.b16 %v270
    %v355 = vunpack.c.h.b16 %v270
    %v356 = vunpack.c.l.b16 %v271
    %v357 = vunpack.c.l.b16 %v272
    %v358 = vunpack.c.h.b16 %v272
    %v359 = vunpack.c.l.b16 %v273
    %v360 = vunpack.c.l.b16 %v274
    %v361 = vunpack.c.h.b16 %v274
    %v362 = vunpack.c.l.b16 %v275
    %v363 = vunpack.c.l.b16 %v276
    %v364 = vunpack.c.h.b16 %v276
    %v365 = vunpack.c.l.b16 %v277
    %v366 = vunpack.c.l.b16 %v278
    %v367 = vunpack.c.h.b16 %v278
    %v368 = vunpack.c.l.b16 %v279
    %v369 = vunpack.c.l.b16 %v280
    %v370 = vunpack.c.h.b16 %v280
    %v371 = vunpack.c.l.b16 %v281
    %v372 = vunpack.c.l.b16 %v282
    %v373 = vunpack.c.h.b16 %v282
    %v374 = vunpack.c.l.b16 %v283
    %v375 = vunpack.c.l.b16 %v284
    %v376 = vunpack.c.h.b16 %v284
    %v377 = vunpack.c.l.b16 %v285
    %v378 = vunpack.c.l.b16 %v286
    %v379 = vunpack.c.h.b16 %v286
    %v380 = vunpack.c.l.b16 %v287
    %v381 = vunpack.c.l.b16 %v288
    %v382 = vunpack.c.h.b16 %v288
    %v383 = vunpack.c.l.b16 %v289
    %v384 = vunpack.c.l.b16 %v290
    %v385 = vunpack.c.h.b16 %v290
    %v386 = vunpack.c.l.b16 %v291
    %v387 = vunpack.c.l.b16 %v292
    %v388 = vunpack.c.h.b16 %v292
    %v389 = vunpack.c.l.b16 %v293
    %v390 = vunpack.c.l.b16 %v294
    %v391 = vunpack.c.h.b16 %v294
    %v392 = vunpack.c.l.b16 %v295
    %v393 = vpack.c.b16 %v348, %v345
    %v394 = vpack.c.b16 %v349, %v346
    %v395 = vpack.c.b16 %v350, %v347
    %v396 = vpack.c.b16 %v354, %v351
    %v397 = vpack.c.b16 %v355, %v352
    %v398 = vpack.c.b16 %v356, %v353
    %v399 = vpack.c.b16 %v360, %v357
    %v400 = vpack.c.b16 %v361, %v358
    %v401 = vpack.c.b16 %v362, %v359
    %v402 = vpack.c.b16 %v366, %v363
    %v403 = vpack.c.b16 %v367, %v364
    %v404 = vpack.c.b16 %v368, %v365
    %v405 = vpack.c.b16 %v372, %v369
    %v406 = vpack.c.b16 %v373, %v370
    %v407 = vpack.c.b16 %v374, %v371
    %v408 = vpack.c.b16 %v378, %v375
    %v409 = vpack.c.b16 %v379, %v376
    %v410 = vpack.c.b16 %v380, %v377
    %v411 = vpack.c.b16 %v384, %v381
    %v412 = vpack.c.b16 %v385, %v382
    %v413 = vpack.c.b16 %v386, %v383
    %v414 = vpack.c.b16 %v390, %v387
    %v415 = vpack.c.b16 %v391, %v388
    %v416 = vpack.c.b16 %v392, %v389
    %441 = vmatprep.subr.bf16.mxu0 %v394
    %442 = vmatpush1.bf16.msra.mxu0 %v393
    %443 = vmatprep.subr.bf16.mxu0 %v397
    %444 = vmatpush1.bf16.msra.mxu0 %v396
    %445 = vmatprep.subr.bf16.mxu0 %v400
    %446 = vmatpush1.bf16.msra.mxu0 %v399
    %447 = vmatprep.subr.bf16.mxu0 %v403
    %448 = vmatpush1.bf16.msra.mxu0 %v402
    %449 = vmatprep.subr.bf16.mxu0 %v406
    %450 = vmatpush1.bf16.msra.mxu0 %v405
    %451 = vmatprep.subr.bf16.mxu0 %v409
    %452 = vmatpush1.bf16.msra.mxu0 %v408
    %453 = vmatprep.subr.bf16.mxu0 %v412
    %454 = vmatpush1.bf16.msra.mxu0 %v411
    %455 = vmatprep.subr.bf16.mxu0 %v415
    %456 = vmatpush1.bf16.msra.mxu0 %v414
    %457 = vmatprep.subr.bf16.mxu0 0
    %458 = vmatpush1.bf16.msra.mxu0 0
    %459 = vmatprep.subr.bf16.mxu0 0
    %460 = vmatpush1.bf16.msra.mxu0 0
    %461 = vmatprep.subr.bf16.mxu0 0
    %462 = vmatpush1.bf16.msra.mxu0 0
    %463 = vmatprep.subr.bf16.mxu0 0
    %464 = vmatpush1.bf16.msra.mxu0 0
    %465 = vmatprep.subr.bf16.mxu0 0
    %466 = vmatpush1.bf16.msra.mxu0 0
    %467 = vmatprep.subr.bf16.mxu0 0
    %468 = vmatpush1.bf16.msra.mxu0 0
    %469 = vmatprep.subr.bf16.mxu0 0
    %470 = vmatpush1.bf16.msra.mxu0 0
    %471 = vmatprep.subr.bf16.mxu0 0
    %472 = vmatpush1.bf16.msra.mxu0 0
    %473 = vmatprep.mubr.bf16.mxu0 0
    %474 = vmatmul.mubr.bf16.gmra.mrb[0].mxu0 %v260
    %v475 = vpop.f32.mrb[0].mxu0
    %v476 = vadd.f32 %v301, %v475
    %v477 = vpop.f32.mrb[0].mxu0
    %v478 = vadd.f32 %v305, %v477
    %v479 = vpop.f32.mrb[0].mxu0
    %v480 = vadd.f32 %v301, %v479
    %v481 = vpop.f32.mrb[0].mxu0
    %v482 = vadd.f32 %v305, %v481
    %483 = vmatprep.mubr.bf16.mxu0 0
    %484 = vmatmul.mubr.bf16.gmra.mrb[0].mxu0 %v261
    %v485 = vpop.f32.mrb[0].mxu0
    %v486 = vadd.f32 %v301, %v485
    %v487 = vpop.f32.mrb[0].mxu0
    %v488 = vadd.f32 %v305, %v487
    %v489 = vpop.f32.mrb[0].mxu0
    %v490 = vadd.f32 %v301, %v489
    %v491 = vpop.f32.mrb[0].mxu0
    %v492 = vadd.f32 %v305, %v491
    %493 = vmatprep.mubr.bf16.mxu0 0
    %494 = vmatmul.mubr.bf16.gmra.mrb[0].mxu0 %v262
    %v495 = vpop.f32.mrb[0].mxu0
    %v496 = vadd.f32 %v301, %v495
    %v497 = vpop.f32.mrb[0].mxu0
    %v498 = vadd.f32 %v305, %v497
    %v499 = vpop.f32.mrb[0].mxu0
    %v500 = vadd.f32 %v301, %v499
    %v501 = vpop.f32.mrb[0].mxu0
    %v502 = vadd.f32 %v305, %v501
    %503 = vmatprep.mubr.bf16.mxu0 0
    %504 = vmatmul.mubr.bf16.gmra.mrb[0].mxu0 %v263
    %v505 = vpop.f32.mrb[0].mxu0
    %v506 = vadd.f32 %v301, %v505
    %v507 = vpop.f32.mrb[0].mxu0
    %v508 = vadd.f32 %v305, %v507
    %v509 = vpop.f32.mrb[0].mxu0
    %v510 = vadd.f32 %v301, %v509
    %v511 = vpop.f32.mrb[0].mxu0
    %v512 = vadd.f32 %v305, %v511
    %513 = vdwg.mxu0
    %514 = vmatprep.subr.bf16.mxu0 0
    %515 = vmatpush1.bf16.msra.mxu0 %v395
    %516 = vmatprep.subr.bf16.mxu0 0
    %517 = vmatpush1.bf16.msra.mxu0 %v398
    %518 = vmatprep.subr.bf16.mxu0 0
    %519 = vmatpush1.bf16.msra.mxu0 %v401
    %520 = vmatprep.subr.bf16.mxu0 0
    %521 = vmatpush1.bf16.msra.mxu0 %v404
    %522 = vmatprep.subr.bf16.mxu0 0
    %523 = vmatpush1.bf16.msra.mxu0 %v407
    %524 = vmatprep.subr.bf16.mxu0 0
    %525 = vmatpush1.bf16.msra.mxu0 %v410
    %526 = vmatprep.subr.bf16.mxu0 0
    %527 = vmatpush1.bf16.msra.mxu0 %v413
    %528 = vmatprep.subr.bf16.mxu0 0
    %529 = vmatpush1.bf16.msra.mxu0 %v416
    %530 = vmatprep.subr.bf16.mxu0 0
    %531 = vmatpush1.bf16.msra.mxu0 0
    %532 = vmatprep.subr.bf16.mxu0 0
    %533 = vmatpush1.bf16.msra.mxu0 0
    %534 = vmatprep.subr.bf16.mxu0 0
    %535 = vmatpush1.bf16.msra.mxu0 0
    %536 = vmatprep.subr.bf16.mxu0 0
    %537 = vmatpush1.bf16.msra.mxu0 0
    %538 = vmatprep.subr.bf16.mxu0 0
    %539 = vmatpush1.bf16.msra.mxu0 0
    %540 = vmatprep.subr.bf16.mxu0 0
    %541 = vmatpush1.bf16.msra.mxu0 0
    %542 = vmatprep.subr.bf16.mxu0 0
    %543 = vmatpush1.bf16.msra.mxu0 0
    %544 = vmatprep.subr.bf16.mxu0 0
    %545 = vmatpush1.bf16.msra.mxu0 0
    %546 = vmatprep.mubr.bf16.mxu0 0
    %547 = vmatmul.mubr.bf16.gmra.mrb[0].mxu0 %v260
    %v548 = vpop.f32.mrb[0].mxu0
    %v549 = vadd.f32 %v309, %v548
    %v550 = vpop.f32.mrb[0].mxu0
    %v551 = vpop.f32.mrb[0].mxu0
    %v552 = vadd.f32 %v309, %v551
    %v553 = vpop.f32.mrb[0].mxu0
    %554 = vmatprep.mubr.bf16.mxu0 0
    %555 = vmatmul.mubr.bf16.gmra.mrb[0].mxu0 %v261
    %v556 = vpop.f32.mrb[0].mxu0
    %v557 = vadd.f32 %v309, %v556
    %v558 = vpop.f32.mrb[0].mxu0
    %v559 = vpop.f32.mrb[0].mxu0
    %v560 = vadd.f32 %v309, %v559
    %v561 = vpop.f32.mrb[0].mxu0
    %562 = vmatprep.mubr.bf16.mxu0 0
    %563 = vmatmul.mubr.bf16.gmra.mrb[0].mxu0 %v262
    %v564 = vpop.f32.mrb[0].mxu0
    %v565 = vadd.f32 %v309, %v564
    %v566 = vpop.f32.mrb[0].mxu0
    %v567 = vpop.f32.mrb[0].mxu0
    %v568 = vadd.f32 %v309, %v567
    %v569 = vpop.f32.mrb[0].mxu0
    %570 = vmatprep.mubr.bf16.mxu0 0
    %571 = vmatmul.mubr.bf16.gmra.mrb[0].mxu0 %v263
    %v572 = vpop.f32.mrb[0].mxu0
    %v573 = vadd.f32 %v309, %v572
    %v574 = vpop.f32.mrb[0].mxu0
    %v575 = vpop.f32.mrb[0].mxu0
    %v576 = vadd.f32 %v309, %v575
    %v577 = vpop.f32.mrb[0].mxu0
    %578 = vdwg.mxu0
    %v579 = vld [vmem:[#allocation5] sm:$0xf]
    %v580 = vld [vmem:[#allocation5 + $0x4] sm:$0xf]
    %v581 = vld [vmem:[#allocation5 + $0x8] sm:$0xf]
    %v582 = vld [vmem:[#allocation5 + $0xc] sm:$0xf]
    %v583 = vld [vmem:[#allocation5 + $0x10] sm:$0xf]
    %v584 = vld [vmem:[#allocation5 + $0x14] sm:$0xf]
    %v585 = vld [vmem:[#allocation5 + $0x18] sm:$0xf]
    %v586 = vld [vmem:[#allocation5 + $0x1c] sm:$0xf]
    %v587 = vld [vmem:[#allocation5 + $0x20] sm:$0xf]
    %v588 = vld [vmem:[#allocation5 + $0x24] sm:$0xf]
    %v589 = vld [vmem:[#allocation5 + $0x28] sm:$0xf]
    %v590 = vld [vmem:[#allocation5 + $0x2c] sm:$0xf]
    %v591 = vld [vmem:[#allocation5 + $0x30] sm:$0xf]
    %v592 = vld [vmem:[#allocation5 + $0x34] sm:$0xf]
    %v593 = vld [vmem:[#allocation5 + $0x38] sm:$0xf]
    %v594 = vld [vmem:[#allocation5 + $0x3c] sm:$0xf]
    %v595 = vld [vmem:[#allocation5 + $0x40] sm:$0xf]
    %v596 = vld [vmem:[#allocation5 + $0x44] sm:$0xf]
    %v597 = vld [vmem:[#allocation5 + $0x48] sm:$0xf]
    %v598 = vld [vmem:[#allocation5 + $0x4c] sm:$0xf]
    %v599 = vld [vmem:[#allocation5 + $0x50] sm:$0xf]
    %v600 = vld [vmem:[#allocation5 + $0x54] sm:$0xf]
    %v601 = vld [vmem:[#allocation5 + $0x58] sm:$0xf]
    %v602 = vld [vmem:[#allocation5 + $0x5c] sm:$0xf]
    %v603 = vld [vmem:[#allocation5 + $0x60] sm:$0xf]
    %v604 = vld [vmem:[#allocation5 + $0x64] sm:$0xf]
    %v605 = vld [vmem:[#allocation5 + $0x68] sm:$0xf]
    %v606 = vld [vmem:[#allocation5 + $0x6c] sm:$0xf]
    %v607 = vld [vmem:[#allocation5 + $0x70] sm:$0xf]
    %v608 = vld [vmem:[#allocation5 + $0x74] sm:$0xf]
    %v609 = vld [vmem:[#allocation5 + $0x78] sm:$0xf]
    %v610 = vld [vmem:[#allocation5 + $0x7c] sm:$0xf]
    %v643 = vunpack.c.l.b16 %v579
    %v644 = vunpack.c.l.b16 %v580
    %v645 = vunpack.c.l.b16 %v581
    %v646 = vunpack.c.l.b16 %v582
    %v647 = vunpack.c.l.b16 %v583
    %v648 = vunpack.c.l.b16 %v584
    %v649 = vunpack.c.l.b16 %v585
    %v650 = vunpack.c.l.b16 %v586
    %v651 = vunpack.c.l.b16 %v587
    %v652 = vunpack.c.l.b16 %v588
    %v653 = vunpack.c.l.b16 %v589
    %v654 = vunpack.c.l.b16 %v590
    %v655 = vunpack.c.l.b16 %v591
    %v656 = vunpack.c.l.b16 %v592
    %v657 = vunpack.c.l.b16 %v593
    %v658 = vunpack.c.l.b16 %v594
    %v659 = vunpack.c.l.b16 %v595
    %v660 = vunpack.c.l.b16 %v596
    %v661 = vunpack.c.l.b16 %v597
    %v662 = vunpack.c.l.b16 %v598
    %v663 = vunpack.c.l.b16 %v599
    %v664 = vunpack.c.l.b16 %v600
    %v665 = vunpack.c.l.b16 %v601
    %v666 = vunpack.c.l.b16 %v602
    %v667 = vunpack.c.l.b16 %v603
    %v668 = vunpack.c.l.b16 %v604
    %v669 = vunpack.c.l.b16 %v605
    %v670 = vunpack.c.l.b16 %v606
    %v671 = vunpack.c.l.b16 %v607
    %v672 = vunpack.c.l.b16 %v608
    %v673 = vunpack.c.l.b16 %v609
    %v674 = vunpack.c.l.b16 %v610
    %v675 = vpack.c.b16 %v644, %v643
    %v676 = vpack.c.b16 %v646, %v645
    %v677 = vpack.c.b16 %v648, %v647
    %v678 = vpack.c.b16 %v650, %v649
    %v679 = vpack.c.b16 %v652, %v651
    %v680 = vpack.c.b16 %v654, %v653
    %v681 = vpack.c.b16 %v656, %v655
    %v682 = vpack.c.b16 %v658, %v657
    %v683 = vpack.c.b16 %v660, %v659
    %v684 = vpack.c.b16 %v662, %v661
    %v685 = vpack.c.b16 %v664, %v663
    %v686 = vpack.c.b16 %v666, %v665
    %v687 = vpack.c.b16 %v668, %v667
    %v688 = vpack.c.b16 %v670, %v669
    %v689 = vpack.c.b16 %v672, %v671
    %v690 = vpack.c.b16 %v674, %v673
    %vm691 = vcmask 523264
    %v693 = vsel %vm691, %v675, 0
    %v696 = vsel %vm691, %v676, 0
    %v699 = vsel %vm691, %v677, 0
    %v702 = vsel %vm691, %v678, 0
    %v705 = vsel %vm691, %v679, 0
    %v708 = vsel %vm691, %v680, 0
    %v711 = vsel %vm691, %v681, 0
    %v714 = vsel %vm691, %v682, 0
    %v717 = vsel %vm691, %v683, 0
    %v720 = vsel %vm691, %v684, 0
    %v723 = vsel %vm691, %v685, 0
    %v726 = vsel %vm691, %v686, 0
    %v729 = vsel %vm691, %v687, 0
    %v732 = vsel %vm691, %v688, 0
    %v735 = vsel %vm691, %v689, 0
    %v738 = vsel %vm691, %v690, 0
    %740 = vmatprep.subr.bf16.mxu0 0
    %741 = vmatpush1.bf16.msra.mxu0 %v260
    %742 = vmatprep.subr.bf16.mxu0 0
    %743 = vmatpush1.bf16.msra.mxu0 %v261
    %744 = vmatprep.subr.bf16.mxu0 0
    %745 = vmatpush1.bf16.msra.mxu0 %v262
    %746 = vmatprep.subr.bf16.mxu0 0
    %747 = vmatpush1.bf16.msra.mxu0 %v263
    %748 = vmatprep.subr.bf16.mxu0 0
    %749 = vmatpush1.bf16.msra.mxu0 0
    %750 = vmatprep.subr.bf16.mxu0 0
    %751 = vmatpush1.bf16.msra.mxu0 0
    %752 = vmatprep.subr.bf16.mxu0 0
    %753 = vmatpush1.bf16.msra.mxu0 0
    %754 = vmatprep.subr.bf16.mxu0 0
    %755 = vmatpush1.bf16.msra.mxu0 0
    %756 = vmatprep.subr.bf16.mxu0 0
    %757 = vmatpush1.bf16.msra.mxu0 0
    %758 = vmatprep.subr.bf16.mxu0 0
    %759 = vmatpush1.bf16.msra.mxu0 0
    %760 = vmatprep.subr.bf16.mxu0 0
    %761 = vmatpush1.bf16.msra.mxu0 0
    %762 = vmatprep.subr.bf16.mxu0 0
    %763 = vmatpush1.bf16.msra.mxu0 0
    %764 = vmatprep.subr.bf16.mxu0 0
    %765 = vmatpush1.bf16.msra.mxu0 0
    %766 = vmatprep.subr.bf16.mxu0 0
    %767 = vmatpush1.bf16.msra.mxu0 0
    %768 = vmatprep.subr.bf16.mxu0 0
    %769 = vmatpush1.bf16.msra.mxu0 0
    %770 = vmatprep.subr.bf16.mxu0 0
    %771 = vmatpush1.bf16.msra.mxu0 0
    %772 = vmatprep.mubr.bf16.mxu0 0
    %773 = vmatmul.mubr.bf16.gmra.mrb[0].mxu0 %v693
    %v774 = vpop.f32.mrb[0].mxu0
    %v775 = vadd.f32 0.0, %v774
    %v776 = vpop.f32.mrb[0].mxu0
    %v777 = vpop.f32.mrb[0].mxu0
    %v778 = vadd.f32 0.0, %v777
    %v779 = vpop.f32.mrb[0].mxu0
    %780 = vmatprep.mubr.bf16.mxu0 0
    %781 = vmatmul.mubr.bf16.gmra.mrb[0].mxu0 %v696
    %v782 = vpop.f32.mrb[0].mxu0
    %v783 = vadd.f32 0.0, %v782
    %v784 = vpop.f32.mrb[0].mxu0
    %v785 = vpop.f32.mrb[0].mxu0
    %v786 = vadd.f32 0.0, %v785
    %v787 = vpop.f32.mrb[0].mxu0
    %788 = vmatprep.mubr.bf16.mxu0 0
    %789 = vmatmul.mubr.bf16.gmra.mrb[0].mxu0 %v699
    %v790 = vpop.f32.mrb[0].mxu0
    %v791 = vadd.f32 0.0, %v790
    %v792 = vpop.f32.mrb[0].mxu0
    %v793 = vpop.f32.mrb[0].mxu0
    %v794 = vadd.f32 0.0, %v793
    %v795 = vpop.f32.mrb[0].mxu0
    %796 = vmatprep.mubr.bf16.mxu0 0
    %797 = vmatmul.mubr.bf16.gmra.mrb[0].mxu0 %v702
    %v798 = vpop.f32.mrb[0].mxu0
    %v799 = vadd.f32 0.0, %v798
    %v800 = vpop.f32.mrb[0].mxu0
    %v801 = vpop.f32.mrb[0].mxu0
    %v802 = vadd.f32 0.0, %v801
    %v803 = vpop.f32.mrb[0].mxu0
    %804 = vmatprep.mubr.bf16.mxu0 0
    %805 = vmatmul.mubr.bf16.gmra.mrb[0].mxu0 %v705
    %v806 = vpop.f32.mrb[0].mxu0
    %v807 = vadd.f32 0.0, %v806
    %v808 = vpop.f32.mrb[0].mxu0
    %v809 = vpop.f32.mrb[0].mxu0
    %v810 = vadd.f32 0.0, %v809
    %v811 = vpop.f32.mrb[0].mxu0
    %812 = vmatprep.mubr.bf16.mxu0 0
    %813 = vmatmul.mubr.bf16.gmra.mrb[0].mxu0 %v708
    %v814 = vpop.f32.mrb[0].mxu0
    %v815 = vadd.f32 0.0, %v814
    %v816 = vpop.f32.mrb[0].mxu0
    %v817 = vpop.f32.mrb[0].mxu0
    %v818 = vadd.f32 0.0, %v817
    %v819 = vpop.f32.mrb[0].mxu0
    %820 = vmatprep.mubr.bf16.mxu0 0
    %821 = vmatmul.mubr.bf16.gmra.mrb[0].mxu0 %v711
    %v822 = vpop.f32.mrb[0].mxu0
    %v823 = vadd.f32 0.0, %v822
    %v824 = vpop.f32.mrb[0].mxu0
    %v825 = vpop.f32.mrb[0].mxu0
    %v826 = vadd.f32 0.0, %v825
    %v827 = vpop.f32.mrb[0].mxu0
    %828 = vmatprep.mubr.bf16.mxu0 0
    %829 = vmatmul.mubr.bf16.gmra.mrb[0].mxu0 %v714
    %v830 = vpop.f32.mrb[0].mxu0
    %v831 = vadd.f32 0.0, %v830
    %v832 = vpop.f32.mrb[0].mxu0
    %v833 = vpop.f32.mrb[0].mxu0
    %v834 = vadd.f32 0.0, %v833
    %v835 = vpop.f32.mrb[0].mxu0
    %836 = vmatprep.mubr.bf16.mxu0 0
    %837 = vmatmul.mubr.bf16.gmra.mrb[0].mxu0 %v717
    %v838 = vpop.f32.mrb[0].mxu0
    %v839 = vadd.f32 0.0, %v838
    %v840 = vpop.f32.mrb[0].mxu0
    %v841 = vpop.f32.mrb[0].mxu0
    %v842 = vadd.f32 0.0, %v841
    %v843 = vpop.f32.mrb[0].mxu0
    %844 = vmatprep.mubr.bf16.mxu0 0
    %845 = vmatmul.mubr.bf16.gmra.mrb[0].mxu0 %v720
    %v846 = vpop.f32.mrb[0].mxu0
    %v847 = vadd.f32 0.0, %v846
    %v848 = vpop.f32.mrb[0].mxu0
    %v849 = vpop.f32.mrb[0].mxu0
    %v850 = vadd.f32 0.0, %v849
    %v851 = vpop.f32.mrb[0].mxu0
    %852 = vmatprep.mubr.bf16.mxu0 0
    %853 = vmatmul.mubr.bf16.gmra.mrb[0].mxu0 %v723
    %v854 = vpop.f32.mrb[0].mxu0
    %v855 = vadd.f32 0.0, %v854
    %v856 = vpop.f32.mrb[0].mxu0
    %v857 = vpop.f32.mrb[0].mxu0
    %v858 = vadd.f32 0.0, %v857
    %v859 = vpop.f32.mrb[0].mxu0
    %860 = vmatprep.mubr.bf16.mxu0 0
    %861 = vmatmul.mubr.bf16.gmra.mrb[0].mxu0 %v726
    %v862 = vpop.f32.mrb[0].mxu0
    %v863 = vadd.f32 0.0, %v862
    %v864 = vpop.f32.mrb[0].mxu0
    %v865 = vpop.f32.mrb[0].mxu0
    %v866 = vadd.f32 0.0, %v865
    %v867 = vpop.f32.mrb[0].mxu0
    %868 = vmatprep.mubr.bf16.mxu0 0
    %869 = vmatmul.mubr.bf16.gmra.mrb[0].mxu0 %v729
    %v870 = vpop.f32.mrb[0].mxu0
    %v871 = vadd.f32 0.0, %v870
    %v872 = vpop.f32.mrb[0].mxu0
    %v873 = vpop.f32.mrb[0].mxu0
    %v874 = vadd.f32 0.0, %v873
    %v875 = vpop.f32.mrb[0].mxu0
    %876 = vmatprep.mubr.bf16.mxu0 0
    %877 = vmatmul.mubr.bf16.gmra.mrb[0].mxu0 %v732
    %v878 = vpop.f32.mrb[0].mxu0
    %v879 = vadd.f32 0.0, %v878
    %v880 = vpop.f32.mrb[0].mxu0
    %v881 = vpop.f32.mrb[0].mxu0
    %v882 = vadd.f32 0.0, %v881
    %v883 = vpop.f32.mrb[0].mxu0
    %884 = vmatprep.mubr.bf16.mxu0 0
    %885 = vmatmul.mubr.bf16.gmra.mrb[0].mxu0 %v735
    %v886 = vpop.f32.mrb[0].mxu0
    %v887 = vadd.f32 0.0, %v886
    %v888 = vpop.f32.mrb[0].mxu0
    %v889 = vpop.f32.mrb[0].mxu0
    %v890 = vadd.f32 0.0, %v889
    %v891 = vpop.f32.mrb[0].mxu0
    %892 = vmatprep.mubr.bf16.mxu0 0
    %893 = vmatmul.mubr.bf16.gmra.mrb[0].mxu0 %v738
    %v894 = vpop.f32.mrb[0].mxu0
    %v895 = vadd.f32 0.0, %v894
    %v896 = vpop.f32.mrb[0].mxu0
    %v897 = vpop.f32.mrb[0].mxu0
    %v898 = vadd.f32 0.0, %v897
    %v899 = vpop.f32.mrb[0].mxu0
    %900 = vdwg.mxu0
    %v901 = vpack.c.bf16 %v778, %v775
    %v902 = vpack.c.bf16 %v786, %v783
    %v903 = vpack.c.bf16 %v794, %v791
    %v904 = vpack.c.bf16 %v802, %v799
    %v905 = vpack.c.bf16 %v810, %v807
    %v906 = vpack.c.bf16 %v818, %v815
    %v907 = vpack.c.bf16 %v826, %v823
    %v908 = vpack.c.bf16 %v834, %v831
    %v909 = vpack.c.bf16 %v842, %v839
    %v910 = vpack.c.bf16 %v850, %v847
    %v911 = vpack.c.bf16 %v858, %v855
    %v912 = vpack.c.bf16 %v866, %v863
    %v913 = vpack.c.bf16 %v874, %v871
    %v914 = vpack.c.bf16 %v882, %v879
    %v915 = vpack.c.bf16 %v890, %v887
    %v916 = vpack.c.bf16 %v898, %v895
    %v917 = vld [vmem:[#allocation8] sm:$0xff]
    %v918 = vld [vmem:[#allocation8 + $0x8] sm:$0xff]
    %v919 = vld [vmem:[#allocation8 + $0x10] sm:$0xff]
    %v920 = vld [vmem:[#allocation8 + $0x18] sm:$0xff]
    %v921 = vld [vmem:[#allocation8 + $0x20] sm:$0xff]
    %v922 = vld [vmem:[#allocation8 + $0x28] sm:$0xff]
    %v923 = vld [vmem:[#allocation8 + $0x30] sm:$0xff]
    %v924 = vld [vmem:[#allocation8 + $0x38] sm:$0xff]
    %v925 = vld [vmem:[#allocation10] sm:$0xf]
    %v926 = vld [vmem:[#allocation10 + $0x4] sm:$0xf]
    %v927 = vld [vmem:[#allocation10 + $0x8] sm:$0xf]
    %v928 = vld [vmem:[#allocation10 + $0xc] sm:$0xf]
    %v929 = vld [vmem:[#allocation10 + $0x10] sm:$0xf]
    %v930 = vld [vmem:[#allocation10 + $0x14] sm:$0xf]
    %v931 = vld [vmem:[#allocation10 + $0x18] sm:$0xf]
    %v932 = vld [vmem:[#allocation10 + $0x1c] sm:$0xf]
    %v933 = vld [vmem:[#allocation10 + $0x20] sm:$0xf]
    %v934 = vld [vmem:[#allocation10 + $0x24] sm:$0xf]
    %v935 = vld [vmem:[#allocation10 + $0x28] sm:$0xf]
    %v936 = vld [vmem:[#allocation10 + $0x2c] sm:$0xf]
    %v937 = vld [vmem:[#allocation10 + $0x30] sm:$0xf]
    %v938 = vld [vmem:[#allocation10 + $0x34] sm:$0xf]
    %v939 = vld [vmem:[#allocation10 + $0x38] sm:$0xf]
    %v940 = vld [vmem:[#allocation10 + $0x3c] sm:$0xf]
    %v957 = vunpack.c.l.b16 %v925
    %v958 = vunpack.c.l.b16 %v926
    %v959 = vunpack.c.l.b16 %v927
    %v960 = vunpack.c.l.b16 %v928
    %v961 = vunpack.c.l.b16 %v929
    %v962 = vunpack.c.l.b16 %v930
    %v963 = vunpack.c.l.b16 %v931
    %v964 = vunpack.c.l.b16 %v932
    %v965 = vunpack.c.l.b16 %v933
    %v966 = vunpack.c.l.b16 %v934
    %v967 = vunpack.c.l.b16 %v935
    %v968 = vunpack.c.l.b16 %v936
    %v969 = vunpack.c.l.b16 %v937
    %v970 = vunpack.c.l.b16 %v938
    %v971 = vunpack.c.l.b16 %v939
    %v972 = vunpack.c.l.b16 %v940
    %v973 = vpack.c.b16 %v958, %v957
    %v974 = vpack.c.b16 %v960, %v959
    %v975 = vpack.c.b16 %v962, %v961
    %v976 = vpack.c.b16 %v964, %v963
    %v977 = vpack.c.b16 %v966, %v965
    %v978 = vpack.c.b16 %v968, %v967
    %v979 = vpack.c.b16 %v970, %v969
    %v980 = vpack.c.b16 %v972, %v971
    %989 = vmatprep.subr.bf16.mxu0 0
    %990 = vmatpush1.bf16.msra.mxu0 %v973
    %991 = vmatprep.subr.bf16.mxu0 0
    %992 = vmatpush1.bf16.msra.mxu0 %v974
    %993 = vmatprep.subr.bf16.mxu0 0
    %994 = vmatpush1.bf16.msra.mxu0 %v975
    %995 = vmatprep.subr.bf16.mxu0 0
    %996 = vmatpush1.bf16.msra.mxu0 %v976
    %997 = vmatprep.subr.bf16.mxu0 0
    %998 = vmatpush1.bf16.msra.mxu0 %v977
    %999 = vmatprep.subr.bf16.mxu0 0
    %1000 = vmatpush1.bf16.msra.mxu0 %v978
    %1001 = vmatprep.subr.bf16.mxu0 0
    %1002 = vmatpush1.bf16.msra.mxu0 %v979
    %1003 = vmatprep.subr.bf16.mxu0 0
    %1004 = vmatpush1.bf16.msra.mxu0 %v980
    %1005 = vmatprep.subr.bf16.mxu0 0
    %1006 = vmatpush1.bf16.msra.mxu0 0
    %1007 = vmatprep.subr.bf16.mxu0 0
    %1008 = vmatpush1.bf16.msra.mxu0 0
    %1009 = vmatprep.subr.bf16.mxu0 0
    %1010 = vmatpush1.bf16.msra.mxu0 0
    %1011 = vmatprep.subr.bf16.mxu0 0
    %1012 = vmatpush1.bf16.msra.mxu0 0
    %1013 = vmatprep.subr.bf16.mxu0 0
    %1014 = vmatpush1.bf16.msra.mxu0 0
    %1015 = vmatprep.subr.bf16.mxu0 0
    %1016 = vmatpush1.bf16.msra.mxu0 0
    %1017 = vmatprep.subr.bf16.mxu0 0
    %1018 = vmatpush1.bf16.msra.mxu0 0
    %1019 = vmatprep.subr.bf16.mxu0 0
    %1020 = vmatpush1.bf16.msra.mxu0 0
    %1021 = vmatprep.mubr.bf16.mxu0 0
    %1022 = vmatmul.mubr.bf16.gmra.mrb[0].mxu0 %v901
    %v1023 = vpop.f32.mrb[0].mxu0
    %v1024 = vadd.f32 0.0, %v1023
    %v1025 = vpop.f32.mrb[0].mxu0
    %v1026 = vpop.f32.mrb[0].mxu0
    %v1027 = vadd.f32 0.0, %v1026
    %v1028 = vpop.f32.mrb[0].mxu0
    %1029 = vmatprep.mubr.bf16.mxu0 0
    %1030 = vmatmul.mubr.bf16.gmra.mrb[0].mxu0 %v902
    %v1031 = vpop.f32.mrb[0].mxu0
    %v1032 = vadd.f32 0.0, %v1031
    %v1033 = vpop.f32.mrb[0].mxu0
    %v1034 = vpop.f32.mrb[0].mxu0
    %v1035 = vadd.f32 0.0, %v1034
    %v1036 = vpop.f32.mrb[0].mxu0
    %1037 = vmatprep.mubr.bf16.mxu0 0
    %1038 = vmatmul.mubr.bf16.gmra.mrb[0].mxu0 %v903
    %v1039 = vpop.f32.mrb[0].mxu0
    %v1040 = vadd.f32 0.0, %v1039
    %v1041 = vpop.f32.mrb[0].mxu0
    %v1042 = vpop.f32.mrb[0].mxu0
    %v1043 = vadd.f32 0.0, %v1042
    %v1044 = vpop.f32.mrb[0].mxu0
    %1045 = vmatprep.mubr.bf16.mxu0 0
    %1046 = vmatmul.mubr.bf16.gmra.mrb[0].mxu0 %v904
    %v1047 = vpop.f32.mrb[0].mxu0
    %v1048 = vadd.f32 0.0, %v1047
    %v1049 = vpop.f32.mrb[0].mxu0
    %v1050 = vpop.f32.mrb[0].mxu0
    %v1051 = vadd.f32 0.0, %v1050
    %v1052 = vpop.f32.mrb[0].mxu0
    %1053 = vdwg.mxu0
    %v1054 = vadd.f32 %v917, %v1024
    %v1055 = vadd.f32 %v918, %v1027
    %v1056 = vadd.f32 %v919, %v1032
    %v1057 = vadd.f32 %v920, %v1035
    %v1058 = vadd.f32 %v921, %v1040
    %v1059 = vadd.f32 %v922, %v1043
    %v1060 = vadd.f32 %v923, %v1048
    %v1061 = vadd.f32 %v924, %v1051
    %s1062 = scalar_lea.vmem [#allocation10], 64
    %v1063 = vld [vmem:[%s1062] sm:$0xf]
    %v1064 = vld [vmem:[%s1062 + $0x4] sm:$0xf]
    %v1065 = vld [vmem:[%s1062 + $0x8] sm:$0xf]
    %v1066 = vld [vmem:[%s1062 + $0xc] sm:$0xf]
    %v1067 = vld [vmem:[%s1062 + $0x10] sm:$0xf]
    %v1068 = vld [vmem:[%s1062 + $0x14] sm:$0xf]
    %v1069 = vld [vmem:[%s1062 + $0x18] sm:$0xf]
    %v1070 = vld [vmem:[%s1062 + $0x1c] sm:$0xf]
    %v1071 = vld [vmem:[%s1062 + $0x20] sm:$0xf]
    %v1072 = vld [vmem:[%s1062 + $0x24] sm:$0xf]
    %v1073 = vld [vmem:[%s1062 + $0x28] sm:$0xf]
    %v1074 = vld [vmem:[%s1062 + $0x2c] sm:$0xf]
    %v1075 = vld [vmem:[%s1062 + $0x30] sm:$0xf]
    %v1076 = vld [vmem:[%s1062 + $0x34] sm:$0xf]
    %v1077 = vld [vmem:[%s1062 + $0x38] sm:$0xf]
    %v1078 = vld [vmem:[%s1062 + $0x3c] sm:$0xf]
    %v1095 = vunpack.c.l.b16 %v1063
    %v1096 = vunpack.c.l.b16 %v1064
    %v1097 = vunpack.c.l.b16 %v1065
    %v1098 = vunpack.c.l.b16 %v1066
    %v1099 = vunpack.c.l.b16 %v1067
    %v1100 = vunpack.c.l.b16 %v1068
    %v1101 = vunpack.c.l.b16 %v1069
    %v1102 = vunpack.c.l.b16 %v1070
    %v1103 = vunpack.c.l.b16 %v1071
    %v1104 = vunpack.c.l.b16 %v1072
    %v1105 = vunpack.c.l.b16 %v1073
    %v1106 = vunpack.c.l.b16 %v1074
    %v1107 = vunpack.c.l.b16 %v1075
    %v1108 = vunpack.c.l.b16 %v1076
    %v1109 = vunpack.c.l.b16 %v1077
    %v1110 = vunpack.c.l.b16 %v1078
    %v1111 = vpack.c.b16 %v1096, %v1095
    %v1112 = vpack.c.b16 %v1098, %v1097
    %v1113 = vpack.c.b16 %v1100, %v1099
    %v1114 = vpack.c.b16 %v1102, %v1101
    %v1115 = vpack.c.b16 %v1104, %v1103
    %v1116 = vpack.c.b16 %v1106, %v1105
    %v1117 = vpack.c.b16 %v1108, %v1107
    %v1118 = vpack.c.b16 %v1110, %v1109
    %1127 = vmatprep.subr.bf16.mxu0 0
    %1128 = vmatpush1.bf16.msra.mxu0 %v1111
    %1129 = vmatprep.subr.bf16.mxu0 0
    %1130 = vmatpush1.bf16.msra.mxu0 %v1112
    %1131 = vmatprep.subr.bf16.mxu0 0
    %1132 = vmatpush1.bf16.msra.mxu0 %v1113
    %1133 = vmatprep.subr.bf16.mxu0 0
    %1134 = vmatpush1.bf16.msra.mxu0 %v1114
    %1135 = vmatprep.subr.bf16.mxu0 0
    %1136 = vmatpush1.bf16.msra.mxu0 %v1115
    %1137 = vmatprep.subr.bf16.mxu0 0
    %1138 = vmatpush1.bf16.msra.mxu0 %v1116
    %1139 = vmatprep.subr.bf16.mxu0 0
    %1140 = vmatpush1.bf16.msra.mxu0 %v1117
    %1141 = vmatprep.subr.bf16.mxu0 0
    %1142 = vmatpush1.bf16.msra.mxu0 %v1118
    %1143 = vmatprep.subr.bf16.mxu0 0
    %1144 = vmatpush1.bf16.msra.mxu0 0
    %1145 = vmatprep.subr.bf16.mxu0 0
    %1146 = vmatpush1.bf16.msra.mxu0 0
    %1147 = vmatprep.subr.bf16.mxu0 0
    %1148 = vmatpush1.bf16.msra.mxu0 0
    %1149 = vmatprep.subr.bf16.mxu0 0
    %1150 = vmatpush1.bf16.msra.mxu0 0
    %1151 = vmatprep.subr.bf16.mxu0 0
    %1152 = vmatpush1.bf16.msra.mxu0 0
    %1153 = vmatprep.subr.bf16.mxu0 0
    %1154 = vmatpush1.bf16.msra.mxu0 0
    %1155 = vmatprep.subr.bf16.mxu0 0
    %1156 = vmatpush1.bf16.msra.mxu0 0
    %1157 = vmatprep.subr.bf16.mxu0 0
    %1158 = vmatpush1.bf16.msra.mxu0 0
    %1159 = vmatprep.mubr.bf16.mxu0 0
    %1160 = vmatmul.mubr.bf16.gmra.mrb[0].mxu0 %v905
    %v1161 = vpop.f32.mrb[0].mxu0
    %v1162 = vadd.f32 0.0, %v1161
    %v1163 = vpop.f32.mrb[0].mxu0
    %v1164 = vpop.f32.mrb[0].mxu0
    %v1165 = vadd.f32 0.0, %v1164
    %v1166 = vpop.f32.mrb[0].mxu0
    %1167 = vmatprep.mubr.bf16.mxu0 0
    %1168 = vmatmul.mubr.bf16.gmra.mrb[0].mxu0 %v906
    %v1169 = vpop.f32.mrb[0].mxu0
    %v1170 = vadd.f32 0.0, %v1169
    %v1171 = vpop.f32.mrb[0].mxu0
    %v1172 = vpop.f32.mrb[0].mxu0
    %v1173 = vadd.f32 0.0, %v1172
    %v1174 = vpop.f32.mrb[0].mxu0
    %1175 = vmatprep.mubr.bf16.mxu0 0
    %1176 = vmatmul.mubr.bf16.gmra.mrb[0].mxu0 %v907
    %v1177 = vpop.f32.mrb[0].mxu0
    %v1178 = vadd.f32 0.0, %v1177
    %v1179 = vpop.f32.mrb[0].mxu0
    %v1180 = vpop.f32.mrb[0].mxu0
    %v1181 = vadd.f32 0.0, %v1180
    %v1182 = vpop.f32.mrb[0].mxu0
    %1183 = vmatprep.mubr.bf16.mxu0 0
    %1184 = vmatmul.mubr.bf16.gmra.mrb[0].mxu0 %v908
    %v1185 = vpop.f32.mrb[0].mxu0
    %v1186 = vadd.f32 0.0, %v1185
    %v1187 = vpop.f32.mrb[0].mxu0
    %v1188 = vpop.f32.mrb[0].mxu0
    %v1189 = vadd.f32 0.0, %v1188
    %v1190 = vpop.f32.mrb[0].mxu0
    %1191 = vdwg.mxu0
    %v1192 = vadd.f32 %v1054, %v1162
    %v1193 = vadd.f32 %v1055, %v1165
    %v1194 = vadd.f32 %v1056, %v1170
    %v1195 = vadd.f32 %v1057, %v1173
    %v1196 = vadd.f32 %v1058, %v1178
    %v1197 = vadd.f32 %v1059, %v1181
    %v1198 = vadd.f32 %v1060, %v1186
    %v1199 = vadd.f32 %v1061, %v1189
    %s1200 = scalar_lea.vmem [#allocation10], 128
    %v1201 = vld [vmem:[%s1200] sm:$0xf]
    %v1202 = vld [vmem:[%s1200 + $0x4] sm:$0xf]
    %v1203 = vld [vmem:[%s1200 + $0x8] sm:$0xf]
    %v1204 = vld [vmem:[%s1200 + $0xc] sm:$0xf]
    %v1205 = vld [vmem:[%s1200 + $0x10] sm:$0xf]
    %v1206 = vld [vmem:[%s1200 + $0x14] sm:$0xf]
    %v1207 = vld [vmem:[%s1200 + $0x18] sm:$0xf]
    %v1208 = vld [vmem:[%s1200 + $0x1c] sm:$0xf]
    %v1209 = vld [vmem:[%s1200 + $0x20] sm:$0xf]
    %v1210 = vld [vmem:[%s1200 + $0x24] sm:$0xf]
    %v1211 = vld [vmem:[%s1200 + $0x28] sm:$0xf]
    %v1212 = vld [vmem:[%s1200 + $0x2c] sm:$0xf]
    %v1213 = vld [vmem:[%s1200 + $0x30] sm:$0xf]
    %v1214 = vld [vmem:[%s1200 + $0x34] sm:$0xf]
    %v1215 = vld [vmem:[%s1200 + $0x38] sm:$0xf]
    %v1216 = vld [vmem:[%s1200 + $0x3c] sm:$0xf]
    %v1233 = vunpack.c.l.b16 %v1201
    %v1234 = vunpack.c.l.b16 %v1202
    %v1235 = vunpack.c.l.b16 %v1203
    %v1236 = vunpack.c.l.b16 %v1204
    %v1237 = vunpack.c.l.b16 %v1205
    %v1238 = vunpack.c.l.b16 %v1206
    %v1239 = vunpack.c.l.b16 %v1207
    %v1240 = vunpack.c.l.b16 %v1208
    %v1241 = vunpack.c.l.b16 %v1209
    %v1242 = vunpack.c.l.b16 %v1210
    %v1243 = vunpack.c.l.b16 %v1211
    %v1244 = vunpack.c.l.b16 %v1212
    %v1245 = vunpack.c.l.b16 %v1213
    %v1246 = vunpack.c.l.b16 %v1214
    %v1247 = vunpack.c.l.b16 %v1215
    %v1248 = vunpack.c.l.b16 %v1216
    %v1249 = vpack.c.b16 %v1234, %v1233
    %v1250 = vpack.c.b16 %v1236, %v1235
    %v1251 = vpack.c.b16 %v1238, %v1237
    %v1252 = vpack.c.b16 %v1240, %v1239
    %v1253 = vpack.c.b16 %v1242, %v1241
    %v1254 = vpack.c.b16 %v1244, %v1243
    %v1255 = vpack.c.b16 %v1246, %v1245
    %v1256 = vpack.c.b16 %v1248, %v1247
    %1265 = vmatprep.subr.bf16.mxu0 0
    %1266 = vmatpush1.bf16.msra.mxu0 %v1249
    %1267 = vmatprep.subr.bf16.mxu0 0
    %1268 = vmatpush1.bf16.msra.mxu0 %v1250
    %1269 = vmatprep.subr.bf16.mxu0 0
    %1270 = vmatpush1.bf16.msra.mxu0 %v1251
    %1271 = vmatprep.subr.bf16.mxu0 0
    %1272 = vmatpush1.bf16.msra.mxu0 %v1252
    %1273 = vmatprep.subr.bf16.mxu0 0
    %1274 = vmatpush1.bf16.msra.mxu0 %v1253
    %1275 = vmatprep.subr.bf16.mxu0 0
    %1276 = vmatpush1.bf16.msra.mxu0 %v1254
    %1277 = vmatprep.subr.bf16.mxu0 0
    %1278 = vmatpush1.bf16.msra.mxu0 %v1255
    %1279 = vmatprep.subr.bf16.mxu0 0
    %1280 = vmatpush1.bf16.msra.mxu0 %v1256
    %1281 = vmatprep.subr.bf16.mxu0 0
    %1282 = vmatpush1.bf16.msra.mxu0 0
    %1283 = vmatprep.subr.bf16.mxu0 0
    %1284 = vmatpush1.bf16.msra.mxu0 0
    %1285 = vmatprep.subr.bf16.mxu0 0
    %1286 = vmatpush1.bf16.msra.mxu0 0
    %1287 = vmatprep.subr.bf16.mxu0 0
    %1288 = vmatpush1.bf16.msra.mxu0 0
    %1289 = vmatprep.subr.bf16.mxu0 0
    %1290 = vmatpush1.bf16.msra.mxu0 0
    %1291 = vmatprep.subr.bf16.mxu0 0
    %1292 = vmatpush1.bf16.msra.mxu0 0
    %1293 = vmatprep.subr.bf16.mxu0 0
    %1294 = vmatpush1.bf16.msra.mxu0 0
    %1295 = vmatprep.subr.bf16.mxu0 0
    %1296 = vmatpush1.bf16.msra.mxu0 0
    %1297 = vmatprep.mubr.bf16.mxu0 0
    %1298 = vmatmul.mubr.bf16.gmra.mrb[0].mxu0 %v909
    %v1299 = vpop.f32.mrb[0].mxu0
    %v1300 = vadd.f32 0.0, %v1299
    %v1301 = vpop.f32.mrb[0].mxu0
    %v1302 = vpop.f32.mrb[0].mxu0
    %v1303 = vadd.f32 0.0, %v1302
    %v1304 = vpop.f32.mrb[0].mxu0
    %1305 = vmatprep.mubr.bf16.mxu0 0
    %1306 = vmatmul.mubr.bf16.gmra.mrb[0].mxu0 %v910
    %v1307 = vpop.f32.mrb[0].mxu0
    %v1308 = vadd.f32 0.0, %v1307
    %v1309 = vpop.f32.mrb[0].mxu0
    %v1310 = vpop.f32.mrb[0].mxu0
    %v1311 = vadd.f32 0.0, %v1310
    %v1312 = vpop.f32.mrb[0].mxu0
    %1313 = vmatprep.mubr.bf16.mxu0 0
    %1314 = vmatmul.mubr.bf16.gmra.mrb[0].mxu0 %v911
    %v1315 = vpop.f32.mrb[0].mxu0
    %v1316 = vadd.f32 0.0, %v1315
    %v1317 = vpop.f32.mrb[0].mxu0
    %v1318 = vpop.f32.mrb[0].mxu0
    %v1319 = vadd.f32 0.0, %v1318
    %v1320 = vpop.f32.mrb[0].mxu0
    %1321 = vmatprep.mubr.bf16.mxu0 0
    %1322 = vmatmul.mubr.bf16.gmra.mrb[0].mxu0 %v912
    %v1323 = vpop.f32.mrb[0].mxu0
    %v1324 = vadd.f32 0.0, %v1323
    %v1325 = vpop.f32.mrb[0].mxu0
    %v1326 = vpop.f32.mrb[0].mxu0
    %v1327 = vadd.f32 0.0, %v1326
    %v1328 = vpop.f32.mrb[0].mxu0
    %1329 = vdwg.mxu0
    %v1330 = vadd.f32 %v1192, %v1300
    %v1331 = vadd.f32 %v1193, %v1303
    %v1332 = vadd.f32 %v1194, %v1308
    %v1333 = vadd.f32 %v1195, %v1311
    %v1334 = vadd.f32 %v1196, %v1316
    %v1335 = vadd.f32 %v1197, %v1319
    %v1336 = vadd.f32 %v1198, %v1324
    %v1337 = vadd.f32 %v1199, %v1327
    %s1338 = scalar_lea.vmem [#allocation10], 192
    %v1339 = vld [vmem:[%s1338] sm:$0xf]
    %v1340 = vld [vmem:[%s1338 + $0x4] sm:$0xf]
    %v1341 = vld [vmem:[%s1338 + $0x8] sm:$0xf]
    %v1342 = vld [vmem:[%s1338 + $0xc] sm:$0xf]
    %v1343 = vld [vmem:[%s1338 + $0x10] sm:$0xf]
    %v1344 = vld [vmem:[%s1338 + $0x14] sm:$0xf]
    %v1345 = vld [vmem:[%s1338 + $0x18] sm:$0xf]
    %v1346 = vld [vmem:[%s1338 + $0x1c] sm:$0xf]
    %v1347 = vld [vmem:[%s1338 + $0x20] sm:$0xf]
    %v1348 = vld [vmem:[%s1338 + $0x24] sm:$0xf]
    %v1349 = vld [vmem:[%s1338 + $0x28] sm:$0xf]
    %v1350 = vld [vmem:[%s1338 + $0x2c] sm:$0xf]
    %v1351 = vld [vmem:[%s1338 + $0x30] sm:$0xf]
    %v1352 = vld [vmem:[%s1338 + $0x34] sm:$0xf]
    %v1353 = vld [vmem:[%s1338 + $0x38] sm:$0xf]
    %v1354 = vld [vmem:[%s1338 + $0x3c] sm:$0xf]
    %v1371 = vunpack.c.l.b16 %v1339
    %v1372 = vunpack.c.l.b16 %v1340
    %v1373 = vunpack.c.l.b16 %v1341
    %v1374 = vunpack.c.l.b16 %v1342
    %v1375 = vunpack.c.l.b16 %v1343
    %v1376 = vunpack.c.l.b16 %v1344
    %v1377 = vunpack.c.l.b16 %v1345
    %v1378 = vunpack.c.l.b16 %v1346
    %v1379 = vunpack.c.l.b16 %v1347
    %v1380 = vunpack.c.l.b16 %v1348
    %v1381 = vunpack.c.l.b16 %v1349
    %v1382 = vunpack.c.l.b16 %v1350
    %v1383 = vunpack.c.l.b16 %v1351
    %v1384 = vunpack.c.l.b16 %v1352
    %v1385 = vunpack.c.l.b16 %v1353
    %v1386 = vunpack.c.l.b16 %v1354
    %v1387 = vpack.c.b16 %v1372, %v1371
    %v1388 = vpack.c.b16 %v1374, %v1373
    %v1389 = vpack.c.b16 %v1376, %v1375
    %v1390 = vpack.c.b16 %v1378, %v1377
    %v1391 = vpack.c.b16 %v1380, %v1379
    %v1392 = vpack.c.b16 %v1382, %v1381
    %v1393 = vpack.c.b16 %v1384, %v1383
    %v1394 = vpack.c.b16 %v1386, %v1385
    %1403 = vmatprep.subr.bf16.mxu0 0
    %1404 = vmatpush1.bf16.msra.mxu0 %v1387
    %1405 = vmatprep.subr.bf16.mxu0 0
    %1406 = vmatpush1.bf16.msra.mxu0 %v1388
    %1407 = vmatprep.subr.bf16.mxu0 0
    %1408 = vmatpush1.bf16.msra.mxu0 %v1389
    %1409 = vmatprep.subr.bf16.mxu0 0
    %1410 = vmatpush1.bf16.msra.mxu0 %v1390
    %1411 = vmatprep.subr.bf16.mxu0 0
    %1412 = vmatpush1.bf16.msra.mxu0 %v1391
    %1413 = vmatprep.subr.bf16.mxu0 0
    %1414 = vmatpush1.bf16.msra.mxu0 %v1392
    %1415 = vmatprep.subr.bf16.mxu0 0
    %1416 = vmatpush1.bf16.msra.mxu0 %v1393
    %1417 = vmatprep.subr.bf16.mxu0 0
    %1418 = vmatpush1.bf16.msra.mxu0 %v1394
    %1419 = vmatprep.subr.bf16.mxu0 0
    %1420 = vmatpush1.bf16.msra.mxu0 0
    %1421 = vmatprep.subr.bf16.mxu0 0
    %1422 = vmatpush1.bf16.msra.mxu0 0
    %1423 = vmatprep.subr.bf16.mxu0 0
    %1424 = vmatpush1.bf16.msra.mxu0 0
    %1425 = vmatprep.subr.bf16.mxu0 0
    %1426 = vmatpush1.bf16.msra.mxu0 0
    %1427 = vmatprep.subr.bf16.mxu0 0
    %1428 = vmatpush1.bf16.msra.mxu0 0
    %1429 = vmatprep.subr.bf16.mxu0 0
    %1430 = vmatpush1.bf16.msra.mxu0 0
    %1431 = vmatprep.subr.bf16.mxu0 0
    %1432 = vmatpush1.bf16.msra.mxu0 0
    %1433 = vmatprep.subr.bf16.mxu0 0
    %1434 = vmatpush1.bf16.msra.mxu0 0
    %1435 = vmatprep.mubr.bf16.mxu0 0
    %1436 = vmatmul.mubr.bf16.gmra.mrb[0].mxu0 %v913
    %v1437 = vpop.f32.mrb[0].mxu0
    %v1438 = vadd.f32 0.0, %v1437
    %v1439 = vpop.f32.mrb[0].mxu0
    %v1440 = vpop.f32.mrb[0].mxu0
    %v1441 = vadd.f32 0.0, %v1440
    %v1442 = vpop.f32.mrb[0].mxu0
    %1443 = vmatprep.mubr.bf16.mxu0 0
    %1444 = vmatmul.mubr.bf16.gmra.mrb[0].mxu0 %v914
    %v1445 = vpop.f32.mrb[0].mxu0
    %v1446 = vadd.f32 0.0, %v1445
    %v1447 = vpop.f32.mrb[0].mxu0
    %v1448 = vpop.f32.mrb[0].mxu0
    %v1449 = vadd.f32 0.0, %v1448
    %v1450 = vpop.f32.mrb[0].mxu0
    %1451 = vmatprep.mubr.bf16.mxu0 0
    %1452 = vmatmul.mubr.bf16.gmra.mrb[0].mxu0 %v915
    %v1453 = vpop.f32.mrb[0].mxu0
    %v1454 = vadd.f32 0.0, %v1453
    %v1455 = vpop.f32.mrb[0].mxu0
    %v1456 = vpop.f32.mrb[0].mxu0
    %v1457 = vadd.f32 0.0, %v1456
    %v1458 = vpop.f32.mrb[0].mxu0
    %1459 = vmatprep.mubr.bf16.mxu0 0
    %1460 = vmatmul.mubr.bf16.gmra.mrb[0].mxu0 %v916
    %v1461 = vpop.f32.mrb[0].mxu0
    %v1462 = vadd.f32 0.0, %v1461
    %v1463 = vpop.f32.mrb[0].mxu0
    %v1464 = vpop.f32.mrb[0].mxu0
    %v1465 = vadd.f32 0.0, %v1464
    %v1466 = vpop.f32.mrb[0].mxu0
    %1467 = vdwg.mxu0
    %v1468 = vadd.f32 %v1330, %v1438
    %v1469 = vadd.f32 %v1331, %v1441
    %v1470 = vadd.f32 %v1332, %v1446
    %v1471 = vadd.f32 %v1333, %v1449
    %v1472 = vadd.f32 %v1334, %v1454
    %v1473 = vadd.f32 %v1335, %v1457
    %v1474 = vadd.f32 %v1336, %v1462
    %v1475 = vadd.f32 %v1337, %v1465
    %v1476 = vld [vmem:[#allocation7] sm:$0xff]
    %v1477 = vld [vmem:[#allocation7 + $0x8] sm:$0xff]
    %v1478 = vld [vmem:[#allocation7 + $0x10] sm:$0xff]
    %v1479 = vld [vmem:[#allocation7 + $0x18] sm:$0xff]
    %v1480 = vld [vmem:[#allocation7 + $0x20] sm:$0xff]
    %v1481 = vld [vmem:[#allocation7 + $0x28] sm:$0xff]
    %v1482 = vld [vmem:[#allocation7 + $0x30] sm:$0xff]
    %v1483 = vld [vmem:[#allocation7 + $0x38] sm:$0xff]
    %1485 = vset.pattern.permute.xlu0 0
    %1486 = vperm.xlu0 %1485, %v1476
    %v1487 = vpop.permute.xlu0 %1486
    %1490 = vset.pattern.permute.xlu0 0
    %1491 = vperm.xlu0 %1490, %v1477
    %v1492 = vpop.permute.xlu0 %1491
    %1495 = vset.pattern.permute.xlu0 0
    %1496 = vperm.xlu0 %1495, %v1478
    %v1497 = vpop.permute.xlu0 %1496
    %1500 = vset.pattern.permute.xlu0 0
    %1501 = vperm.xlu0 %1500, %v1479
    %v1502 = vpop.permute.xlu0 %1501
    %1505 = vset.pattern.permute.xlu0 0
    %1506 = vperm.xlu0 %1505, %v1480
    %v1507 = vpop.permute.xlu0 %1506
    %1510 = vset.pattern.permute.xlu0 0
    %1511 = vperm.xlu0 %1510, %v1481
    %v1512 = vpop.permute.xlu0 %1511
    %1515 = vset.pattern.permute.xlu0 0
    %1516 = vperm.xlu0 %1515, %v1482
    %v1517 = vpop.permute.xlu0 %1516
    %1520 = vset.pattern.permute.xlu0 0
    %1521 = vperm.xlu0 %1520, %v1483
    %v1522 = vpop.permute.xlu0 %1521
    %v1524 = vmul.f32 %v1468, %v1487
    %v1525 = vmul.f32 %v1469, %v1492
    %v1526 = vmul.f32 %v1470, %v1497
    %v1527 = vmul.f32 %v1471, %v1502
    %v1528 = vmul.f32 %v1472, %v1507
    %v1529 = vmul.f32 %v1473, %v1512
    %v1530 = vmul.f32 %v1474, %v1517
    %v1531 = vmul.f32 %v1475, %v1522
    %v1532 = vpack.c.bf16 %v1525, %v1524
    %v1533 = vpack.c.bf16 %v1527, %v1526
    %v1534 = vpack.c.bf16 %v1529, %v1528
    %v1535 = vpack.c.bf16 %v1531, %v1530
    %v1536 = vld [vmem:[#allocation11] sm:$0xff]
    %v1537 = vld [vmem:[#allocation11 + $0x8] sm:$0xf]
    %v1538 = vld [vmem:[#allocation11 + $0xc] sm:$0xff]
    %v1539 = vld [vmem:[#allocation11 + $0x14] sm:$0xf]
    %v1540 = vld [vmem:[#allocation11 + $0x18] sm:$0xff]
    %v1541 = vld [vmem:[#allocation11 + $0x20] sm:$0xf]
    %v1542 = vld [vmem:[#allocation11 + $0x24] sm:$0xff]
    %v1543 = vld [vmem:[#allocation11 + $0x2c] sm:$0xf]
    %v1544 = vld [vmem:[#allocation11 + $0x30] sm:$0xff]
    %v1545 = vld [vmem:[#allocation11 + $0x38] sm:$0xf]
    %v1546 = vld [vmem:[#allocation11 + $0x3c] sm:$0xff]
    %v1547 = vld [vmem:[#allocation11 + $0x44] sm:$0xf]
    %v1548 = vld [vmem:[#allocation11 + $0x48] sm:$0xff]
    %v1549 = vld [vmem:[#allocation11 + $0x50] sm:$0xf]
    %v1550 = vld [vmem:[#allocation11 + $0x54] sm:$0xff]
    %v1551 = vld [vmem:[#allocation11 + $0x5c] sm:$0xf]
    %v1552 = vld [vmem:[#allocation11 + $0x60] sm:$0xff]
    %v1553 = vld [vmem:[#allocation11 + $0x68] sm:$0xf]
    %v1554 = vld [vmem:[#allocation11 + $0x6c] sm:$0xff]
    %v1555 = vld [vmem:[#allocation11 + $0x74] sm:$0xf]
    %v1556 = vld [vmem:[#allocation11 + $0x78] sm:$0xff]
    %v1557 = vld [vmem:[#allocation11 + $0x80] sm:$0xf]
    %v1558 = vld [vmem:[#allocation11 + $0x84] sm:$0xff]
    %v1559 = vld [vmem:[#allocation11 + $0x8c] sm:$0xf]
    %v1560 = vld [vmem:[#allocation11 + $0x90] sm:$0xff]
    %v1561 = vld [vmem:[#allocation11 + $0x98] sm:$0xf]
    %v1562 = vld [vmem:[#allocation11 + $0x9c] sm:$0xff]
    %v1563 = vld [vmem:[#allocation11 + $0xa4] sm:$0xf]
    %v1564 = vld [vmem:[#allocation11 + $0xa8] sm:$0xff]
    %v1565 = vld [vmem:[#allocation11 + $0xb0] sm:$0xf]
    %v1566 = vld [vmem:[#allocation11 + $0xb4] sm:$0xff]
    %v1567 = vld [vmem:[#allocation11 + $0xbc] sm:$0xf]
    %v1568 = vld [vmem:[#allocation13] sm:$0x7]
    %v1570 = vlaneseq
    %v1571 = vshrl.u32 %v1570, 7
    %v1572 = vsub.s32 0, %v1571
    %v1573 = vrot.slane %v1568, %v1572
    %v1574 = vlaneseq
    %v1575 = vshrl.u32 %v1574, 7
    %v1576 = vsub.s32 1, %v1575
    %v1577 = vrot.slane %v1568, %v1576
    %v1578 = vlaneseq
    %v1579 = vshrl.u32 %v1578, 7
    %v1580 = vsub.s32 2, %v1579
    %v1581 = vrot.slane %v1568, %v1580
    %v1617 = vunpack.c.l.b16 %v1536
    %v1618 = vunpack.c.h.b16 %v1536
    %v1619 = vunpack.c.l.b16 %v1537
    %v1620 = vunpack.c.l.b16 %v1538
    %v1621 = vunpack.c.h.b16 %v1538
    %v1622 = vunpack.c.l.b16 %v1539
    %v1623 = vunpack.c.l.b16 %v1540
    %v1624 = vunpack.c.h.b16 %v1540
    %v1625 = vunpack.c.l.b16 %v1541
    %v1626 = vunpack.c.l.b16 %v1542
    %v1627 = vunpack.c.h.b16 %v1542
    %v1628 = vunpack.c.l.b16 %v1543
    %v1629 = vunpack.c.l.b16 %v1544
    %v1630 = vunpack.c.h.b16 %v1544
    %v1631 = vunpack.c.l.b16 %v1545
    %v1632 = vunpack.c.l.b16 %v1546
    %v1633 = vunpack.c.h.b16 %v1546
    %v1634 = vunpack.c.l.b16 %v1547
    %v1635 = vunpack.c.l.b16 %v1548
    %v1636 = vunpack.c.h.b16 %v1548
    %v1637 = vunpack.c.l.b16 %v1549
    %v1638 = vunpack.c.l.b16 %v1550
    %v1639 = vunpack.c.h.b16 %v1550
    %v1640 = vunpack.c.l.b16 %v1551
    %v1641 = vunpack.c.l.b16 %v1552
    %v1642 = vunpack.c.h.b16 %v1552
    %v1643 = vunpack.c.l.b16 %v1553
    %v1644 = vunpack.c.l.b16 %v1554
    %v1645 = vunpack.c.h.b16 %v1554
    %v1646 = vunpack.c.l.b16 %v1555
    %v1647 = vunpack.c.l.b16 %v1556
    %v1648 = vunpack.c.h.b16 %v1556
    %v1649 = vunpack.c.l.b16 %v1557
    %v1650 = vunpack.c.l.b16 %v1558
    %v1651 = vunpack.c.h.b16 %v1558
    %v1652 = vunpack.c.l.b16 %v1559
    %v1653 = vunpack.c.l.b16 %v1560
    %v1654 = vunpack.c.h.b16 %v1560
    %v1655 = vunpack.c.l.b16 %v1561
    %v1656 = vunpack.c.l.b16 %v1562
    %v1657 = vunpack.c.h.b16 %v1562
    %v1658 = vunpack.c.l.b16 %v1563
    %v1659 = vunpack.c.l.b16 %v1564
    %v1660 = vunpack.c.h.b16 %v1564
    %v1661 = vunpack.c.l.b16 %v1565
    %v1662 = vunpack.c.l.b16 %v1566
    %v1663 = vunpack.c.h.b16 %v1566
    %v1664 = vunpack.c.l.b16 %v1567
    %v1665 = vpack.c.b16 %v1620, %v1617
    %v1666 = vpack.c.b16 %v1621, %v1618
    %v1667 = vpack.c.b16 %v1622, %v1619
    %v1668 = vpack.c.b16 %v1626, %v1623
    %v1669 = vpack.c.b16 %v1627, %v1624
    %v1670 = vpack.c.b16 %v1628, %v1625
    %v1671 = vpack.c.b16 %v1632, %v1629
    %v1672 = vpack.c.b16 %v1633, %v1630
    %v1673 = vpack.c.b16 %v1634, %v1631
    %v1674 = vpack.c.b16 %v1638, %v1635
    %v1675 = vpack.c.b16 %v1639, %v1636
    %v1676 = vpack.c.b16 %v1640, %v1637
    %v1677 = vpack.c.b16 %v1644, %v1641
    %v1678 = vpack.c.b16 %v1645, %v1642
    %v1679 = vpack.c.b16 %v1646, %v1643
    %v1680 = vpack.c.b16 %v1650, %v1647
    %v1681 = vpack.c.b16 %v1651, %v1648
    %v1682 = vpack.c.b16 %v1652, %v1649
    %v1683 = vpack.c.b16 %v1656, %v1653
    %v1684 = vpack.c.b16 %v1657, %v1654
    %v1685 = vpack.c.b16 %v1658, %v1655
    %v1686 = vpack.c.b16 %v1662, %v1659
    %v1687 = vpack.c.b16 %v1663, %v1660
    %v1688 = vpack.c.b16 %v1664, %v1661
    %1713 = vmatprep.subr.bf16.mxu0 %v1666
    %1714 = vmatpush1.bf16.msra.mxu0 %v1665
    %1715 = vmatprep.subr.bf16.mxu0 %v1669
    %1716 = vmatpush1.bf16.msra.mxu0 %v1668
    %1717 = vmatprep.subr.bf16.mxu0 %v1672
    %1718 = vmatpush1.bf16.msra.mxu0 %v1671
    %1719 = vmatprep.subr.bf16.mxu0 %v1675
    %1720 = vmatpush1.bf16.msra.mxu0 %v1674
    %1721 = vmatprep.subr.bf16.mxu0 %v1678
    %1722 = vmatpush1.bf16.msra.mxu0 %v1677
    %1723 = vmatprep.subr.bf16.mxu0 %v1681
    %1724 = vmatpush1.bf16.msra.mxu0 %v1680
    %1725 = vmatprep.subr.bf16.mxu0 %v1684
    %1726 = vmatpush1.bf16.msra.mxu0 %v1683
    %1727 = vmatprep.subr.bf16.mxu0 %v1687
    %1728 = vmatpush1.bf16.msra.mxu0 %v1686
    %1729 = vmatprep.subr.bf16.mxu0 0
    %1730 = vmatpush1.bf16.msra.mxu0 0
    %1731 = vmatprep.subr.bf16.mxu0 0
    %1732 = vmatpush1.bf16.msra.mxu0 0
    %1733 = vmatprep.subr.bf16.mxu0 0
    %1734 = vmatpush1.bf16.msra.mxu0 0
    %1735 = vmatprep.subr.bf16.mxu0 0
    %1736 = vmatpush1.bf16.msra.mxu0 0
    %1737 = vmatprep.subr.bf16.mxu0 0
    %1738 = vmatpush1.bf16.msra.mxu0 0
    %1739 = vmatprep.subr.bf16.mxu0 0
    %1740 = vmatpush1.bf16.msra.mxu0 0
    %1741 = vmatprep.subr.bf16.mxu0 0
    %1742 = vmatpush1.bf16.msra.mxu0 0
    %1743 = vmatprep.subr.bf16.mxu0 0
    %1744 = vmatpush1.bf16.msra.mxu0 0
    %1745 = vmatprep.mubr.bf16.mxu0 0
    %1746 = vmatmul.mubr.bf16.gmra.mrb[0].mxu0 %v1532
    %v1747 = vpop.f32.mrb[0].mxu0
    %v1748 = vadd.f32 %v1573, %v1747
    %v1749 = vpop.f32.mrb[0].mxu0
    %v1750 = vadd.f32 %v1577, %v1749
    %v1751 = vpop.f32.mrb[0].mxu0
    %v1752 = vadd.f32 %v1573, %v1751
    %v1753 = vpop.f32.mrb[0].mxu0
    %v1754 = vadd.f32 %v1577, %v1753
    %1755 = vmatprep.mubr.bf16.mxu0 0
    %1756 = vmatmul.mubr.bf16.gmra.mrb[0].mxu0 %v1533
    %v1757 = vpop.f32.mrb[0].mxu0
    %v1758 = vadd.f32 %v1573, %v1757
    %v1759 = vpop.f32.mrb[0].mxu0
    %v1760 = vadd.f32 %v1577, %v1759
    %v1761 = vpop.f32.mrb[0].mxu0
    %v1762 = vadd.f32 %v1573, %v1761
    %v1763 = vpop.f32.mrb[0].mxu0
    %v1764 = vadd.f32 %v1577, %v1763
    %1765 = vmatprep.mubr.bf16.mxu0 0
    %1766 = vmatmul.mubr.bf16.gmra.mrb[0].mxu0 %v1534
    %v1767 = vpop.f32.mrb[0].mxu0
    %v1768 = vadd.f32 %v1573, %v1767
    %v1769 = vpop.f32.mrb[0].mxu0
    %v1770 = vadd.f32 %v1577, %v1769
    %v1771 = vpop.f32.mrb[0].mxu0
    %v1772 = vadd.f32 %v1573, %v1771
    %v1773 = vpop.f32.mrb[0].mxu0
    %v1774 = vadd.f32 %v1577, %v1773
    %1775 = vmatprep.mubr.bf16.mxu0 0
    %1776 = vmatmul.mubr.bf16.gmra.mrb[0].mxu0 %v1535
    %v1777 = vpop.f32.mrb[0].mxu0
    %v1778 = vadd.f32 %v1573, %v1777
    %v1779 = vpop.f32.mrb[0].mxu0
    %v1780 = vadd.f32 %v1577, %v1779
    %v1781 = vpop.f32.mrb[0].mxu0
    %v1782 = vadd.f32 %v1573, %v1781
    %v1783 = vpop.f32.mrb[0].mxu0
    %v1784 = vadd.f32 %v1577, %v1783
    %1785 = vdwg.mxu0
    %1786 = vmatprep.subr.bf16.mxu0 0
    %1787 = vmatpush1.bf16.msra.mxu0 %v1667
    %1788 = vmatprep.subr.bf16.mxu0 0
    %1789 = vmatpush1.bf16.msra.mxu0 %v1670
    %1790 = vmatprep.subr.bf16.mxu0 0
    %1791 = vmatpush1.bf16.msra.mxu0 %v1673
    %1792 = vmatprep.subr.bf16.mxu0 0
    %1793 = vmatpush1.bf16.msra.mxu0 %v1676
    %1794 = vmatprep.subr.bf16.mxu0 0
    %1795 = vmatpush1.bf16.msra.mxu0 %v1679
    %1796 = vmatprep.subr.bf16.mxu0 0
    %1797 = vmatpush1.bf16.msra.mxu0 %v1682
    %1798 = vmatprep.subr.bf16.mxu0 0
    %1799 = vmatpush1.bf16.msra.mxu0 %v1685
    %1800 = vmatprep.subr.bf16.mxu0 0
    %1801 = vmatpush1.bf16.msra.mxu0 %v1688
    %1802 = vmatprep.subr.bf16.mxu0 0
    %1803 = vmatpush1.bf16.msra.mxu0 0
    %1804 = vmatprep.subr.bf16.mxu0 0
    %1805 = vmatpush1.bf16.msra.mxu0 0
    %1806 = vmatprep.subr.bf16.mxu0 0
    %1807 = vmatpush1.bf16.msra.mxu0 0
    %1808 = vmatprep.subr.bf16.mxu0 0
    %1809 = vmatpush1.bf16.msra.mxu0 0
    %1810 = vmatprep.subr.bf16.mxu0 0
    %1811 = vmatpush1.bf16.msra.mxu0 0
    %1812 = vmatprep.subr.bf16.mxu0 0
    %1813 = vmatpush1.bf16.msra.mxu0 0
    %1814 = vmatprep.subr.bf16.mxu0 0
    %1815 = vmatpush1.bf16.msra.mxu0 0
    %1816 = vmatprep.subr.bf16.mxu0 0
    %1817 = vmatpush1.bf16.msra.mxu0 0
    %1818 = vmatprep.mubr.bf16.mxu0 0
    %1819 = vmatmul.mubr.bf16.gmra.mrb[0].mxu0 %v1532
    %v1820 = vpop.f32.mrb[0].mxu0
    %v1821 = vadd.f32 %v1581, %v1820
    %v1822 = vpop.f32.mrb[0].mxu0
    %v1823 = vpop.f32.mrb[0].mxu0
    %v1824 = vadd.f32 %v1581, %v1823
    %v1825 = vpop.f32.mrb[0].mxu0
    %1826 = vmatprep.mubr.bf16.mxu0 0
    %1827 = vmatmul.mubr.bf16.gmra.mrb[0].mxu0 %v1533
    %v1828 = vpop.f32.mrb[0].mxu0
    %v1829 = vadd.f32 %v1581, %v1828
    %v1830 = vpop.f32.mrb[0].mxu0
    %v1831 = vpop.f32.mrb[0].mxu0
    %v1832 = vadd.f32 %v1581, %v1831
    %v1833 = vpop.f32.mrb[0].mxu0
    %1834 = vmatprep.mubr.bf16.mxu0 0
    %1835 = vmatmul.mubr.bf16.gmra.mrb[0].mxu0 %v1534
    %v1836 = vpop.f32.mrb[0].mxu0
    %v1837 = vadd.f32 %v1581, %v1836
    %v1838 = vpop.f32.mrb[0].mxu0
    %v1839 = vpop.f32.mrb[0].mxu0
    %v1840 = vadd.f32 %v1581, %v1839
    %v1841 = vpop.f32.mrb[0].mxu0
    %1842 = vmatprep.mubr.bf16.mxu0 0
    %1843 = vmatmul.mubr.bf16.gmra.mrb[0].mxu0 %v1535
    %v1844 = vpop.f32.mrb[0].mxu0
    %v1845 = vadd.f32 %v1581, %v1844
    %v1846 = vpop.f32.mrb[0].mxu0
    %v1847 = vpop.f32.mrb[0].mxu0
    %v1848 = vadd.f32 %v1581, %v1847
    %v1849 = vpop.f32.mrb[0].mxu0
    %1850 = vdwg.mxu0
    %v1851 = vadd.f32 %v1748, %v476
    %v1852 = vadd.f32 %v1752, %v480
    %v1853 = vadd.f32 %v1758, %v486
    %v1854 = vadd.f32 %v1762, %v490
    %v1855 = vadd.f32 %v1768, %v496
    %v1856 = vadd.f32 %v1772, %v500
    %v1857 = vadd.f32 %v1778, %v506
    %v1858 = vadd.f32 %v1782, %v510
    %v1859 = vxor.u32 %v1851, 2147483648
    %v1860 = vxor.u32 %v1852, 2147483648
    %v1861 = vxor.u32 %v1853, 2147483648
    %v1862 = vxor.u32 %v1854, 2147483648
    %v1863 = vxor.u32 %v1855, 2147483648
    %v1864 = vxor.u32 %v1856, 2147483648
    %v1865 = vxor.u32 %v1857, 2147483648
    %v1866 = vxor.u32 %v1858, 2147483648
    %v1867 = vmul.f32 %v1859, 1.442695
    %v1868 = vpow.pop %v1867
    %v1869 = vmul.f32 %v1860, 1.442695
    %v1870 = vpow.pop %v1869
    %v1871 = vmul.f32 %v1861, 1.442695
    %v1872 = vpow.pop %v1871
    %v1873 = vmul.f32 %v1862, 1.442695
    %v1874 = vpow.pop %v1873
    %v1875 = vmul.f32 %v1863, 1.442695
    %v1876 = vpow.pop %v1875
    %v1877 = vmul.f32 %v1864, 1.442695
    %v1878 = vpow.pop %v1877
    %v1879 = vmul.f32 %v1865, 1.442695
    %v1880 = vpow.pop %v1879
    %v1881 = vmul.f32 %v1866, 1.442695
    %v1882 = vpow.pop %v1881
    %v1883 = vadd.f32 %v1868, 1.0
    %v1884 = vadd.f32 %v1870, 1.0
    %v1885 = vadd.f32 %v1872, 1.0
    %v1886 = vadd.f32 %v1874, 1.0
    %v1887 = vadd.f32 %v1876, 1.0
    %v1888 = vadd.f32 %v1878, 1.0
    %v1889 = vadd.f32 %v1880, 1.0
    %v1890 = vadd.f32 %v1882, 1.0
    %v1891 = vrcp.pop %v1883
    %v1892 = vmul.f32 1.0, %v1891
    %v1893 = vrcp.pop %v1884
    %v1894 = vmul.f32 1.0, %v1893
    %v1895 = vrcp.pop %v1885
    %v1896 = vmul.f32 1.0, %v1895
    %v1897 = vrcp.pop %v1886
    %v1898 = vmul.f32 1.0, %v1897
    %v1899 = vrcp.pop %v1887
    %v1900 = vmul.f32 1.0, %v1899
    %v1901 = vrcp.pop %v1888
    %v1902 = vmul.f32 1.0, %v1901
    %v1903 = vrcp.pop %v1889
    %v1904 = vmul.f32 1.0, %v1903
    %v1905 = vrcp.pop %v1890
    %v1906 = vmul.f32 1.0, %v1905
    %v1907 = vadd.f32 %v1750, %v478
    %v1908 = vadd.f32 %v1754, %v482
    %v1909 = vadd.f32 %v1760, %v488
    %v1910 = vadd.f32 %v1764, %v492
    %v1911 = vadd.f32 %v1770, %v498
    %v1912 = vadd.f32 %v1774, %v502
    %v1913 = vadd.f32 %v1780, %v508
    %v1914 = vadd.f32 %v1784, %v512
    %v1915 = vxor.u32 %v1907, 2147483648
    %v1916 = vxor.u32 %v1908, 2147483648
    %v1917 = vxor.u32 %v1909, 2147483648
    %v1918 = vxor.u32 %v1910, 2147483648
    %v1919 = vxor.u32 %v1911, 2147483648
    %v1920 = vxor.u32 %v1912, 2147483648
    %v1921 = vxor.u32 %v1913, 2147483648
    %v1922 = vxor.u32 %v1914, 2147483648
    %v1923 = vmul.f32 %v1915, 1.442695
    %v1924 = vpow.pop %v1923
    %v1925 = vmul.f32 %v1916, 1.442695
    %v1926 = vpow.pop %v1925
    %v1927 = vmul.f32 %v1917, 1.442695
    %v1928 = vpow.pop %v1927
    %v1929 = vmul.f32 %v1918, 1.442695
    %v1930 = vpow.pop %v1929
    %v1931 = vmul.f32 %v1919, 1.442695
    %v1932 = vpow.pop %v1931
    %v1933 = vmul.f32 %v1920, 1.442695
    %v1934 = vpow.pop %v1933
    %v1935 = vmul.f32 %v1921, 1.442695
    %v1936 = vpow.pop %v1935
    %v1937 = vmul.f32 %v1922, 1.442695
    %v1938 = vpow.pop %v1937
    %v1939 = vadd.f32 %v1924, 1.0
    %v1940 = vadd.f32 %v1926, 1.0
    %v1941 = vadd.f32 %v1928, 1.0
    %v1942 = vadd.f32 %v1930, 1.0
    %v1943 = vadd.f32 %v1932, 1.0
    %v1944 = vadd.f32 %v1934, 1.0
    %v1945 = vadd.f32 %v1936, 1.0
    %v1946 = vadd.f32 %v1938, 1.0
    %v1947 = vrcp.pop %v1939
    %v1948 = vmul.f32 1.0, %v1947
    %v1949 = vrcp.pop %v1940
    %v1950 = vmul.f32 1.0, %v1949
    %v1951 = vrcp.pop %v1941
    %v1952 = vmul.f32 1.0, %v1951
    %v1953 = vrcp.pop %v1942
    %v1954 = vmul.f32 1.0, %v1953
    %v1955 = vrcp.pop %v1943
    %v1956 = vmul.f32 1.0, %v1955
    %v1957 = vrcp.pop %v1944
    %v1958 = vmul.f32 1.0, %v1957
    %v1959 = vrcp.pop %v1945
    %v1960 = vmul.f32 1.0, %v1959
    %v1961 = vrcp.pop %v1946
    %v1962 = vmul.f32 1.0, %v1961
    %v1963 = vmul.f32 %v1892, %v549
    %v1964 = vmul.f32 %v1894, %v552
    %v1965 = vmul.f32 %v1896, %v557
    %v1966 = vmul.f32 %v1898, %v560
    %v1967 = vmul.f32 %v1900, %v565
    %v1968 = vmul.f32 %v1902, %v568
    %v1969 = vmul.f32 %v1904, %v573
    %v1970 = vmul.f32 %v1906, %v576
    %v1971 = vadd.f32 %v1821, %v1963
    %v1972 = vadd.f32 %v1824, %v1964
    %v1973 = vadd.f32 %v1829, %v1965
    %v1974 = vadd.f32 %v1832, %v1966
    %v1975 = vadd.f32 %v1837, %v1967
    %v1976 = vadd.f32 %v1840, %v1968
    %v1977 = vadd.f32 %v1845, %v1969
    %v1978 = vadd.f32 %v1848, %v1970
    %v1979 = vtanh.pop %v1971
    %v1980 = vtanh.pop %v1972
    %v1981 = vtanh.pop %v1973
    %v1982 = vtanh.pop %v1974
    %v1983 = vtanh.pop %v1975
    %v1984 = vtanh.pop %v1976
    %v1985 = vtanh.pop %v1977
    %v1986 = vtanh.pop %v1978
    %v1987 = vsub.f32 1.0, %v1948
    %v1988 = vsub.f32 1.0, %v1950
    %v1989 = vsub.f32 1.0, %v1952
    %v1990 = vsub.f32 1.0, %v1954
    %v1991 = vsub.f32 1.0, %v1956
    %v1992 = vsub.f32 1.0, %v1958
    %v1993 = vsub.f32 1.0, %v1960
    %v1994 = vsub.f32 1.0, %v1962
    %v1995 = vmul.f32 %v1987, %v1979
    %v1996 = vmul.f32 %v1988, %v1980
    %v1997 = vmul.f32 %v1989, %v1981
    %v1998 = vmul.f32 %v1990, %v1982
    %v1999 = vmul.f32 %v1991, %v1983
    %v2000 = vmul.f32 %v1992, %v1984
    %v2001 = vmul.f32 %v1993, %v1985
    %v2002 = vmul.f32 %v1994, %v1986
    %v2003 = vmul.f32 %v1948, %v252
    %v2004 = vmul.f32 %v1950, %v253
    %v2005 = vmul.f32 %v1952, %v254
    %v2006 = vmul.f32 %v1954, %v255
    %v2007 = vmul.f32 %v1956, %v256
    %v2008 = vmul.f32 %v1958, %v257
    %v2009 = vmul.f32 %v1960, %v258
    %v2010 = vmul.f32 %v1962, %v259
    %v2011 = vadd.f32 %v1995, %v2003
    %v2012 = vadd.f32 %v1996, %v2004
    %v2013 = vadd.f32 %v1997, %v2005
    %v2014 = vadd.f32 %v1998, %v2006
    %v2015 = vadd.f32 %v1999, %v2007
    %v2016 = vadd.f32 %v2000, %v2008
    %v2017 = vadd.f32 %v2001, %v2009
    %v2018 = vadd.f32 %v2002, %v2010
    %v2019 = vpack.c.bf16 %v2012, %v2011
    %v2020 = vpack.c.bf16 %v2014, %v2013
    %v2021 = vpack.c.bf16 %v2016, %v2015
    %v2022 = vpack.c.bf16 %v2018, %v2017
    %2023 = vmatprep.subr.bf16.mxu0 %v394
    %2024 = vmatpush1.bf16.msra.mxu0 %v393
    %2025 = vmatprep.subr.bf16.mxu0 %v397
    %2026 = vmatpush1.bf16.msra.mxu0 %v396
    %2027 = vmatprep.subr.bf16.mxu0 %v400
    %2028 = vmatpush1.bf16.msra.mxu0 %v399
    %2029 = vmatprep.subr.bf16.mxu0 %v403
    %2030 = vmatpush1.bf16.msra.mxu0 %v402
    %2031 = vmatprep.subr.bf16.mxu0 %v406
    %2032 = vmatpush1.bf16.msra.mxu0 %v405
    %2033 = vmatprep.subr.bf16.mxu0 %v409
    %2034 = vmatpush1.bf16.msra.mxu0 %v408
    %2035 = vmatprep.subr.bf16.mxu0 %v412
    %2036 = vmatpush1.bf16.msra.mxu0 %v411
    %2037 = vmatprep.subr.bf16.mxu0 %v415
    %2038 = vmatpush1.bf16.msra.mxu0 %v414
    %2039 = vmatprep.subr.bf16.mxu0 0
    %2040 = vmatpush1.bf16.msra.mxu0 0
    %2041 = vmatprep.subr.bf16.mxu0 0
    %2042 = vmatpush1.bf16.msra.mxu0 0
    %2043 = vmatprep.subr.bf16.mxu0 0
    %2044 = vmatpush1.bf16.msra.mxu0 0
    %2045 = vmatprep.subr.bf16.mxu0 0
    %2046 = vmatpush1.bf16.msra.mxu0 0
    %2047 = vmatprep.subr.bf16.mxu0 0
    %2048 = vmatpush1.bf16.msra.mxu0 0
    %2049 = vmatprep.subr.bf16.mxu0 0
    %2050 = vmatpush1.bf16.msra.mxu0 0
    %2051 = vmatprep.subr.bf16.mxu0 0
    %2052 = vmatpush1.bf16.msra.mxu0 0
    %2053 = vmatprep.subr.bf16.mxu0 0
    %2054 = vmatpush1.bf16.msra.mxu0 0
    %2055 = vmatprep.mubr.bf16.mxu0 0
    %2056 = vmatmul.mubr.bf16.gmra.mrb[0].mxu0 %v2019
    %v2057 = vpop.f32.mrb[0].mxu0
    %v2058 = vadd.f32 %v301, %v2057
    %v2059 = vpop.f32.mrb[0].mxu0
    %v2060 = vadd.f32 %v305, %v2059
    %v2061 = vpop.f32.mrb[0].mxu0
    %v2062 = vadd.f32 %v301, %v2061
    %v2063 = vpop.f32.mrb[0].mxu0
    %v2064 = vadd.f32 %v305, %v2063
    %2065 = vmatprep.mubr.bf16.mxu0 0
    %2066 = vmatmul.mubr.bf16.gmra.mrb[0].mxu0 %v2020
    %v2067 = vpop.f32.mrb[0].mxu0
    %v2068 = vadd.f32 %v301, %v2067
    %v2069 = vpop.f32.mrb[0].mxu0
    %v2070 = vadd.f32 %v305, %v2069
    %v2071 = vpop.f32.mrb[0].mxu0
    %v2072 = vadd.f32 %v301, %v2071
    %v2073 = vpop.f32.mrb[0].mxu0
    %v2074 = vadd.f32 %v305, %v2073
    %2075 = vmatprep.mubr.bf16.mxu0 0
    %2076 = vmatmul.mubr.bf16.gmra.mrb[0].mxu0 %v2021
    %v2077 = vpop.f32.mrb[0].mxu0
    %v2078 = vadd.f32 %v301, %v2077
    %v2079 = vpop.f32.mrb[0].mxu0
    %v2080 = vadd.f32 %v305, %v2079
    %v2081 = vpop.f32.mrb[0].mxu0
    %v2082 = vadd.f32 %v301, %v2081
    %v2083 = vpop.f32.mrb[0].mxu0
    %v2084 = vadd.f32 %v305, %v2083
    %2085 = vmatprep.mubr.bf16.mxu0 0
    %2086 = vmatmul.mubr.bf16.gmra.mrb[0].mxu0 %v2022
    %v2087 = vpop.f32.mrb[0].mxu0
    %v2088 = vadd.f32 %v301, %v2087
    %v2089 = vpop.f32.mrb[0].mxu0
    %v2090 = vadd.f32 %v305, %v2089
    %v2091 = vpop.f32.mrb[0].mxu0
    %v2092 = vadd.f32 %v301, %v2091
    %v2093 = vpop.f32.mrb[0].mxu0
    %v2094 = vadd.f32 %v305, %v2093
    %2095 = vdwg.mxu0
    %2096 = vmatprep.subr.bf16.mxu0 0
    %2097 = vmatpush1.bf16.msra.mxu0 %v395
    %2098 = vmatprep.subr.bf16.mxu0 0
    %2099 = vmatpush1.bf16.msra.mxu0 %v398
    %2100 = vmatprep.subr.bf16.mxu0 0
    %2101 = vmatpush1.bf16.msra.mxu0 %v401
    %2102 = vmatprep.subr.bf16.mxu0 0
    %2103 = vmatpush1.bf16.msra.mxu0 %v404
    %2104 = vmatprep.subr.bf16.mxu0 0
    %2105 = vmatpush1.bf16.msra.mxu0 %v407
    %2106 = vmatprep.subr.bf16.mxu0 0
    %2107 = vmatpush1.bf16.msra.mxu0 %v410
    %2108 = vmatprep.subr.bf16.mxu0 0
    %2109 = vmatpush1.bf16.msra.mxu0 %v413
    %2110 = vmatprep.subr.bf16.mxu0 0
    %2111 = vmatpush1.bf16.msra.mxu0 %v416
    %2112 = vmatprep.subr.bf16.mxu0 0
    %2113 = vmatpush1.bf16.msra.mxu0 0
    %2114 = vmatprep.subr.bf16.mxu0 0
    %2115 = vmatpush1.bf16.msra.mxu0 0
    %2116 = vmatprep.subr.bf16.mxu0 0
    %2117 = vmatpush1.bf16.msra.mxu0 0
    %2118 = vmatprep.subr.bf16.mxu0 0
    %2119 = vmatpush1.bf16.msra.mxu0 0
    %2120 = vmatprep.subr.bf16.mxu0 0
    %2121 = vmatpush1.bf16.msra.mxu0 0
    %2122 = vmatprep.subr.bf16.mxu0 0
    %2123 = vmatpush1.bf16.msra.mxu0 0
    %2124 = vmatprep.subr.bf16.mxu0 0
    %2125 = vmatpush1.bf16.msra.mxu0 0
    %2126 = vmatprep.subr.bf16.mxu0 0
    %2127 = vmatpush1.bf16.msra.mxu0 0
    %2128 = vmatprep.mubr.bf16.mxu0 0
    %2129 = vmatmul.mubr.bf16.gmra.mrb[0].mxu0 %v2019
    %v2130 = vpop.f32.mrb[0].mxu0
    %v2131 = vadd.f32 %v309, %v2130
    %v2132 = vpop.f32.mrb[0].mxu0
    %v2133 = vpop.f32.mrb[0].mxu0
    %v2134 = vadd.f32 %v309, %v2133
    %v2135 = vpop.f32.mrb[0].mxu0
    %2136 = vmatprep.mubr.bf16.mxu0 0
    %2137 = vmatmul.mubr.bf16.gmra.mrb[0].mxu0 %v2020
    %v2138 = vpop.f32.mrb[0].mxu0
    %v2139 = vadd.f32 %v309, %v2138
    %v2140 = vpop.f32.mrb[0].mxu0
    %v2141 = vpop.f32.mrb[0].mxu0
    %v2142 = vadd.f32 %v309, %v2141
    %v2143 = vpop.f32.mrb[0].mxu0
    %2144 = vmatprep.mubr.bf16.mxu0 0
    %2145 = vmatmul.mubr.bf16.gmra.mrb[0].mxu0 %v2021
    %v2146 = vpop.f32.mrb[0].mxu0
    %v2147 = vadd.f32 %v309, %v2146
    %v2148 = vpop.f32.mrb[0].mxu0
    %v2149 = vpop.f32.mrb[0].mxu0
    %v2150 = vadd.f32 %v309, %v2149
    %v2151 = vpop.f32.mrb[0].mxu0
    %2152 = vmatprep.mubr.bf16.mxu0 0
    %2153 = vmatmul.mubr.bf16.gmra.mrb[0].mxu0 %v2022
    %v2154 = vpop.f32.mrb[0].mxu0
    %v2155 = vadd.f32 %v309, %v2154
    %v2156 = vpop.f32.mrb[0].mxu0
    %v2157 = vpop.f32.mrb[0].mxu0
    %v2158 = vadd.f32 %v309, %v2157
    %v2159 = vpop.f32.mrb[0].mxu0
    %2160 = vdwg.mxu0
    %2161 = vmatprep.subr.bf16.mxu0 0
    %2162 = vmatpush1.bf16.msra.mxu0 %v2019
    %2163 = vmatprep.subr.bf16.mxu0 0
    %2164 = vmatpush1.bf16.msra.mxu0 %v2020
    %2165 = vmatprep.subr.bf16.mxu0 0
    %2166 = vmatpush1.bf16.msra.mxu0 %v2021
    %2167 = vmatprep.subr.bf16.mxu0 0
    %2168 = vmatpush1.bf16.msra.mxu0 %v2022
    %2169 = vmatprep.subr.bf16.mxu0 0
    %2170 = vmatpush1.bf16.msra.mxu0 0
    %2171 = vmatprep.subr.bf16.mxu0 0
    %2172 = vmatpush1.bf16.msra.mxu0 0
    %2173 = vmatprep.subr.bf16.mxu0 0
    %2174 = vmatpush1.bf16.msra.mxu0 0
    %2175 = vmatprep.subr.bf16.mxu0 0
    %2176 = vmatpush1.bf16.msra.mxu0 0
    %2177 = vmatprep.subr.bf16.mxu0 0
    %2178 = vmatpush1.bf16.msra.mxu0 0
    %2179 = vmatprep.subr.bf16.mxu0 0
    %2180 = vmatpush1.bf16.msra.mxu0 0
    %2181 = vmatprep.subr.bf16.mxu0 0
    %2182 = vmatpush1.bf16.msra.mxu0 0
    %2183 = vmatprep.subr.bf16.mxu0 0
    %2184 = vmatpush1.bf16.msra.mxu0 0
    %2185 = vmatprep.subr.bf16.mxu0 0
    %2186 = vmatpush1.bf16.msra.mxu0 0
    %2187 = vmatprep.subr.bf16.mxu0 0
    %2188 = vmatpush1.bf16.msra.mxu0 0
    %2189 = vmatprep.subr.bf16.mxu0 0
    %2190 = vmatpush1.bf16.msra.mxu0 0
    %2191 = vmatprep.subr.bf16.mxu0 0
    %2192 = vmatpush1.bf16.msra.mxu0 0
    %2193 = vmatprep.mubr.bf16.mxu0 0
    %2194 = vmatmul.mubr.bf16.gmra.mrb[0].mxu0 %v693
    %v2195 = vpop.f32.mrb[0].mxu0
    %v2196 = vadd.f32 0.0, %v2195
    %v2197 = vpop.f32.mrb[0].mxu0
    %v2198 = vpop.f32.mrb[0].mxu0
    %v2199 = vadd.f32 0.0, %v2198
    %v2200 = vpop.f32.mrb[0].mxu0
    %2201 = vmatprep.mubr.bf16.mxu0 0
    %2202 = vmatmul.mubr.bf16.gmra.mrb[0].mxu0 %v696
    %v2203 = vpop.f32.mrb[0].mxu0
    %v2204 = vadd.f32 0.0, %v2203
    %v2205 = vpop.f32.mrb[0].mxu0
    %v2206 = vpop.f32.mrb[0].mxu0
    %v2207 = vadd.f32 0.0, %v2206
    %v2208 = vpop.f32.mrb[0].mxu0
    %2209 = vmatprep.mubr.bf16.mxu0 0
    %2210 = vmatmul.mubr.bf16.gmra.mrb[0].mxu0 %v699
    %v2211 = vpop.f32.mrb[0].mxu0
    %v2212 = vadd.f32 0.0, %v2211
    %v2213 = vpop.f32.mrb[0].mxu0
    %v2214 = vpop.f32.mrb[0].mxu0
    %v2215 = vadd.f32 0.0, %v2214
    %v2216 = vpop.f32.mrb[0].mxu0
    %2217 = vmatprep.mubr.bf16.mxu0 0
    %2218 = vmatmul.mubr.bf16.gmra.mrb[0].mxu0 %v702
    %v2219 = vpop.f32.mrb[0].mxu0
    %v2220 = vadd.f32 0.0, %v2219
    %v2221 = vpop.f32.mrb[0].mxu0
    %v2222 = vpop.f32.mrb[0].mxu0
    %v2223 = vadd.f32 0.0, %v2222
    %v2224 = vpop.f32.mrb[0].mxu0
    %2225 = vmatprep.mubr.bf16.mxu0 0
    %2226 = vmatmul.mubr.bf16.gmra.mrb[0].mxu0 %v705
    %v2227 = vpop.f32.mrb[0].mxu0
    %v2228 = vadd.f32 0.0, %v2227
    %v2229 = vpop.f32.mrb[0].mxu0
    %v2230 = vpop.f32.mrb[0].mxu0
    %v2231 = vadd.f32 0.0, %v2230
    %v2232 = vpop.f32.mrb[0].mxu0
    %2233 = vmatprep.mubr.bf16.mxu0 0
    %2234 = vmatmul.mubr.bf16.gmra.mrb[0].mxu0 %v708
    %v2235 = vpop.f32.mrb[0].mxu0
    %v2236 = vadd.f32 0.0, %v2235
    %v2237 = vpop.f32.mrb[0].mxu0
    %v2238 = vpop.f32.mrb[0].mxu0
    %v2239 = vadd.f32 0.0, %v2238
    %v2240 = vpop.f32.mrb[0].mxu0
    %2241 = vmatprep.mubr.bf16.mxu0 0
    %2242 = vmatmul.mubr.bf16.gmra.mrb[0].mxu0 %v711
    %v2243 = vpop.f32.mrb[0].mxu0
    %v2244 = vadd.f32 0.0, %v2243
    %v2245 = vpop.f32.mrb[0].mxu0
    %v2246 = vpop.f32.mrb[0].mxu0
    %v2247 = vadd.f32 0.0, %v2246
    %v2248 = vpop.f32.mrb[0].mxu0
    %2249 = vmatprep.mubr.bf16.mxu0 0
    %2250 = vmatmul.mubr.bf16.gmra.mrb[0].mxu0 %v714
    %v2251 = vpop.f32.mrb[0].mxu0
    %v2252 = vadd.f32 0.0, %v2251
    %v2253 = vpop.f32.mrb[0].mxu0
    %v2254 = vpop.f32.mrb[0].mxu0
    %v2255 = vadd.f32 0.0, %v2254
    %v2256 = vpop.f32.mrb[0].mxu0
    %2257 = vmatprep.mubr.bf16.mxu0 0
    %2258 = vmatmul.mubr.bf16.gmra.mrb[0].mxu0 %v717
    %v2259 = vpop.f32.mrb[0].mxu0
    %v2260 = vadd.f32 0.0, %v2259
    %v2261 = vpop.f32.mrb[0].mxu0
    %v2262 = vpop.f32.mrb[0].mxu0
    %v2263 = vadd.f32 0.0, %v2262
    %v2264 = vpop.f32.mrb[0].mxu0
    %2265 = vmatprep.mubr.bf16.mxu0 0
    %2266 = vmatmul.mubr.bf16.gmra.mrb[0].mxu0 %v720
    %v2267 = vpop.f32.mrb[0].mxu0
    %v2268 = vadd.f32 0.0, %v2267
    %v2269 = vpop.f32.mrb[0].mxu0
    %v2270 = vpop.f32.mrb[0].mxu0
    %v2271 = vadd.f32 0.0, %v2270
    %v2272 = vpop.f32.mrb[0].mxu0
    %2273 = vmatprep.mubr.bf16.mxu0 0
    %2274 = vmatmul.mubr.bf16.gmra.mrb[0].mxu0 %v723
    %v2275 = vpop.f32.mrb[0].mxu0
    %v2276 = vadd.f32 0.0, %v2275
    %v2277 = vpop.f32.mrb[0].mxu0
    %v2278 = vpop.f32.mrb[0].mxu0
    %v2279 = vadd.f32 0.0, %v2278
    %v2280 = vpop.f32.mrb[0].mxu0
    %2281 = vmatprep.mubr.bf16.mxu0 0
    %2282 = vmatmul.mubr.bf16.gmra.mrb[0].mxu0 %v726
    %v2283 = vpop.f32.mrb[0].mxu0
    %v2284 = vadd.f32 0.0, %v2283
    %v2285 = vpop.f32.mrb[0].mxu0
    %v2286 = vpop.f32.mrb[0].mxu0
    %v2287 = vadd.f32 0.0, %v2286
    %v2288 = vpop.f32.mrb[0].mxu0
    %2289 = vmatprep.mubr.bf16.mxu0 0
    %2290 = vmatmul.mubr.bf16.gmra.mrb[0].mxu0 %v729
    %v2291 = vpop.f32.mrb[0].mxu0
    %v2292 = vadd.f32 0.0, %v2291
    %v2293 = vpop.f32.mrb[0].mxu0
    %v2294 = vpop.f32.mrb[0].mxu0
    %v2295 = vadd.f32 0.0, %v2294
    %v2296 = vpop.f32.mrb[0].mxu0
    %2297 = vmatprep.mubr.bf16.mxu0 0
    %2298 = vmatmul.mubr.bf16.gmra.mrb[0].mxu0 %v732
    %v2299 = vpop.f32.mrb[0].mxu0
    %v2300 = vadd.f32 0.0, %v2299
    %v2301 = vpop.f32.mrb[0].mxu0
    %v2302 = vpop.f32.mrb[0].mxu0
    %v2303 = vadd.f32 0.0, %v2302
    %v2304 = vpop.f32.mrb[0].mxu0
    %2305 = vmatprep.mubr.bf16.mxu0 0
    %2306 = vmatmul.mubr.bf16.gmra.mrb[0].mxu0 %v735
    %v2307 = vpop.f32.mrb[0].mxu0
    %v2308 = vadd.f32 0.0, %v2307
    %v2309 = vpop.f32.mrb[0].mxu0
    %v2310 = vpop.f32.mrb[0].mxu0
    %v2311 = vadd.f32 0.0, %v2310
    %v2312 = vpop.f32.mrb[0].mxu0
    %2313 = vmatprep.mubr.bf16.mxu0 0
    %2314 = vmatmul.mubr.bf16.gmra.mrb[0].mxu0 %v738
    %v2315 = vpop.f32.mrb[0].mxu0
    %v2316 = vadd.f32 0.0, %v2315
    %v2317 = vpop.f32.mrb[0].mxu0
    %v2318 = vpop.f32.mrb[0].mxu0
    %v2319 = vadd.f32 0.0, %v2318
    %v2320 = vpop.f32.mrb[0].mxu0
    %2321 = vdwg.mxu0
    %v2322 = vpack.c.bf16 %v2199, %v2196
    %v2323 = vpack.c.bf16 %v2207, %v2204
    %v2324 = vpack.c.bf16 %v2215, %v2212
    %v2325 = vpack.c.bf16 %v2223, %v2220
    %v2326 = vpack.c.bf16 %v2231, %v2228
    %v2327 = vpack.c.bf16 %v2239, %v2236
    %v2328 = vpack.c.bf16 %v2247, %v2244
    %v2329 = vpack.c.bf16 %v2255, %v2252
    %v2330 = vpack.c.bf16 %v2263, %v2260
    %v2331 = vpack.c.bf16 %v2271, %v2268
    %v2332 = vpack.c.bf16 %v2279, %v2276
    %v2333 = vpack.c.bf16 %v2287, %v2284
    %v2334 = vpack.c.bf16 %v2295, %v2292
    %v2335 = vpack.c.bf16 %v2303, %v2300
    %v2336 = vpack.c.bf16 %v2311, %v2308
    %v2337 = vpack.c.bf16 %v2319, %v2316
    %2338 = vmatprep.subr.bf16.mxu0 0
    %2339 = vmatpush1.bf16.msra.mxu0 %v973
    %2340 = vmatprep.subr.bf16.mxu0 0
    %2341 = vmatpush1.bf16.msra.mxu0 %v974
    %2342 = vmatprep.subr.bf16.mxu0 0
    %2343 = vmatpush1.bf16.msra.mxu0 %v975
    %2344 = vmatprep.subr.bf16.mxu0 0
    %2345 = vmatpush1.bf16.msra.mxu0 %v976
    %2346 = vmatprep.subr.bf16.mxu0 0
    %2347 = vmatpush1.bf16.msra.mxu0 %v977
    %2348 = vmatprep.subr.bf16.mxu0 0
    %2349 = vmatpush1.bf16.msra.mxu0 %v978
    %2350 = vmatprep.subr.bf16.mxu0 0
    %2351 = vmatpush1.bf16.msra.mxu0 %v979
    %2352 = vmatprep.subr.bf16.mxu0 0
    %2353 = vmatpush1.bf16.msra.mxu0 %v980
    %2354 = vmatprep.subr.bf16.mxu0 0
    %2355 = vmatpush1.bf16.msra.mxu0 0
    %2356 = vmatprep.subr.bf16.mxu0 0
    %2357 = vmatpush1.bf16.msra.mxu0 0
    %2358 = vmatprep.subr.bf16.mxu0 0
    %2359 = vmatpush1.bf16.msra.mxu0 0
    %2360 = vmatprep.subr.bf16.mxu0 0
    %2361 = vmatpush1.bf16.msra.mxu0 0
    %2362 = vmatprep.subr.bf16.mxu0 0
    %2363 = vmatpush1.bf16.msra.mxu0 0
    %2364 = vmatprep.subr.bf16.mxu0 0
    %2365 = vmatpush1.bf16.msra.mxu0 0
    %2366 = vmatprep.subr.bf16.mxu0 0
    %2367 = vmatpush1.bf16.msra.mxu0 0
    %2368 = vmatprep.subr.bf16.mxu0 0
    %2369 = vmatpush1.bf16.msra.mxu0 0
    %2370 = vmatprep.mubr.bf16.mxu0 0
    %2371 = vmatmul.mubr.bf16.gmra.mrb[0].mxu0 %v2322
    %v2372 = vpop.f32.mrb[0].mxu0
    %v2373 = vadd.f32 0.0, %v2372
    %v2374 = vpop.f32.mrb[0].mxu0
    %v2375 = vpop.f32.mrb[0].mxu0
    %v2376 = vadd.f32 0.0, %v2375
    %v2377 = vpop.f32.mrb[0].mxu0
    %2378 = vmatprep.mubr.bf16.mxu0 0
    %2379 = vmatmul.mubr.bf16.gmra.mrb[0].mxu0 %v2323
    %v2380 = vpop.f32.mrb[0].mxu0
    %v2381 = vadd.f32 0.0, %v2380
    %v2382 = vpop.f32.mrb[0].mxu0
    %v2383 = vpop.f32.mrb[0].mxu0
    %v2384 = vadd.f32 0.0, %v2383
    %v2385 = vpop.f32.mrb[0].mxu0
    %2386 = vmatprep.mubr.bf16.mxu0 0
    %2387 = vmatmul.mubr.bf16.gmra.mrb[0].mxu0 %v2324
    %v2388 = vpop.f32.mrb[0].mxu0
    %v2389 = vadd.f32 0.0, %v2388
    %v2390 = vpop.f32.mrb[0].mxu0
    %v2391 = vpop.f32.mrb[0].mxu0
    %v2392 = vadd.f32 0.0, %v2391
    %v2393 = vpop.f32.mrb[0].mxu0
    %2394 = vmatprep.mubr.bf16.mxu0 0
    %2395 = vmatmul.mubr.bf16.gmra.mrb[0].mxu0 %v2325
    %v2396 = vpop.f32.mrb[0].mxu0
    %v2397 = vadd.f32 0.0, %v2396
    %v2398 = vpop.f32.mrb[0].mxu0
    %v2399 = vpop.f32.mrb[0].mxu0
    %v2400 = vadd.f32 0.0, %v2399
    %v2401 = vpop.f32.mrb[0].mxu0
    %2402 = vdwg.mxu0
    %v2403 = vadd.f32 %v917, %v2373
    %v2404 = vadd.f32 %v918, %v2376
    %v2405 = vadd.f32 %v919, %v2381
    %v2406 = vadd.f32 %v920, %v2384
    %v2407 = vadd.f32 %v921, %v2389
    %v2408 = vadd.f32 %v922, %v2392
    %v2409 = vadd.f32 %v923, %v2397
    %v2410 = vadd.f32 %v924, %v2400
    %2411 = vmatprep.subr.bf16.mxu0 0
    %2412 = vmatpush1.bf16.msra.mxu0 %v1111
    %2413 = vmatprep.subr.bf16.mxu0 0
    %2414 = vmatpush1.bf16.msra.mxu0 %v1112
    %2415 = vmatprep.subr.bf16.mxu0 0
    %2416 = vmatpush1.bf16.msra.mxu0 %v1113
    %2417 = vmatprep.subr.bf16.mxu0 0
    %2418 = vmatpush1.bf16.msra.mxu0 %v1114
    %2419 = vmatprep.subr.bf16.mxu0 0
    %2420 = vmatpush1.bf16.msra.mxu0 %v1115
    %2421 = vmatprep.subr.bf16.mxu0 0
    %2422 = vmatpush1.bf16.msra.mxu0 %v1116
    %2423 = vmatprep.subr.bf16.mxu0 0
    %2424 = vmatpush1.bf16.msra.mxu0 %v1117
    %2425 = vmatprep.subr.bf16.mxu0 0
    %2426 = vmatpush1.bf16.msra.mxu0 %v1118
    %2427 = vmatprep.subr.bf16.mxu0 0
    %2428 = vmatpush1.bf16.msra.mxu0 0
    %2429 = vmatprep.subr.bf16.mxu0 0
    %2430 = vmatpush1.bf16.msra.mxu0 0
    %2431 = vmatprep.subr.bf16.mxu0 0
    %2432 = vmatpush1.bf16.msra.mxu0 0
    %2433 = vmatprep.subr.bf16.mxu0 0
    %2434 = vmatpush1.bf16.msra.mxu0 0
    %2435 = vmatprep.subr.bf16.mxu0 0
    %2436 = vmatpush1.bf16.msra.mxu0 0
    %2437 = vmatprep.subr.bf16.mxu0 0
    %2438 = vmatpush1.bf16.msra.mxu0 0
    %2439 = vmatprep.subr.bf16.mxu0 0
    %2440 = vmatpush1.bf16.msra.mxu0 0
    %2441 = vmatprep.subr.bf16.mxu0 0
    %2442 = vmatpush1.bf16.msra.mxu0 0
    %2443 = vmatprep.mubr.bf16.mxu0 0
    %2444 = vmatmul.mubr.bf16.gmra.mrb[0].mxu0 %v2326
    %v2445 = vpop.f32.mrb[0].mxu0
    %v2446 = vadd.f32 0.0, %v2445
    %v2447 = vpop.f32.mrb[0].mxu0
    %v2448 = vpop.f32.mrb[0].mxu0
    %v2449 = vadd.f32 0.0, %v2448
    %v2450 = vpop.f32.mrb[0].mxu0
    %2451 = vmatprep.mubr.bf16.mxu0 0
    %2452 = vmatmul.mubr.bf16.gmra.mrb[0].mxu0 %v2327
    %v2453 = vpop.f32.mrb[0].mxu0
    %v2454 = vadd.f32 0.0, %v2453
    %v2455 = vpop.f32.mrb[0].mxu0
    %v2456 = vpop.f32.mrb[0].mxu0
    %v2457 = vadd.f32 0.0, %v2456
    %v2458 = vpop.f32.mrb[0].mxu0
    %2459 = vmatprep.mubr.bf16.mxu0 0
    %2460 = vmatmul.mubr.bf16.gmra.mrb[0].mxu0 %v2328
    %v2461 = vpop.f32.mrb[0].mxu0
    %v2462 = vadd.f32 0.0, %v2461
    %v2463 = vpop.f32.mrb[0].mxu0
    %v2464 = vpop.f32.mrb[0].mxu0
    %v2465 = vadd.f32 0.0, %v2464
    %v2466 = vpop.f32.mrb[0].mxu0
    %2467 = vmatprep.mubr.bf16.mxu0 0
    %2468 = vmatmul.mubr.bf16.gmra.mrb[0].mxu0 %v2329
    %v2469 = vpop.f32.mrb[0].mxu0
    %v2470 = vadd.f32 0.0, %v2469
    %v2471 = vpop.f32.mrb[0].mxu0
    %v2472 = vpop.f32.mrb[0].mxu0
    %v2473 = vadd.f32 0.0, %v2472
    %v2474 = vpop.f32.mrb[0].mxu0
    %2475 = vdwg.mxu0
    %v2476 = vadd.f32 %v2403, %v2446
    %v2477 = vadd.f32 %v2404, %v2449
    %v2478 = vadd.f32 %v2405, %v2454
    %v2479 = vadd.f32 %v2406, %v2457
    %v2480 = vadd.f32 %v2407, %v2462
    %v2481 = vadd.f32 %v2408, %v2465
    %v2482 = vadd.f32 %v2409, %v2470
    %v2483 = vadd.f32 %v2410, %v2473
    %2484 = vmatprep.subr.bf16.mxu0 0
    %2485 = vmatpush1.bf16.msra.mxu0 %v1249
    %2486 = vmatprep.subr.bf16.mxu0 0
    %2487 = vmatpush1.bf16.msra.mxu0 %v1250
    %2488 = vmatprep.subr.bf16.mxu0 0
    %2489 = vmatpush1.bf16.msra.mxu0 %v1251
    %2490 = vmatprep.subr.bf16.mxu0 0
    %2491 = vmatpush1.bf16.msra.mxu0 %v1252
    %2492 = vmatprep.subr.bf16.mxu0 0
    %2493 = vmatpush1.bf16.msra.mxu0 %v1253
    %2494 = vmatprep.subr.bf16.mxu0 0
    %2495 = vmatpush1.bf16.msra.mxu0 %v1254
    %2496 = vmatprep.subr.bf16.mxu0 0
    %2497 = vmatpush1.bf16.msra.mxu0 %v1255
    %2498 = vmatprep.subr.bf16.mxu0 0
    %2499 = vmatpush1.bf16.msra.mxu0 %v1256
    %2500 = vmatprep.subr.bf16.mxu0 0
    %2501 = vmatpush1.bf16.msra.mxu0 0
    %2502 = vmatprep.subr.bf16.mxu0 0
    %2503 = vmatpush1.bf16.msra.mxu0 0
    %2504 = vmatprep.subr.bf16.mxu0 0
    %2505 = vmatpush1.bf16.msra.mxu0 0
    %2506 = vmatprep.subr.bf16.mxu0 0
    %2507 = vmatpush1.bf16.msra.mxu0 0
    %2508 = vmatprep.subr.bf16.mxu0 0
    %2509 = vmatpush1.bf16.msra.mxu0 0
    %2510 = vmatprep.subr.bf16.mxu0 0
    %2511 = vmatpush1.bf16.msra.mxu0 0
    %2512 = vmatprep.subr.bf16.mxu0 0
    %2513 = vmatpush1.bf16.msra.mxu0 0
    %2514 = vmatprep.subr.bf16.mxu0 0
    %2515 = vmatpush1.bf16.msra.mxu0 0
    %2516 = vmatprep.mubr.bf16.mxu0 0
    %2517 = vmatmul.mubr.bf16.gmra.mrb[0].mxu0 %v2330
    %v2518 = vpop.f32.mrb[0].mxu0
    %v2519 = vadd.f32 0.0, %v2518
    %v2520 = vpop.f32.mrb[0].mxu0
    %v2521 = vpop.f32.mrb[0].mxu0
    %v2522 = vadd.f32 0.0, %v2521
    %v2523 = vpop.f32.mrb[0].mxu0
    %2524 = vmatprep.mubr.bf16.mxu0 0
    %2525 = vmatmul.mubr.bf16.gmra.mrb[0].mxu0 %v2331
    %v2526 = vpop.f32.mrb[0].mxu0
    %v2527 = vadd.f32 0.0, %v2526
    %v2528 = vpop.f32.mrb[0].mxu0
    %v2529 = vpop.f32.mrb[0].mxu0
    %v2530 = vadd.f32 0.0, %v2529
    %v2531 = vpop.f32.mrb[0].mxu0
    %2532 = vmatprep.mubr.bf16.mxu0 0
    %2533 = vmatmul.mubr.bf16.gmra.mrb[0].mxu0 %v2332
    %v2534 = vpop.f32.mrb[0].mxu0
    %v2535 = vadd.f32 0.0, %v2534
    %v2536 = vpop.f32.mrb[0].mxu0
    %v2537 = vpop.f32.mrb[0].mxu0
    %v2538 = vadd.f32 0.0, %v2537
    %v2539 = vpop.f32.mrb[0].mxu0
    %2540 = vmatprep.mubr.bf16.mxu0 0
    %2541 = vmatmul.mubr.bf16.gmra.mrb[0].mxu0 %v2333
    %v2542 = vpop.f32.mrb[0].mxu0
    %v2543 = vadd.f32 0.0, %v2542
    %v2544 = vpop.f32.mrb[0].mxu0
    %v2545 = vpop.f32.mrb[0].mxu0
    %v2546 = vadd.f32 0.0, %v2545
    %v2547 = vpop.f32.mrb[0].mxu0
    %2548 = vdwg.mxu0
    %v2549 = vadd.f32 %v2476, %v2519
    %v2550 = vadd.f32 %v2477, %v2522
    %v2551 = vadd.f32 %v2478, %v2527
    %v2552 = vadd.f32 %v2479, %v2530
    %v2553 = vadd.f32 %v2480, %v2535
    %v2554 = vadd.f32 %v2481, %v2538
    %v2555 = vadd.f32 %v2482, %v2543
    %v2556 = vadd.f32 %v2483, %v2546
    %2557 = vmatprep.subr.bf16.mxu0 0
    %2558 = vmatpush1.bf16.msra.mxu0 %v1387
    %2559 = vmatprep.subr.bf16.mxu0 0
    %2560 = vmatpush1.bf16.msra.mxu0 %v1388
    %2561 = vmatprep.subr.bf16.mxu0 0
    %2562 = vmatpush1.bf16.msra.mxu0 %v1389
    %2563 = vmatprep.subr.bf16.mxu0 0
    %2564 = vmatpush1.bf16.msra.mxu0 %v1390
    %2565 = vmatprep.subr.bf16.mxu0 0
    %2566 = vmatpush1.bf16.msra.mxu0 %v1391
    %2567 = vmatprep.subr.bf16.mxu0 0
    %2568 = vmatpush1.bf16.msra.mxu0 %v1392
    %2569 = vmatprep.subr.bf16.mxu0 0
    %2570 = vmatpush1.bf16.msra.mxu0 %v1393
    %2571 = vmatprep.subr.bf16.mxu0 0
    %2572 = vmatpush1.bf16.msra.mxu0 %v1394
    %2573 = vmatprep.subr.bf16.mxu0 0
    %2574 = vmatpush1.bf16.msra.mxu0 0
    %2575 = vmatprep.subr.bf16.mxu0 0
    %2576 = vmatpush1.bf16.msra.mxu0 0
    %2577 = vmatprep.subr.bf16.mxu0 0
    %2578 = vmatpush1.bf16.msra.mxu0 0
    %2579 = vmatprep.subr.bf16.mxu0 0
    %2580 = vmatpush1.bf16.msra.mxu0 0
    %2581 = vmatprep.subr.bf16.mxu0 0
    %2582 = vmatpush1.bf16.msra.mxu0 0
    %2583 = vmatprep.subr.bf16.mxu0 0
    %2584 = vmatpush1.bf16.msra.mxu0 0
    %2585 = vmatprep.subr.bf16.mxu0 0
    %2586 = vmatpush1.bf16.msra.mxu0 0
    %2587 = vmatprep.subr.bf16.mxu0 0
    %2588 = vmatpush1.bf16.msra.mxu0 0
    %2589 = vmatprep.mubr.bf16.mxu0 0
    %2590 = vmatmul.mubr.bf16.gmra.mrb[0].mxu0 %v2334
    %v2591 = vpop.f32.mrb[0].mxu0
    %v2592 = vadd.f32 0.0, %v2591
    %v2593 = vpop.f32.mrb[0].mxu0
    %v2594 = vpop.f32.mrb[0].mxu0
    %v2595 = vadd.f32 0.0, %v2594
    %v2596 = vpop.f32.mrb[0].mxu0
    %2597 = vmatprep.mubr.bf16.mxu0 0
    %2598 = vmatmul.mubr.bf16.gmra.mrb[0].mxu0 %v2335
    %v2599 = vpop.f32.mrb[0].mxu0
    %v2600 = vadd.f32 0.0, %v2599
    %v2601 = vpop.f32.mrb[0].mxu0
    %v2602 = vpop.f32.mrb[0].mxu0
    %v2603 = vadd.f32 0.0, %v2602
    %v2604 = vpop.f32.mrb[0].mxu0
    %2605 = vmatprep.mubr.bf16.mxu0 0
    %2606 = vmatmul.mubr.bf16.gmra.mrb[0].mxu0 %v2336
    %v2607 = vpop.f32.mrb[0].mxu0
    %v2608 = vadd.f32 0.0, %v2607
    %v2609 = vpop.f32.mrb[0].mxu0
    %v2610 = vpop.f32.mrb[0].mxu0
    %v2611 = vadd.f32 0.0, %v2610
    %v2612 = vpop.f32.mrb[0].mxu0
    %2613 = vmatprep.mubr.bf16.mxu0 0
    %2614 = vmatmul.mubr.bf16.gmra.mrb[0].mxu0 %v2337
    %v2615 = vpop.f32.mrb[0].mxu0
    %v2616 = vadd.f32 0.0, %v2615
    %v2617 = vpop.f32.mrb[0].mxu0
    %v2618 = vpop.f32.mrb[0].mxu0
    %v2619 = vadd.f32 0.0, %v2618
    %v2620 = vpop.f32.mrb[0].mxu0
    %2621 = vdwg.mxu0
    %v2622 = vadd.f32 %v2549, %v2592
    %v2623 = vadd.f32 %v2550, %v2595
    %v2624 = vadd.f32 %v2551, %v2600
    %v2625 = vadd.f32 %v2552, %v2603
    %v2626 = vadd.f32 %v2553, %v2608
    %v2627 = vadd.f32 %v2554, %v2611
    %v2628 = vadd.f32 %v2555, %v2616
    %v2629 = vadd.f32 %v2556, %v2619
    %v2630 = vmul.f32 %v2622, %v1487
    %v2631 = vmul.f32 %v2623, %v1492
    %v2632 = vmul.f32 %v2624, %v1497
    %v2633 = vmul.f32 %v2625, %v1502
    %v2634 = vmul.f32 %v2626, %v1507
    %v2635 = vmul.f32 %v2627, %v1512
    %v2636 = vmul.f32 %v2628, %v1517
    %v2637 = vmul.f32 %v2629, %v1522
    %v2638 = vpack.c.bf16 %v2631, %v2630
    %v2639 = vpack.c.bf16 %v2633, %v2632
    %v2640 = vpack.c.bf16 %v2635, %v2634
    %v2641 = vpack.c.bf16 %v2637, %v2636
    %2642 = vmatprep.subr.bf16.mxu0 %v1666
    %2643 = vmatpush1.bf16.msra.mxu0 %v1665
    %2644 = vmatprep.subr.bf16.mxu0 %v1669
    %2645 = vmatpush1.bf16.msra.mxu0 %v1668
    %2646 = vmatprep.subr.bf16.mxu0 %v1672
    %2647 = vmatpush1.bf16.msra.mxu0 %v1671
    %2648 = vmatprep.subr.bf16.mxu0 %v1675
    %2649 = vmatpush1.bf16.msra.mxu0 %v1674
    %2650 = vmatprep.subr.bf16.mxu0 %v1678
    %2651 = vmatpush1.bf16.msra.mxu0 %v1677
    %2652 = vmatprep.subr.bf16.mxu0 %v1681
    %2653 = vmatpush1.bf16.msra.mxu0 %v1680
    %2654 = vmatprep.subr.bf16.mxu0 %v1684
    %2655 = vmatpush1.bf16.msra.mxu0 %v1683
    %2656 = vmatprep.subr.bf16.mxu0 %v1687
    %2657 = vmatpush1.bf16.msra.mxu0 %v1686
    %2658 = vmatprep.subr.bf16.mxu0 0
    %2659 = vmatpush1.bf16.msra.mxu0 0
    %2660 = vmatprep.subr.bf16.mxu0 0
    %2661 = vmatpush1.bf16.msra.mxu0 0
    %2662 = vmatprep.subr.bf16.mxu0 0
    %2663 = vmatpush1.bf16.msra.mxu0 0
    %2664 = vmatprep.subr.bf16.mxu0 0
    %2665 = vmatpush1.bf16.msra.mxu0 0
    %2666 = vmatprep.subr.bf16.mxu0 0
    %2667 = vmatpush1.bf16.msra.mxu0 0
    %2668 = vmatprep.subr.bf16.mxu0 0
    %2669 = vmatpush1.bf16.msra.mxu0 0
    %2670 = vmatprep.subr.bf16.mxu0 0
    %2671 = vmatpush1.bf16.msra.mxu0 0
    %2672 = vmatprep.subr.bf16.mxu0 0
    %2673 = vmatpush1.bf16.msra.mxu0 0
    %2674 = vmatprep.mubr.bf16.mxu0 0
    %2675 = vmatmul.mubr.bf16.gmra.mrb[0].mxu0 %v2638
    %v2676 = vpop.f32.mrb[0].mxu0
    %v2677 = vadd.f32 %v1573, %v2676
    %v2678 = vpop.f32.mrb[0].mxu0
    %v2679 = vadd.f32 %v1577, %v2678
    %v2680 = vpop.f32.mrb[0].mxu0
    %v2681 = vadd.f32 %v1573, %v2680
    %v2682 = vpop.f32.mrb[0].mxu0
    %v2683 = vadd.f32 %v1577, %v2682
    %2684 = vmatprep.mubr.bf16.mxu0 0
    %2685 = vmatmul.mubr.bf16.gmra.mrb[0].mxu0 %v2639
    %v2686 = vpop.f32.mrb[0].mxu0
    %v2687 = vadd.f32 %v1573, %v2686
    %v2688 = vpop.f32.mrb[0].mxu0
    %v2689 = vadd.f32 %v1577, %v2688
    %v2690 = vpop.f32.mrb[0].mxu0
    %v2691 = vadd.f32 %v1573, %v2690
    %v2692 = vpop.f32.mrb[0].mxu0
    %v2693 = vadd.f32 %v1577, %v2692
    %2694 = vmatprep.mubr.bf16.mxu0 0
    %2695 = vmatmul.mubr.bf16.gmra.mrb[0].mxu0 %v2640
    %v2696 = vpop.f32.mrb[0].mxu0
    %v2697 = vadd.f32 %v1573, %v2696
    %v2698 = vpop.f32.mrb[0].mxu0
    %v2699 = vadd.f32 %v1577, %v2698
    %v2700 = vpop.f32.mrb[0].mxu0
    %v2701 = vadd.f32 %v1573, %v2700
    %v2702 = vpop.f32.mrb[0].mxu0
    %v2703 = vadd.f32 %v1577, %v2702
    %2704 = vmatprep.mubr.bf16.mxu0 0
    %2705 = vmatmul.mubr.bf16.gmra.mrb[0].mxu0 %v2641
    %v2706 = vpop.f32.mrb[0].mxu0
    %v2707 = vadd.f32 %v1573, %v2706
    %v2708 = vpop.f32.mrb[0].mxu0
    %v2709 = vadd.f32 %v1577, %v2708
    %v2710 = vpop.f32.mrb[0].mxu0
    %v2711 = vadd.f32 %v1573, %v2710
    %v2712 = vpop.f32.mrb[0].mxu0
    %v2713 = vadd.f32 %v1577, %v2712
    %2714 = vdwg.mxu0
    %2715 = vmatprep.subr.bf16.mxu0 0
    %2716 = vmatpush1.bf16.msra.mxu0 %v1667
    %2717 = vmatprep.subr.bf16.mxu0 0
    %2718 = vmatpush1.bf16.msra.mxu0 %v1670
    %2719 = vmatprep.subr.bf16.mxu0 0
    %2720 = vmatpush1.bf16.msra.mxu0 %v1673
    %2721 = vmatprep.subr.bf16.mxu0 0
    %2722 = vmatpush1.bf16.msra.mxu0 %v1676
    %2723 = vmatprep.subr.bf16.mxu0 0
    %2724 = vmatpush1.bf16.msra.mxu0 %v1679
    %2725 = vmatprep.subr.bf16.mxu0 0
    %2726 = vmatpush1.bf16.msra.mxu0 %v1682
    %2727 = vmatprep.subr.bf16.mxu0 0
    %2728 = vmatpush1.bf16.msra.mxu0 %v1685
    %2729 = vmatprep.subr.bf16.mxu0 0
    %2730 = vmatpush1.bf16.msra.mxu0 %v1688
    %2731 = vmatprep.subr.bf16.mxu0 0
    %2732 = vmatpush1.bf16.msra.mxu0 0
    %2733 = vmatprep.subr.bf16.mxu0 0
    %2734 = vmatpush1.bf16.msra.mxu0 0
    %2735 = vmatprep.subr.bf16.mxu0 0
    %2736 = vmatpush1.bf16.msra.mxu0 0
    %2737 = vmatprep.subr.bf16.mxu0 0
    %2738 = vmatpush1.bf16.msra.mxu0 0
    %2739 = vmatprep.subr.bf16.mxu0 0
    %2740 = vmatpush1.bf16.msra.mxu0 0
    %2741 = vmatprep.subr.bf16.mxu0 0
    %2742 = vmatpush1.bf16.msra.mxu0 0
    %2743 = vmatprep.subr.bf16.mxu0 0
    %2744 = vmatpush1.bf16.msra.mxu0 0
    %2745 = vmatprep.subr.bf16.mxu0 0
    %2746 = vmatpush1.bf16.msra.mxu0 0
    %2747 = vmatprep.mubr.bf16.mxu0 0
    %2748 = vmatmul.mubr.bf16.gmra.mrb[0].mxu0 %v2638
    %v2749 = vpop.f32.mrb[0].mxu0
    %v2750 = vadd.f32 %v1581, %v2749
    %v2751 = vpop.f32.mrb[0].mxu0
    %v2752 = vpop.f32.mrb[0].mxu0
    %v2753 = vadd.f32 %v1581, %v2752
    %v2754 = vpop.f32.mrb[0].mxu0
    %2755 = vmatprep.mubr.bf16.mxu0 0
    %2756 = vmatmul.mubr.bf16.gmra.mrb[0].mxu0 %v2639
    %v2757 = vpop.f32.mrb[0].mxu0
    %v2758 = vadd.f32 %v1581, %v2757
    %v2759 = vpop.f32.mrb[0].mxu0
    %v2760 = vpop.f32.mrb[0].mxu0
    %v2761 = vadd.f32 %v1581, %v2760
    %v2762 = vpop.f32.mrb[0].mxu0
    %2763 = vmatprep.mubr.bf16.mxu0 0
    %2764 = vmatmul.mubr.bf16.gmra.mrb[0].mxu0 %v2640
    %v2765 = vpop.f32.mrb[0].mxu0
    %v2766 = vadd.f32 %v1581, %v2765
    %v2767 = vpop.f32.mrb[0].mxu0
    %v2768 = vpop.f32.mrb[0].mxu0
    %v2769 = vadd.f32 %v1581, %v2768
    %v2770 = vpop.f32.mrb[0].mxu0
    %2771 = vmatprep.mubr.bf16.mxu0 0
    %2772 = vmatmul.mubr.bf16.gmra.mrb[0].mxu0 %v2641
    %v2773 = vpop.f32.mrb[0].mxu0
    %v2774 = vadd.f32 %v1581, %v2773
    %v2775 = vpop.f32.mrb[0].mxu0
    %v2776 = vpop.f32.mrb[0].mxu0
    %v2777 = vadd.f32 %v1581, %v2776
    %v2778 = vpop.f32.mrb[0].mxu0
    %2779 = vdwg.mxu0
    %v2780 = vadd.f32 %v2677, %v2058
    %v2781 = vadd.f32 %v2681, %v2062
    %v2782 = vadd.f32 %v2687, %v2068
    %v2783 = vadd.f32 %v2691, %v2072
    %v2784 = vadd.f32 %v2697, %v2078
    %v2785 = vadd.f32 %v2701, %v2082
    %v2786 = vadd.f32 %v2707, %v2088
    %v2787 = vadd.f32 %v2711, %v2092
    %v2788 = vxor.u32 %v2780, 2147483648
    %v2789 = vxor.u32 %v2781, 2147483648
    %v2790 = vxor.u32 %v2782, 2147483648
    %v2791 = vxor.u32 %v2783, 2147483648
    %v2792 = vxor.u32 %v2784, 2147483648
    %v2793 = vxor.u32 %v2785, 2147483648
    %v2794 = vxor.u32 %v2786, 2147483648
    %v2795 = vxor.u32 %v2787, 2147483648
    %v2796 = vmul.f32 %v2788, 1.442695
    %v2797 = vpow.pop %v2796
    %v2798 = vmul.f32 %v2789, 1.442695
    %v2799 = vpow.pop %v2798
    %v2800 = vmul.f32 %v2790, 1.442695
    %v2801 = vpow.pop %v2800
    %v2802 = vmul.f32 %v2791, 1.442695
    %v2803 = vpow.pop %v2802
    %v2804 = vmul.f32 %v2792, 1.442695
    %v2805 = vpow.pop %v2804
    %v2806 = vmul.f32 %v2793, 1.442695
    %v2807 = vpow.pop %v2806
    %v2808 = vmul.f32 %v2794, 1.442695
    %v2809 = vpow.pop %v2808
    %v2810 = vmul.f32 %v2795, 1.442695
    %v2811 = vpow.pop %v2810
    %v2812 = vadd.f32 %v2797, 1.0
    %v2813 = vadd.f32 %v2799, 1.0
    %v2814 = vadd.f32 %v2801, 1.0
    %v2815 = vadd.f32 %v2803, 1.0
    %v2816 = vadd.f32 %v2805, 1.0
    %v2817 = vadd.f32 %v2807, 1.0
    %v2818 = vadd.f32 %v2809, 1.0
    %v2819 = vadd.f32 %v2811, 1.0
    %v2820 = vrcp.pop %v2812
    %v2821 = vmul.f32 1.0, %v2820
    %v2822 = vrcp.pop %v2813
    %v2823 = vmul.f32 1.0, %v2822
    %v2824 = vrcp.pop %v2814
    %v2825 = vmul.f32 1.0, %v2824
    %v2826 = vrcp.pop %v2815
    %v2827 = vmul.f32 1.0, %v2826
    %v2828 = vrcp.pop %v2816
    %v2829 = vmul.f32 1.0, %v2828
    %v2830 = vrcp.pop %v2817
    %v2831 = vmul.f32 1.0, %v2830
    %v2832 = vrcp.pop %v2818
    %v2833 = vmul.f32 1.0, %v2832
    %v2834 = vrcp.pop %v2819
    %v2835 = vmul.f32 1.0, %v2834
    %v2836 = vadd.f32 %v2679, %v2060
    %v2837 = vadd.f32 %v2683, %v2064
    %v2838 = vadd.f32 %v2689, %v2070
    %v2839 = vadd.f32 %v2693, %v2074
    %v2840 = vadd.f32 %v2699, %v2080
    %v2841 = vadd.f32 %v2703, %v2084
    %v2842 = vadd.f32 %v2709, %v2090
    %v2843 = vadd.f32 %v2713, %v2094
    %v2844 = vxor.u32 %v2836, 2147483648
    %v2845 = vxor.u32 %v2837, 2147483648
    %v2846 = vxor.u32 %v2838, 2147483648
    %v2847 = vxor.u32 %v2839, 2147483648
    %v2848 = vxor.u32 %v2840, 2147483648
    %v2849 = vxor.u32 %v2841, 2147483648
    %v2850 = vxor.u32 %v2842, 2147483648
    %v2851 = vxor.u32 %v2843, 2147483648
    %v2852 = vmul.f32 %v2844, 1.442695
    %v2853 = vpow.pop %v2852
    %v2854 = vmul.f32 %v2845, 1.442695
    %v2855 = vpow.pop %v2854
    %v2856 = vmul.f32 %v2846, 1.442695
    %v2857 = vpow.pop %v2856
    %v2858 = vmul.f32 %v2847, 1.442695
    %v2859 = vpow.pop %v2858
    %v2860 = vmul.f32 %v2848, 1.442695
    %v2861 = vpow.pop %v2860
    %v2862 = vmul.f32 %v2849, 1.442695
    %v2863 = vpow.pop %v2862
    %v2864 = vmul.f32 %v2850, 1.442695
    %v2865 = vpow.pop %v2864
    %v2866 = vmul.f32 %v2851, 1.442695
    %v2867 = vpow.pop %v2866
    %v2868 = vadd.f32 %v2853, 1.0
    %v2869 = vadd.f32 %v2855, 1.0
    %v2870 = vadd.f32 %v2857, 1.0
    %v2871 = vadd.f32 %v2859, 1.0
    %v2872 = vadd.f32 %v2861, 1.0
    %v2873 = vadd.f32 %v2863, 1.0
    %v2874 = vadd.f32 %v2865, 1.0
    %v2875 = vadd.f32 %v2867, 1.0
    %v2876 = vrcp.pop %v2868
    %v2877 = vmul.f32 1.0, %v2876
    %v2878 = vrcp.pop %v2869
    %v2879 = vmul.f32 1.0, %v2878
    %v2880 = vrcp.pop %v2870
    %v2881 = vmul.f32 1.0, %v2880
    %v2882 = vrcp.pop %v2871
    %v2883 = vmul.f32 1.0, %v2882
    %v2884 = vrcp.pop %v2872
    %v2885 = vmul.f32 1.0, %v2884
    %v2886 = vrcp.pop %v2873
    %v2887 = vmul.f32 1.0, %v2886
    %v2888 = vrcp.pop %v2874
    %v2889 = vmul.f32 1.0, %v2888
    %v2890 = vrcp.pop %v2875
    %v2891 = vmul.f32 1.0, %v2890
    %v2892 = vmul.f32 %v2821, %v2131
    %v2893 = vmul.f32 %v2823, %v2134
    %v2894 = vmul.f32 %v2825, %v2139
    %v2895 = vmul.f32 %v2827, %v2142
    %v2896 = vmul.f32 %v2829, %v2147
    %v2897 = vmul.f32 %v2831, %v2150
    %v2898 = vmul.f32 %v2833, %v2155
    %v2899 = vmul.f32 %v2835, %v2158
    %v2900 = vadd.f32 %v2750, %v2892
    %v2901 = vadd.f32 %v2753, %v2893
    %v2902 = vadd.f32 %v2758, %v2894
    %v2903 = vadd.f32 %v2761, %v2895
    %v2904 = vadd.f32 %v2766, %v2896
    %v2905 = vadd.f32 %v2769, %v2897
    %v2906 = vadd.f32 %v2774, %v2898
    %v2907 = vadd.f32 %v2777, %v2899
    %v2908 = vtanh.pop %v2900
    %v2909 = vtanh.pop %v2901
    %v2910 = vtanh.pop %v2902
    %v2911 = vtanh.pop %v2903
    %v2912 = vtanh.pop %v2904
    %v2913 = vtanh.pop %v2905
    %v2914 = vtanh.pop %v2906
    %v2915 = vtanh.pop %v2907
    %v2916 = vsub.f32 1.0, %v2877
    %v2917 = vsub.f32 1.0, %v2879
    %v2918 = vsub.f32 1.0, %v2881
    %v2919 = vsub.f32 1.0, %v2883
    %v2920 = vsub.f32 1.0, %v2885
    %v2921 = vsub.f32 1.0, %v2887
    %v2922 = vsub.f32 1.0, %v2889
    %v2923 = vsub.f32 1.0, %v2891
    %v2924 = vmul.f32 %v2916, %v2908
    %v2925 = vmul.f32 %v2917, %v2909
    %v2926 = vmul.f32 %v2918, %v2910
    %v2927 = vmul.f32 %v2919, %v2911
    %v2928 = vmul.f32 %v2920, %v2912
    %v2929 = vmul.f32 %v2921, %v2913
    %v2930 = vmul.f32 %v2922, %v2914
    %v2931 = vmul.f32 %v2923, %v2915
    %v2932 = vmul.f32 %v2877, %v2011
    %v2933 = vmul.f32 %v2879, %v2012
    %v2934 = vmul.f32 %v2881, %v2013
    %v2935 = vmul.f32 %v2883, %v2014
    %v2936 = vmul.f32 %v2885, %v2015
    %v2937 = vmul.f32 %v2887, %v2016
    %v2938 = vmul.f32 %v2889, %v2017
    %v2939 = vmul.f32 %v2891, %v2018
    %v2940 = vadd.f32 %v2924, %v2932
    %v2941 = vadd.f32 %v2925, %v2933
    %v2942 = vadd.f32 %v2926, %v2934
    %v2943 = vadd.f32 %v2927, %v2935
    %v2944 = vadd.f32 %v2928, %v2936
    %v2945 = vadd.f32 %v2929, %v2937
    %v2946 = vadd.f32 %v2930, %v2938
    %v2947 = vadd.f32 %v2931, %v2939
    %v2948 = vpack.c.bf16 %v2941, %v2940
    %v2949 = vpack.c.bf16 %v2943, %v2942
    %v2950 = vpack.c.bf16 %v2945, %v2944
    %v2951 = vpack.c.bf16 %v2947, %v2946
    %s2952 = scalar_lea.vmem [#allocation14], 192
    %v2953 = vld [vmem:[%s2952] sm:$0xff]
    %v2954 = vld [vmem:[%s2952 + $0x8] sm:$0xf]
    %v2955 = vld [vmem:[%s2952 + $0xc] sm:$0xff]
    %v2956 = vld [vmem:[%s2952 + $0x14] sm:$0xf]
    %v2957 = vld [vmem:[%s2952 + $0x18] sm:$0xff]
    %v2958 = vld [vmem:[%s2952 + $0x20] sm:$0xf]
    %v2959 = vld [vmem:[%s2952 + $0x24] sm:$0xff]
    %v2960 = vld [vmem:[%s2952 + $0x2c] sm:$0xf]
    %v2961 = vld [vmem:[%s2952 + $0x30] sm:$0xff]
    %v2962 = vld [vmem:[%s2952 + $0x38] sm:$0xf]
    %v2963 = vld [vmem:[%s2952 + $0x3c] sm:$0xff]
    %v2964 = vld [vmem:[%s2952 + $0x44] sm:$0xf]
    %v2965 = vld [vmem:[%s2952 + $0x48] sm:$0xff]
    %v2966 = vld [vmem:[%s2952 + $0x50] sm:$0xf]
    %v2967 = vld [vmem:[%s2952 + $0x54] sm:$0xff]
    %v2968 = vld [vmem:[%s2952 + $0x5c] sm:$0xf]
    %v2969 = vld [vmem:[%s2952 + $0x60] sm:$0xff]
    %v2970 = vld [vmem:[%s2952 + $0x68] sm:$0xf]
    %v2971 = vld [vmem:[%s2952 + $0x6c] sm:$0xff]
    %v2972 = vld [vmem:[%s2952 + $0x74] sm:$0xf]
    %v2973 = vld [vmem:[%s2952 + $0x78] sm:$0xff]
    %v2974 = vld [vmem:[%s2952 + $0x80] sm:$0xf]
    %v2975 = vld [vmem:[%s2952 + $0x84] sm:$0xff]
    %v2976 = vld [vmem:[%s2952 + $0x8c] sm:$0xf]
    %v2977 = vld [vmem:[%s2952 + $0x90] sm:$0xff]
    %v2978 = vld [vmem:[%s2952 + $0x98] sm:$0xf]
    %v2979 = vld [vmem:[%s2952 + $0x9c] sm:$0xff]
    %v2980 = vld [vmem:[%s2952 + $0xa4] sm:$0xf]
    %v2981 = vld [vmem:[%s2952 + $0xa8] sm:$0xff]
    %v2982 = vld [vmem:[%s2952 + $0xb0] sm:$0xf]
    %v2983 = vld [vmem:[%s2952 + $0xb4] sm:$0xff]
    %v2984 = vld [vmem:[%s2952 + $0xbc] sm:$0xf]
    %s2985 = scalar_lea.vmem [#allocation16], 3
    %v2986 = vld [vmem:[%s2985] sm:$0x7]
    %v2988 = vlaneseq
    %v2989 = vshrl.u32 %v2988, 7
    %v2990 = vsub.s32 0, %v2989
    %v2991 = vrot.slane %v2986, %v2990
    %v2992 = vlaneseq
    %v2993 = vshrl.u32 %v2992, 7
    %v2994 = vsub.s32 1, %v2993
    %v2995 = vrot.slane %v2986, %v2994
    %v2996 = vlaneseq
    %v2997 = vshrl.u32 %v2996, 7
    %v2998 = vsub.s32 2, %v2997
    %v2999 = vrot.slane %v2986, %v2998
    %v3035 = vunpack.c.l.b16 %v2953
    %v3036 = vunpack.c.h.b16 %v2953
    %v3037 = vunpack.c.l.b16 %v2954
    %v3038 = vunpack.c.l.b16 %v2955
    %v3039 = vunpack.c.h.b16 %v2955
    %v3040 = vunpack.c.l.b16 %v2956
    %v3041 = vunpack.c.l.b16 %v2957
    %v3042 = vunpack.c.h.b16 %v2957
    %v3043 = vunpack.c.l.b16 %v2958
    %v3044 = vunpack.c.l.b16 %v2959
    %v3045 = vunpack.c.h.b16 %v2959
    %v3046 = vunpack.c.l.b16 %v2960
    %v3047 = vunpack.c.l.b16 %v2961
    %v3048 = vunpack.c.h.b16 %v2961
    %v3049 = vunpack.c.l.b16 %v2962
    %v3050 = vunpack.c.l.b16 %v2963
    %v3051 = vunpack.c.h.b16 %v2963
    %v3052 = vunpack.c.l.b16 %v2964
    %v3053 = vunpack.c.l.b16 %v2965
    %v3054 = vunpack.c.h.b16 %v2965
    %v3055 = vunpack.c.l.b16 %v2966
    %v3056 = vunpack.c.l.b16 %v2967
    %v3057 = vunpack.c.h.b16 %v2967
    %v3058 = vunpack.c.l.b16 %v2968
    %v3059 = vunpack.c.l.b16 %v2969
    %v3060 = vunpack.c.h.b16 %v2969
    %v3061 = vunpack.c.l.b16 %v2970
    %v3062 = vunpack.c.l.b16 %v2971
    %v3063 = vunpack.c.h.b16 %v2971
    %v3064 = vunpack.c.l.b16 %v2972
    %v3065 = vunpack.c.l.b16 %v2973
    %v3066 = vunpack.c.h.b16 %v2973
    %v3067 = vunpack.c.l.b16 %v2974
    %v3068 = vunpack.c.l.b16 %v2975
    %v3069 = vunpack.c.h.b16 %v2975
    %v3070 = vunpack.c.l.b16 %v2976
    %v3071 = vunpack.c.l.b16 %v2977
    %v3072 = vunpack.c.h.b16 %v2977
    %v3073 = vunpack.c.l.b16 %v2978
    %v3074 = vunpack.c.l.b16 %v2979
    %v3075 = vunpack.c.h.b16 %v2979
    %v3076 = vunpack.c.l.b16 %v2980
    %v3077 = vunpack.c.l.b16 %v2981
    %v3078 = vunpack.c.h.b16 %v2981
    %v3079 = vunpack.c.l.b16 %v2982
    %v3080 = vunpack.c.l.b16 %v2983
    %v3081 = vunpack.c.h.b16 %v2983
    %v3082 = vunpack.c.l.b16 %v2984
    %v3083 = vpack.c.b16 %v3038, %v3035
    %v3084 = vpack.c.b16 %v3039, %v3036
    %v3085 = vpack.c.b16 %v3040, %v3037
    %v3086 = vpack.c.b16 %v3044, %v3041
    %v3087 = vpack.c.b16 %v3045, %v3042
    %v3088 = vpack.c.b16 %v3046, %v3043
    %v3089 = vpack.c.b16 %v3050, %v3047
    %v3090 = vpack.c.b16 %v3051, %v3048
    %v3091 = vpack.c.b16 %v3052, %v3049
    %v3092 = vpack.c.b16 %v3056, %v3053
    %v3093 = vpack.c.b16 %v3057, %v3054
    %v3094 = vpack.c.b16 %v3058, %v3055
    %v3095 = vpack.c.b16 %v3062, %v3059
    %v3096 = vpack.c.b16 %v3063, %v3060
    %v3097 = vpack.c.b16 %v3064, %v3061
    %v3098 = vpack.c.b16 %v3068, %v3065
    %v3099 = vpack.c.b16 %v3069, %v3066
    %v3100 = vpack.c.b16 %v3070, %v3067
    %v3101 = vpack.c.b16 %v3074, %v3071
    %v3102 = vpack.c.b16 %v3075, %v3072
    %v3103 = vpack.c.b16 %v3076, %v3073
    %v3104 = vpack.c.b16 %v3080, %v3077
    %v3105 = vpack.c.b16 %v3081, %v3078
    %v3106 = vpack.c.b16 %v3082, %v3079
    %3131 = vmatprep.subr.bf16.mxu0 %v3084
    %3132 = vmatpush1.bf16.msra.mxu0 %v3083
    %3133 = vmatprep.subr.bf16.mxu0 %v3087
    %3134 = vmatpush1.bf16.msra.mxu0 %v3086
    %3135 = vmatprep.subr.bf16.mxu0 %v3090
    %3136 = vmatpush1.bf16.msra.mxu0 %v3089
    %3137 = vmatprep.subr.bf16.mxu0 %v3093
    %3138 = vmatpush1.bf16.msra.mxu0 %v3092
    %3139 = vmatprep.subr.bf16.mxu0 %v3096
    %3140 = vmatpush1.bf16.msra.mxu0 %v3095
    %3141 = vmatprep.subr.bf16.mxu0 %v3099
    %3142 = vmatpush1.bf16.msra.mxu0 %v3098
    %3143 = vmatprep.subr.bf16.mxu0 %v3102
    %3144 = vmatpush1.bf16.msra.mxu0 %v3101
    %3145 = vmatprep.subr.bf16.mxu0 %v3105
    %3146 = vmatpush1.bf16.msra.mxu0 %v3104
    %3147 = vmatprep.subr.bf16.mxu0 0
    %3148 = vmatpush1.bf16.msra.mxu0 0
    %3149 = vmatprep.subr.bf16.mxu0 0
    %3150 = vmatpush1.bf16.msra.mxu0 0
    %3151 = vmatprep.subr.bf16.mxu0 0
    %3152 = vmatpush1.bf16.msra.mxu0 0
    %3153 = vmatprep.subr.bf16.mxu0 0
    %3154 = vmatpush1.bf16.msra.mxu0 0
    %3155 = vmatprep.subr.bf16.mxu0 0
    %3156 = vmatpush1.bf16.msra.mxu0 0
    %3157 = vmatprep.subr.bf16.mxu0 0
    %3158 = vmatpush1.bf16.msra.mxu0 0
    %3159 = vmatprep.subr.bf16.mxu0 0
    %3160 = vmatpush1.bf16.msra.mxu0 0
    %3161 = vmatprep.subr.bf16.mxu0 0
    %3162 = vmatpush1.bf16.msra.mxu0 0
    %3163 = vmatprep.mubr.bf16.mxu0 0
    %3164 = vmatmul.mubr.bf16.gmra.mrb[0].mxu0 %v2948
    %v3165 = vpop.f32.mrb[0].mxu0
    %v3166 = vadd.f32 %v2991, %v3165
    %v3167 = vpop.f32.mrb[0].mxu0
    %v3168 = vadd.f32 %v2995, %v3167
    %v3169 = vpop.f32.mrb[0].mxu0
    %v3170 = vadd.f32 %v2991, %v3169
    %v3171 = vpop.f32.mrb[0].mxu0
    %v3172 = vadd.f32 %v2995, %v3171
    %3173 = vmatprep.mubr.bf16.mxu0 0
    %3174 = vmatmul.mubr.bf16.gmra.mrb[0].mxu0 %v2949
    %v3175 = vpop.f32.mrb[0].mxu0
    %v3176 = vadd.f32 %v2991, %v3175
    %v3177 = vpop.f32.mrb[0].mxu0
    %v3178 = vadd.f32 %v2995, %v3177
    %v3179 = vpop.f32.mrb[0].mxu0
    %v3180 = vadd.f32 %v2991, %v3179
    %v3181 = vpop.f32.mrb[0].mxu0
    %v3182 = vadd.f32 %v2995, %v3181
    %3183 = vmatprep.mubr.bf16.mxu0 0
    %3184 = vmatmul.mubr.bf16.gmra.mrb[0].mxu0 %v2950
    %v3185 = vpop.f32.mrb[0].mxu0
    %v3186 = vadd.f32 %v2991, %v3185
    %v3187 = vpop.f32.mrb[0].mxu0
    %v3188 = vadd.f32 %v2995, %v3187
    %v3189 = vpop.f32.mrb[0].mxu0
    %v3190 = vadd.f32 %v2991, %v3189
    %v3191 = vpop.f32.mrb[0].mxu0
    %v3192 = vadd.f32 %v2995, %v3191
    %3193 = vmatprep.mubr.bf16.mxu0 0
    %3194 = vmatmul.mubr.bf16.gmra.mrb[0].mxu0 %v2951
    %v3195 = vpop.f32.mrb[0].mxu0
    %v3196 = vadd.f32 %v2991, %v3195
    %v3197 = vpop.f32.mrb[0].mxu0
    %v3198 = vadd.f32 %v2995, %v3197
    %v3199 = vpop.f32.mrb[0].mxu0
    %v3200 = vadd.f32 %v2991, %v3199
    %v3201 = vpop.f32.mrb[0].mxu0
    %v3202 = vadd.f32 %v2995, %v3201
    %3203 = vdwg.mxu0
    %3204 = vmatprep.subr.bf16.mxu0 0
    %3205 = vmatpush1.bf16.msra.mxu0 %v3085
    %3206 = vmatprep.subr.bf16.mxu0 0
    %3207 = vmatpush1.bf16.msra.mxu0 %v3088
    %3208 = vmatprep.subr.bf16.mxu0 0
    %3209 = vmatpush1.bf16.msra.mxu0 %v3091
    %3210 = vmatprep.subr.bf16.mxu0 0
    %3211 = vmatpush1.bf16.msra.mxu0 %v3094
    %3212 = vmatprep.subr.bf16.mxu0 0
    %3213 = vmatpush1.bf16.msra.mxu0 %v3097
    %3214 = vmatprep.subr.bf16.mxu0 0
    %3215 = vmatpush1.bf16.msra.mxu0 %v3100
    %3216 = vmatprep.subr.bf16.mxu0 0
    %3217 = vmatpush1.bf16.msra.mxu0 %v3103
    %3218 = vmatprep.subr.bf16.mxu0 0
    %3219 = vmatpush1.bf16.msra.mxu0 %v3106
    %3220 = vmatprep.subr.bf16.mxu0 0
    %3221 = vmatpush1.bf16.msra.mxu0 0
    %3222 = vmatprep.subr.bf16.mxu0 0
    %3223 = vmatpush1.bf16.msra.mxu0 0
    %3224 = vmatprep.subr.bf16.mxu0 0
    %3225 = vmatpush1.bf16.msra.mxu0 0
    %3226 = vmatprep.subr.bf16.mxu0 0
    %3227 = vmatpush1.bf16.msra.mxu0 0
    %3228 = vmatprep.subr.bf16.mxu0 0
    %3229 = vmatpush1.bf16.msra.mxu0 0
    %3230 = vmatprep.subr.bf16.mxu0 0
    %3231 = vmatpush1.bf16.msra.mxu0 0
    %3232 = vmatprep.subr.bf16.mxu0 0
    %3233 = vmatpush1.bf16.msra.mxu0 0
    %3234 = vmatprep.subr.bf16.mxu0 0
    %3235 = vmatpush1.bf16.msra.mxu0 0
    %3236 = vmatprep.mubr.bf16.mxu0 0
    %3237 = vmatmul.mubr.bf16.gmra.mrb[0].mxu0 %v2948
    %v3238 = vpop.f32.mrb[0].mxu0
    %v3239 = vadd.f32 %v2999, %v3238
    %v3240 = vpop.f32.mrb[0].mxu0
    %v3241 = vpop.f32.mrb[0].mxu0
    %v3242 = vadd.f32 %v2999, %v3241
    %v3243 = vpop.f32.mrb[0].mxu0
    %3244 = vmatprep.mubr.bf16.mxu0 0
    %3245 = vmatmul.mubr.bf16.gmra.mrb[0].mxu0 %v2949
    %v3246 = vpop.f32.mrb[0].mxu0
    %v3247 = vadd.f32 %v2999, %v3246
    %v3248 = vpop.f32.mrb[0].mxu0
    %v3249 = vpop.f32.mrb[0].mxu0
    %v3250 = vadd.f32 %v2999, %v3249
    %v3251 = vpop.f32.mrb[0].mxu0
    %3252 = vmatprep.mubr.bf16.mxu0 0
    %3253 = vmatmul.mubr.bf16.gmra.mrb[0].mxu0 %v2950
    %v3254 = vpop.f32.mrb[0].mxu0
    %v3255 = vadd.f32 %v2999, %v3254
    %v3256 = vpop.f32.mrb[0].mxu0
    %v3257 = vpop.f32.mrb[0].mxu0
    %v3258 = vadd.f32 %v2999, %v3257
    %v3259 = vpop.f32.mrb[0].mxu0
    %3260 = vmatprep.mubr.bf16.mxu0 0
    %3261 = vmatmul.mubr.bf16.gmra.mrb[0].mxu0 %v2951
    %v3262 = vpop.f32.mrb[0].mxu0
    %v3263 = vadd.f32 %v2999, %v3262
    %v3264 = vpop.f32.mrb[0].mxu0
    %v3265 = vpop.f32.mrb[0].mxu0
    %v3266 = vadd.f32 %v2999, %v3265
    %v3267 = vpop.f32.mrb[0].mxu0
    %3268 = vdwg.mxu0
    %3269 = vmatprep.subr.bf16.mxu0 0
    %3270 = vmatpush1.bf16.msra.mxu0 %v2948
    %3271 = vmatprep.subr.bf16.mxu0 0
    %3272 = vmatpush1.bf16.msra.mxu0 %v2949
    %3273 = vmatprep.subr.bf16.mxu0 0
    %3274 = vmatpush1.bf16.msra.mxu0 %v2950
    %3275 = vmatprep.subr.bf16.mxu0 0
    %3276 = vmatpush1.bf16.msra.mxu0 %v2951
    %3277 = vmatprep.subr.bf16.mxu0 0
    %3278 = vmatpush1.bf16.msra.mxu0 0
    %3279 = vmatprep.subr.bf16.mxu0 0
    %3280 = vmatpush1.bf16.msra.mxu0 0
    %3281 = vmatprep.subr.bf16.mxu0 0
    %3282 = vmatpush1.bf16.msra.mxu0 0
    %3283 = vmatprep.subr.bf16.mxu0 0
    %3284 = vmatpush1.bf16.msra.mxu0 0
    %3285 = vmatprep.subr.bf16.mxu0 0
    %3286 = vmatpush1.bf16.msra.mxu0 0
    %3287 = vmatprep.subr.bf16.mxu0 0
    %3288 = vmatpush1.bf16.msra.mxu0 0
    %3289 = vmatprep.subr.bf16.mxu0 0
    %3290 = vmatpush1.bf16.msra.mxu0 0
    %3291 = vmatprep.subr.bf16.mxu0 0
    %3292 = vmatpush1.bf16.msra.mxu0 0
    %3293 = vmatprep.subr.bf16.mxu0 0
    %3294 = vmatpush1.bf16.msra.mxu0 0
    %3295 = vmatprep.subr.bf16.mxu0 0
    %3296 = vmatpush1.bf16.msra.mxu0 0
    %3297 = vmatprep.subr.bf16.mxu0 0
    %3298 = vmatpush1.bf16.msra.mxu0 0
    %3299 = vmatprep.subr.bf16.mxu0 0
    %3300 = vmatpush1.bf16.msra.mxu0 0
    %3301 = vmatprep.mubr.bf16.mxu0 0
    %3302 = vmatmul.mubr.bf16.gmra.mrb[0].mxu0 %v693
    %v3303 = vpop.f32.mrb[0].mxu0
    %v3304 = vadd.f32 0.0, %v3303
    %v3305 = vpop.f32.mrb[0].mxu0
    %v3306 = vpop.f32.mrb[0].mxu0
    %v3307 = vadd.f32 0.0, %v3306
    %v3308 = vpop.f32.mrb[0].mxu0
    %3309 = vmatprep.mubr.bf16.mxu0 0
    %3310 = vmatmul.mubr.bf16.gmra.mrb[0].mxu0 %v696
    %v3311 = vpop.f32.mrb[0].mxu0
    %v3312 = vadd.f32 0.0, %v3311
    %v3313 = vpop.f32.mrb[0].mxu0
    %v3314 = vpop.f32.mrb[0].mxu0
    %v3315 = vadd.f32 0.0, %v3314
    %v3316 = vpop.f32.mrb[0].mxu0
    %3317 = vmatprep.mubr.bf16.mxu0 0
    %3318 = vmatmul.mubr.bf16.gmra.mrb[0].mxu0 %v699
    %v3319 = vpop.f32.mrb[0].mxu0
    %v3320 = vadd.f32 0.0, %v3319
    %v3321 = vpop.f32.mrb[0].mxu0
    %v3322 = vpop.f32.mrb[0].mxu0
    %v3323 = vadd.f32 0.0, %v3322
    %v3324 = vpop.f32.mrb[0].mxu0
    %3325 = vmatprep.mubr.bf16.mxu0 0
    %3326 = vmatmul.mubr.bf16.gmra.mrb[0].mxu0 %v702
    %v3327 = vpop.f32.mrb[0].mxu0
    %v3328 = vadd.f32 0.0, %v3327
    %v3329 = vpop.f32.mrb[0].mxu0
    %v3330 = vpop.f32.mrb[0].mxu0
    %v3331 = vadd.f32 0.0, %v3330
    %v3332 = vpop.f32.mrb[0].mxu0
    %3333 = vmatprep.mubr.bf16.mxu0 0
    %3334 = vmatmul.mubr.bf16.gmra.mrb[0].mxu0 %v705
    %v3335 = vpop.f32.mrb[0].mxu0
    %v3336 = vadd.f32 0.0, %v3335
    %v3337 = vpop.f32.mrb[0].mxu0
    %v3338 = vpop.f32.mrb[0].mxu0
    %v3339 = vadd.f32 0.0, %v3338
    %v3340 = vpop.f32.mrb[0].mxu0
    %3341 = vmatprep.mubr.bf16.mxu0 0
    %3342 = vmatmul.mubr.bf16.gmra.mrb[0].mxu0 %v708
    %v3343 = vpop.f32.mrb[0].mxu0
    %v3344 = vadd.f32 0.0, %v3343
    %v3345 = vpop.f32.mrb[0].mxu0
    %v3346 = vpop.f32.mrb[0].mxu0
    %v3347 = vadd.f32 0.0, %v3346
    %v3348 = vpop.f32.mrb[0].mxu0
    %3349 = vmatprep.mubr.bf16.mxu0 0
    %3350 = vmatmul.mubr.bf16.gmra.mrb[0].mxu0 %v711
    %v3351 = vpop.f32.mrb[0].mxu0
    %v3352 = vadd.f32 0.0, %v3351
    %v3353 = vpop.f32.mrb[0].mxu0
    %v3354 = vpop.f32.mrb[0].mxu0
    %v3355 = vadd.f32 0.0, %v3354
    %v3356 = vpop.f32.mrb[0].mxu0
    %3357 = vmatprep.mubr.bf16.mxu0 0
    %3358 = vmatmul.mubr.bf16.gmra.mrb[0].mxu0 %v714
    %v3359 = vpop.f32.mrb[0].mxu0
    %v3360 = vadd.f32 0.0, %v3359
    %v3361 = vpop.f32.mrb[0].mxu0
    %v3362 = vpop.f32.mrb[0].mxu0
    %v3363 = vadd.f32 0.0, %v3362
    %v3364 = vpop.f32.mrb[0].mxu0
    %3365 = vmatprep.mubr.bf16.mxu0 0
    %3366 = vmatmul.mubr.bf16.gmra.mrb[0].mxu0 %v717
    %v3367 = vpop.f32.mrb[0].mxu0
    %v3368 = vadd.f32 0.0, %v3367
    %v3369 = vpop.f32.mrb[0].mxu0
    %v3370 = vpop.f32.mrb[0].mxu0
    %v3371 = vadd.f32 0.0, %v3370
    %v3372 = vpop.f32.mrb[0].mxu0
    %3373 = vmatprep.mubr.bf16.mxu0 0
    %3374 = vmatmul.mubr.bf16.gmra.mrb[0].mxu0 %v720
    %v3375 = vpop.f32.mrb[0].mxu0
    %v3376 = vadd.f32 0.0, %v3375
    %v3377 = vpop.f32.mrb[0].mxu0
    %v3378 = vpop.f32.mrb[0].mxu0
    %v3379 = vadd.f32 0.0, %v3378
    %v3380 = vpop.f32.mrb[0].mxu0
    %3381 = vmatprep.mubr.bf16.mxu0 0
    %3382 = vmatmul.mubr.bf16.gmra.mrb[0].mxu0 %v723
    %v3383 = vpop.f32.mrb[0].mxu0
    %v3384 = vadd.f32 0.0, %v3383
    %v3385 = vpop.f32.mrb[0].mxu0
    %v3386 = vpop.f32.mrb[0].mxu0
    %v3387 = vadd.f32 0.0, %v3386
    %v3388 = vpop.f32.mrb[0].mxu0
    %3389 = vmatprep.mubr.bf16.mxu0 0
    %3390 = vmatmul.mubr.bf16.gmra.mrb[0].mxu0 %v726
    %v3391 = vpop.f32.mrb[0].mxu0
    %v3392 = vadd.f32 0.0, %v3391
    %v3393 = vpop.f32.mrb[0].mxu0
    %v3394 = vpop.f32.mrb[0].mxu0
    %v3395 = vadd.f32 0.0, %v3394
    %v3396 = vpop.f32.mrb[0].mxu0
    %3397 = vmatprep.mubr.bf16.mxu0 0
    %3398 = vmatmul.mubr.bf16.gmra.mrb[0].mxu0 %v729
    %v3399 = vpop.f32.mrb[0].mxu0
    %v3400 = vadd.f32 0.0, %v3399
    %v3401 = vpop.f32.mrb[0].mxu0
    %v3402 = vpop.f32.mrb[0].mxu0
    %v3403 = vadd.f32 0.0, %v3402
    %v3404 = vpop.f32.mrb[0].mxu0
    %3405 = vmatprep.mubr.bf16.mxu0 0
    %3406 = vmatmul.mubr.bf16.gmra.mrb[0].mxu0 %v732
    %v3407 = vpop.f32.mrb[0].mxu0
    %v3408 = vadd.f32 0.0, %v3407
    %v3409 = vpop.f32.mrb[0].mxu0
    %v3410 = vpop.f32.mrb[0].mxu0
    %v3411 = vadd.f32 0.0, %v3410
    %v3412 = vpop.f32.mrb[0].mxu0
    %3413 = vmatprep.mubr.bf16.mxu0 0
    %3414 = vmatmul.mubr.bf16.gmra.mrb[0].mxu0 %v735
    %v3415 = vpop.f32.mrb[0].mxu0
    %v3416 = vadd.f32 0.0, %v3415
    %v3417 = vpop.f32.mrb[0].mxu0
    %v3418 = vpop.f32.mrb[0].mxu0
    %v3419 = vadd.f32 0.0, %v3418
    %v3420 = vpop.f32.mrb[0].mxu0
    %3421 = vmatprep.mubr.bf16.mxu0 0
    %3422 = vmatmul.mubr.bf16.gmra.mrb[0].mxu0 %v738
    %v3423 = vpop.f32.mrb[0].mxu0
    %v3424 = vadd.f32 0.0, %v3423
    %v3425 = vpop.f32.mrb[0].mxu0
    %v3426 = vpop.f32.mrb[0].mxu0
    %v3427 = vadd.f32 0.0, %v3426
    %v3428 = vpop.f32.mrb[0].mxu0
    %3429 = vdwg.mxu0
    %v3430 = vpack.c.bf16 %v3307, %v3304
    %v3431 = vpack.c.bf16 %v3315, %v3312
    %v3432 = vpack.c.bf16 %v3323, %v3320
    %v3433 = vpack.c.bf16 %v3331, %v3328
    %v3434 = vpack.c.bf16 %v3339, %v3336
    %v3435 = vpack.c.bf16 %v3347, %v3344
    %v3436 = vpack.c.bf16 %v3355, %v3352
    %v3437 = vpack.c.bf16 %v3363, %v3360
    %v3438 = vpack.c.bf16 %v3371, %v3368
    %v3439 = vpack.c.bf16 %v3379, %v3376
    %v3440 = vpack.c.bf16 %v3387, %v3384
    %v3441 = vpack.c.bf16 %v3395, %v3392
    %v3442 = vpack.c.bf16 %v3403, %v3400
    %v3443 = vpack.c.bf16 %v3411, %v3408
    %v3444 = vpack.c.bf16 %v3419, %v3416
    %v3445 = vpack.c.bf16 %v3427, %v3424
    %s3446 = scalar_lea.vmem [#allocation8], 64
    %v3447 = vld [vmem:[%s3446] sm:$0xff]
    %v3448 = vld [vmem:[%s3446 + $0x8] sm:$0xff]
    %v3449 = vld [vmem:[%s3446 + $0x10] sm:$0xff]
    %v3450 = vld [vmem:[%s3446 + $0x18] sm:$0xff]
    %v3451 = vld [vmem:[%s3446 + $0x20] sm:$0xff]
    %v3452 = vld [vmem:[%s3446 + $0x28] sm:$0xff]
    %v3453 = vld [vmem:[%s3446 + $0x30] sm:$0xff]
    %v3454 = vld [vmem:[%s3446 + $0x38] sm:$0xff]
    %s3455 = scalar_lea.vmem [#allocation10], 256
    %v3456 = vld [vmem:[%s3455] sm:$0xf]
    %v3457 = vld [vmem:[%s3455 + $0x4] sm:$0xf]
    %v3458 = vld [vmem:[%s3455 + $0x8] sm:$0xf]
    %v3459 = vld [vmem:[%s3455 + $0xc] sm:$0xf]
    %v3460 = vld [vmem:[%s3455 + $0x10] sm:$0xf]
    %v3461 = vld [vmem:[%s3455 + $0x14] sm:$0xf]
    %v3462 = vld [vmem:[%s3455 + $0x18] sm:$0xf]
    %v3463 = vld [vmem:[%s3455 + $0x1c] sm:$0xf]
    %v3464 = vld [vmem:[%s3455 + $0x20] sm:$0xf]
    %v3465 = vld [vmem:[%s3455 + $0x24] sm:$0xf]
    %v3466 = vld [vmem:[%s3455 + $0x28] sm:$0xf]
    %v3467 = vld [vmem:[%s3455 + $0x2c] sm:$0xf]
    %v3468 = vld [vmem:[%s3455 + $0x30] sm:$0xf]
    %v3469 = vld [vmem:[%s3455 + $0x34] sm:$0xf]
    %v3470 = vld [vmem:[%s3455 + $0x38] sm:$0xf]
    %v3471 = vld [vmem:[%s3455 + $0x3c] sm:$0xf]
    %v3488 = vunpack.c.l.b16 %v3456
    %v3489 = vunpack.c.l.b16 %v3457
    %v3490 = vunpack.c.l.b16 %v3458
    %v3491 = vunpack.c.l.b16 %v3459
    %v3492 = vunpack.c.l.b16 %v3460
    %v3493 = vunpack.c.l.b16 %v3461
    %v3494 = vunpack.c.l.b16 %v3462
    %v3495 = vunpack.c.l.b16 %v3463
    %v3496 = vunpack.c.l.b16 %v3464
    %v3497 = vunpack.c.l.b16 %v3465
    %v3498 = vunpack.c.l.b16 %v3466
    %v3499 = vunpack.c.l.b16 %v3467
    %v3500 = vunpack.c.l.b16 %v3468
    %v3501 = vunpack.c.l.b16 %v3469
    %v3502 = vunpack.c.l.b16 %v3470
    %v3503 = vunpack.c.l.b16 %v3471
    %v3504 = vpack.c.b16 %v3489, %v3488
    %v3505 = vpack.c.b16 %v3491, %v3490
    %v3506 = vpack.c.b16 %v3493, %v3492
    %v3507 = vpack.c.b16 %v3495, %v3494
    %v3508 = vpack.c.b16 %v3497, %v3496
    %v3509 = vpack.c.b16 %v3499, %v3498
    %v3510 = vpack.c.b16 %v3501, %v3500
    %v3511 = vpack.c.b16 %v3503, %v3502
    %3520 = vmatprep.subr.bf16.mxu0 0
    %3521 = vmatpush1.bf16.msra.mxu0 %v3504
    %3522 = vmatprep.subr.bf16.mxu0 0
    %3523 = vmatpush1.bf16.msra.mxu0 %v3505
    %3524 = vmatprep.subr.bf16.mxu0 0
    %3525 = vmatpush1.bf16.msra.mxu0 %v3506
    %3526 = vmatprep.subr.bf16.mxu0 0
    %3527 = vmatpush1.bf16.msra.mxu0 %v3507
    %3528 = vmatprep.subr.bf16.mxu0 0
    %3529 = vmatpush1.bf16.msra.mxu0 %v3508
    %3530 = vmatprep.subr.bf16.mxu0 0
    %3531 = vmatpush1.bf16.msra.mxu0 %v3509
    %3532 = vmatprep.subr.bf16.mxu0 0
    %3533 = vmatpush1.bf16.msra.mxu0 %v3510
    %3534 = vmatprep.subr.bf16.mxu0 0
    %3535 = vmatpush1.bf16.msra.mxu0 %v3511
    %3536 = vmatprep.subr.bf16.mxu0 0
    %3537 = vmatpush1.bf16.msra.mxu0 0
    %3538 = vmatprep.subr.bf16.mxu0 0
    %3539 = vmatpush1.bf16.msra.mxu0 0
    %3540 = vmatprep.subr.bf16.mxu0 0
    %3541 = vmatpush1.bf16.msra.mxu0 0
    %3542 = vmatprep.subr.bf16.mxu0 0
    %3543 = vmatpush1.bf16.msra.mxu0 0
    %3544 = vmatprep.subr.bf16.mxu0 0
    %3545 = vmatpush1.bf16.msra.mxu0 0
    %3546 = vmatprep.subr.bf16.mxu0 0
    %3547 = vmatpush1.bf16.msra.mxu0 0
    %3548 = vmatprep.subr.bf16.mxu0 0
    %3549 = vmatpush1.bf16.msra.mxu0 0
    %3550 = vmatprep.subr.bf16.mxu0 0
    %3551 = vmatpush1.bf16.msra.mxu0 0
    %3552 = vmatprep.mubr.bf16.mxu0 0
    %3553 = vmatmul.mubr.bf16.gmra.mrb[0].mxu0 %v3430
    %v3554 = vpop.f32.mrb[0].mxu0
    %v3555 = vadd.f32 0.0, %v3554
    %v3556 = vpop.f32.mrb[0].mxu0
    %v3557 = vpop.f32.mrb[0].mxu0
    %v3558 = vadd.f32 0.0, %v3557
    %v3559 = vpop.f32.mrb[0].mxu0
    %3560 = vmatprep.mubr.bf16.mxu0 0
    %3561 = vmatmul.mubr.bf16.gmra.mrb[0].mxu0 %v3431
    %v3562 = vpop.f32.mrb[0].mxu0
    %v3563 = vadd.f32 0.0, %v3562
    %v3564 = vpop.f32.mrb[0].mxu0
    %v3565 = vpop.f32.mrb[0].mxu0
    %v3566 = vadd.f32 0.0, %v3565
    %v3567 = vpop.f32.mrb[0].mxu0
    %3568 = vmatprep.mubr.bf16.mxu0 0
    %3569 = vmatmul.mubr.bf16.gmra.mrb[0].mxu0 %v3432
    %v3570 = vpop.f32.mrb[0].mxu0
    %v3571 = vadd.f32 0.0, %v3570
    %v3572 = vpop.f32.mrb[0].mxu0
    %v3573 = vpop.f32.mrb[0].mxu0
    %v3574 = vadd.f32 0.0, %v3573
    %v3575 = vpop.f32.mrb[0].mxu0
    %3576 = vmatprep.mubr.bf16.mxu0 0
    %3577 = vmatmul.mubr.bf16.gmra.mrb[0].mxu0 %v3433
    %v3578 = vpop.f32.mrb[0].mxu0
    %v3579 = vadd.f32 0.0, %v3578
    %v3580 = vpop.f32.mrb[0].mxu0
    %v3581 = vpop.f32.mrb[0].mxu0
    %v3582 = vadd.f32 0.0, %v3581
    %v3583 = vpop.f32.mrb[0].mxu0
    %3584 = vdwg.mxu0
    %v3585 = vadd.f32 %v3447, %v3555
    %v3586 = vadd.f32 %v3448, %v3558
    %v3587 = vadd.f32 %v3449, %v3563
    %v3588 = vadd.f32 %v3450, %v3566
    %v3589 = vadd.f32 %v3451, %v3571
    %v3590 = vadd.f32 %v3452, %v3574
    %v3591 = vadd.f32 %v3453, %v3579
    %v3592 = vadd.f32 %v3454, %v3582
    %s3593 = scalar_lea.vmem [#allocation10], 320
    %v3594 = vld [vmem:[%s3593] sm:$0xf]
    %v3595 = vld [vmem:[%s3593 + $0x4] sm:$0xf]
    %v3596 = vld [vmem:[%s3593 + $0x8] sm:$0xf]
    %v3597 = vld [vmem:[%s3593 + $0xc] sm:$0xf]
    %v3598 = vld [vmem:[%s3593 + $0x10] sm:$0xf]
    %v3599 = vld [vmem:[%s3593 + $0x14] sm:$0xf]
    %v3600 = vld [vmem:[%s3593 + $0x18] sm:$0xf]
    %v3601 = vld [vmem:[%s3593 + $0x1c] sm:$0xf]
    %v3602 = vld [vmem:[%s3593 + $0x20] sm:$0xf]
    %v3603 = vld [vmem:[%s3593 + $0x24] sm:$0xf]
    %v3604 = vld [vmem:[%s3593 + $0x28] sm:$0xf]
    %v3605 = vld [vmem:[%s3593 + $0x2c] sm:$0xf]
    %v3606 = vld [vmem:[%s3593 + $0x30] sm:$0xf]
    %v3607 = vld [vmem:[%s3593 + $0x34] sm:$0xf]
    %v3608 = vld [vmem:[%s3593 + $0x38] sm:$0xf]
    %v3609 = vld [vmem:[%s3593 + $0x3c] sm:$0xf]
    %v3626 = vunpack.c.l.b16 %v3594
    %v3627 = vunpack.c.l.b16 %v3595
    %v3628 = vunpack.c.l.b16 %v3596
    %v3629 = vunpack.c.l.b16 %v3597
    %v3630 = vunpack.c.l.b16 %v3598
    %v3631 = vunpack.c.l.b16 %v3599
    %v3632 = vunpack.c.l.b16 %v3600
    %v3633 = vunpack.c.l.b16 %v3601
    %v3634 = vunpack.c.l.b16 %v3602
    %v3635 = vunpack.c.l.b16 %v3603
    %v3636 = vunpack.c.l.b16 %v3604
    %v3637 = vunpack.c.l.b16 %v3605
    %v3638 = vunpack.c.l.b16 %v3606
    %v3639 = vunpack.c.l.b16 %v3607
    %v3640 = vunpack.c.l.b16 %v3608
    %v3641 = vunpack.c.l.b16 %v3609
    %v3642 = vpack.c.b16 %v3627, %v3626
    %v3643 = vpack.c.b16 %v3629, %v3628
    %v3644 = vpack.c.b16 %v3631, %v3630
    %v3645 = vpack.c.b16 %v3633, %v3632
    %v3646 = vpack.c.b16 %v3635, %v3634
    %v3647 = vpack.c.b16 %v3637, %v3636
    %v3648 = vpack.c.b16 %v3639, %v3638
    %v3649 = vpack.c.b16 %v3641, %v3640
    %3658 = vmatprep.subr.bf16.mxu0 0
    %3659 = vmatpush1.bf16.msra.mxu0 %v3642
    %3660 = vmatprep.subr.bf16.mxu0 0
    %3661 = vmatpush1.bf16.msra.mxu0 %v3643
    %3662 = vmatprep.subr.bf16.mxu0 0
    %3663 = vmatpush1.bf16.msra.mxu0 %v3644
    %3664 = vmatprep.subr.bf16.mxu0 0
    %3665 = vmatpush1.bf16.msra.mxu0 %v3645
    %3666 = vmatprep.subr.bf16.mxu0 0
    %3667 = vmatpush1.bf16.msra.mxu0 %v3646
    %3668 = vmatprep.subr.bf16.mxu0 0
    %3669 = vmatpush1.bf16.msra.mxu0 %v3647
    %3670 = vmatprep.subr.bf16.mxu0 0
    %3671 = vmatpush1.bf16.msra.mxu0 %v3648
    %3672 = vmatprep.subr.bf16.mxu0 0
    %3673 = vmatpush1.bf16.msra.mxu0 %v3649
    %3674 = vmatprep.subr.bf16.mxu0 0
    %3675 = vmatpush1.bf16.msra.mxu0 0
    %3676 = vmatprep.subr.bf16.mxu0 0
    %3677 = vmatpush1.bf16.msra.mxu0 0
    %3678 = vmatprep.subr.bf16.mxu0 0
    %3679 = vmatpush1.bf16.msra.mxu0 0
    %3680 = vmatprep.subr.bf16.mxu0 0
    %3681 = vmatpush1.bf16.msra.mxu0 0
    %3682 = vmatprep.subr.bf16.mxu0 0
    %3683 = vmatpush1.bf16.msra.mxu0 0
    %3684 = vmatprep.subr.bf16.mxu0 0
    %3685 = vmatpush1.bf16.msra.mxu0 0
    %3686 = vmatprep.subr.bf16.mxu0 0
    %3687 = vmatpush1.bf16.msra.mxu0 0
    %3688 = vmatprep.subr.bf16.mxu0 0
    %3689 = vmatpush1.bf16.msra.mxu0 0
    %3690 = vmatprep.mubr.bf16.mxu0 0
    %3691 = vmatmul.mubr.bf16.gmra.mrb[0].mxu0 %v3434
    %v3692 = vpop.f32.mrb[0].mxu0
    %v3693 = vadd.f32 0.0, %v3692
    %v3694 = vpop.f32.mrb[0].mxu0
    %v3695 = vpop.f32.mrb[0].mxu0
    %v3696 = vadd.f32 0.0, %v3695
    %v3697 = vpop.f32.mrb[0].mxu0
    %3698 = vmatprep.mubr.bf16.mxu0 0
    %3699 = vmatmul.mubr.bf16.gmra.mrb[0].mxu0 %v3435
    %v3700 = vpop.f32.mrb[0].mxu0
    %v3701 = vadd.f32 0.0, %v3700
    %v3702 = vpop.f32.mrb[0].mxu0
    %v3703 = vpop.f32.mrb[0].mxu0
    %v3704 = vadd.f32 0.0, %v3703
    %v3705 = vpop.f32.mrb[0].mxu0
    %3706 = vmatprep.mubr.bf16.mxu0 0
    %3707 = vmatmul.mubr.bf16.gmra.mrb[0].mxu0 %v3436
    %v3708 = vpop.f32.mrb[0].mxu0
    %v3709 = vadd.f32 0.0, %v3708
    %v3710 = vpop.f32.mrb[0].mxu0
    %v3711 = vpop.f32.mrb[0].mxu0
    %v3712 = vadd.f32 0.0, %v3711
    %v3713 = vpop.f32.mrb[0].mxu0
    %3714 = vmatprep.mubr.bf16.mxu0 0
    %3715 = vmatmul.mubr.bf16.gmra.mrb[0].mxu0 %v3437
    %v3716 = vpop.f32.mrb[0].mxu0
    %v3717 = vadd.f32 0.0, %v3716
    %v3718 = vpop.f32.mrb[0].mxu0
    %v3719 = vpop.f32.mrb[0].mxu0
    %v3720 = vadd.f32 0.0, %v3719
    %v3721 = vpop.f32.mrb[0].mxu0
    %3722 = vdwg.mxu0
    %v3723 = vadd.f32 %v3585, %v3693
    %v3724 = vadd.f32 %v3586, %v3696
    %v3725 = vadd.f32 %v3587, %v3701
    %v3726 = vadd.f32 %v3588, %v3704
    %v3727 = vadd.f32 %v3589, %v3709
    %v3728 = vadd.f32 %v3590, %v3712
    %v3729 = vadd.f32 %v3591, %v3717
    %v3730 = vadd.f32 %v3592, %v3720
    %s3731 = scalar_lea.vmem [#allocation10], 384
    %v3732 = vld [vmem:[%s3731] sm:$0xf]
    %v3733 = vld [vmem:[%s3731 + $0x4] sm:$0xf]
    %v3734 = vld [vmem:[%s3731 + $0x8] sm:$0xf]
    %v3735 = vld [vmem:[%s3731 + $0xc] sm:$0xf]
    %v3736 = vld [vmem:[%s3731 + $0x10] sm:$0xf]
    %v3737 = vld [vmem:[%s3731 + $0x14] sm:$0xf]
    %v3738 = vld [vmem:[%s3731 + $0x18] sm:$0xf]
    %v3739 = vld [vmem:[%s3731 + $0x1c] sm:$0xf]
    %v3740 = vld [vmem:[%s3731 + $0x20] sm:$0xf]
    %v3741 = vld [vmem:[%s3731 + $0x24] sm:$0xf]
    %v3742 = vld [vmem:[%s3731 + $0x28] sm:$0xf]
    %v3743 = vld [vmem:[%s3731 + $0x2c] sm:$0xf]
    %v3744 = vld [vmem:[%s3731 + $0x30] sm:$0xf]
    %v3745 = vld [vmem:[%s3731 + $0x34] sm:$0xf]
    %v3746 = vld [vmem:[%s3731 + $0x38] sm:$0xf]
    %v3747 = vld [vmem:[%s3731 + $0x3c] sm:$0xf]
    %v3764 = vunpack.c.l.b16 %v3732
    %v3765 = vunpack.c.l.b16 %v3733
    %v3766 = vunpack.c.l.b16 %v3734
    %v3767 = vunpack.c.l.b16 %v3735
    %v3768 = vunpack.c.l.b16 %v3736
    %v3769 = vunpack.c.l.b16 %v3737
    %v3770 = vunpack.c.l.b16 %v3738
    %v3771 = vunpack.c.l.b16 %v3739
    %v3772 = vunpack.c.l.b16 %v3740
    %v3773 = vunpack.c.l.b16 %v3741
    %v3774 = vunpack.c.l.b16 %v3742
    %v3775 = vunpack.c.l.b16 %v3743
    %v3776 = vunpack.c.l.b16 %v3744
    %v3777 = vunpack.c.l.b16 %v3745
    %v3778 = vunpack.c.l.b16 %v3746
    %v3779 = vunpack.c.l.b16 %v3747
    %v3780 = vpack.c.b16 %v3765, %v3764
    %v3781 = vpack.c.b16 %v3767, %v3766
    %v3782 = vpack.c.b16 %v3769, %v3768
    %v3783 = vpack.c.b16 %v3771, %v3770
    %v3784 = vpack.c.b16 %v3773, %v3772
    %v3785 = vpack.c.b16 %v3775, %v3774
    %v3786 = vpack.c.b16 %v3777, %v3776
    %v3787 = vpack.c.b16 %v3779, %v3778
    %3796 = vmatprep.subr.bf16.mxu0 0
    %3797 = vmatpush1.bf16.msra.mxu0 %v3780
    %3798 = vmatprep.subr.bf16.mxu0 0
    %3799 = vmatpush1.bf16.msra.mxu0 %v3781
    %3800 = vmatprep.subr.bf16.mxu0 0
    %3801 = vmatpush1.bf16.msra.mxu0 %v3782
    %3802 = vmatprep.subr.bf16.mxu0 0
    %3803 = vmatpush1.bf16.msra.mxu0 %v3783
    %3804 = vmatprep.subr.bf16.mxu0 0
    %3805 = vmatpush1.bf16.msra.mxu0 %v3784
    %3806 = vmatprep.subr.bf16.mxu0 0
    %3807 = vmatpush1.bf16.msra.mxu0 %v3785
    %3808 = vmatprep.subr.bf16.mxu0 0
    %3809 = vmatpush1.bf16.msra.mxu0 %v3786
    %3810 = vmatprep.subr.bf16.mxu0 0
    %3811 = vmatpush1.bf16.msra.mxu0 %v3787
    %3812 = vmatprep.subr.bf16.mxu0 0
    %3813 = vmatpush1.bf16.msra.mxu0 0
    %3814 = vmatprep.subr.bf16.mxu0 0
    %3815 = vmatpush1.bf16.msra.mxu0 0
    %3816 = vmatprep.subr.bf16.mxu0 0
    %3817 = vmatpush1.bf16.msra.mxu0 0
    %3818 = vmatprep.subr.bf16.mxu0 0
    %3819 = vmatpush1.bf16.msra.mxu0 0
    %3820 = vmatprep.subr.bf16.mxu0 0
    %3821 = vmatpush1.bf16.msra.mxu0 0
    %3822 = vmatprep.subr.bf16.mxu0 0
    %3823 = vmatpush1.bf16.msra.mxu0 0
    %3824 = vmatprep.subr.bf16.mxu0 0
    %3825 = vmatpush1.bf16.msra.mxu0 0
    %3826 = vmatprep.subr.bf16.mxu0 0
    %3827 = vmatpush1.bf16.msra.mxu0 0
    %3828 = vmatprep.mubr.bf16.mxu0 0
    %3829 = vmatmul.mubr.bf16.gmra.mrb[0].mxu0 %v3438
    %v3830 = vpop.f32.mrb[0].mxu0
    %v3831 = vadd.f32 0.0, %v3830
    %v3832 = vpop.f32.mrb[0].mxu0
    %v3833 = vpop.f32.mrb[0].mxu0
    %v3834 = vadd.f32 0.0, %v3833
    %v3835 = vpop.f32.mrb[0].mxu0
    %3836 = vmatprep.mubr.bf16.mxu0 0
    %3837 = vmatmul.mubr.bf16.gmra.mrb[0].mxu0 %v3439
    %v3838 = vpop.f32.mrb[0].mxu0
    %v3839 = vadd.f32 0.0, %v3838
    %v3840 = vpop.f32.mrb[0].mxu0
    %v3841 = vpop.f32.mrb[0].mxu0
    %v3842 = vadd.f32 0.0, %v3841
    %v3843 = vpop.f32.mrb[0].mxu0
    %3844 = vmatprep.mubr.bf16.mxu0 0
    %3845 = vmatmul.mubr.bf16.gmra.mrb[0].mxu0 %v3440
    %v3846 = vpop.f32.mrb[0].mxu0
    %v3847 = vadd.f32 0.0, %v3846
    %v3848 = vpop.f32.mrb[0].mxu0
    %v3849 = vpop.f32.mrb[0].mxu0
    %v3850 = vadd.f32 0.0, %v3849
    %v3851 = vpop.f32.mrb[0].mxu0
    %3852 = vmatprep.mubr.bf16.mxu0 0
    %3853 = vmatmul.mubr.bf16.gmra.mrb[0].mxu0 %v3441
    %v3854 = vpop.f32.mrb[0].mxu0
    %v3855 = vadd.f32 0.0, %v3854
    %v3856 = vpop.f32.mrb[0].mxu0
    %v3857 = vpop.f32.mrb[0].mxu0
    %v3858 = vadd.f32 0.0, %v3857
    %v3859 = vpop.f32.mrb[0].mxu0
    %3860 = vdwg.mxu0
    %v3861 = vadd.f32 %v3723, %v3831
    %v3862 = vadd.f32 %v3724, %v3834
    %v3863 = vadd.f32 %v3725, %v3839
    %v3864 = vadd.f32 %v3726, %v3842
    %v3865 = vadd.f32 %v3727, %v3847
    %v3866 = vadd.f32 %v3728, %v3850
    %v3867 = vadd.f32 %v3729, %v3855
    %v3868 = vadd.f32 %v3730, %v3858
    %s3869 = scalar_lea.vmem [#allocation10], 448
    %v3870 = vld [vmem:[%s3869] sm:$0xf]
    %v3871 = vld [vmem:[%s3869 + $0x4] sm:$0xf]
    %v3872 = vld [vmem:[%s3869 + $0x8] sm:$0xf]
    %v3873 = vld [vmem:[%s3869 + $0xc] sm:$0xf]
    %v3874 = vld [vmem:[%s3869 + $0x10] sm:$0xf]
    %v3875 = vld [vmem:[%s3869 + $0x14] sm:$0xf]
    %v3876 = vld [vmem:[%s3869 + $0x18] sm:$0xf]
    %v3877 = vld [vmem:[%s3869 + $0x1c] sm:$0xf]
    %v3878 = vld [vmem:[%s3869 + $0x20] sm:$0xf]
    %v3879 = vld [vmem:[%s3869 + $0x24] sm:$0xf]
    %v3880 = vld [vmem:[%s3869 + $0x28] sm:$0xf]
    %v3881 = vld [vmem:[%s3869 + $0x2c] sm:$0xf]
    %v3882 = vld [vmem:[%s3869 + $0x30] sm:$0xf]
    %v3883 = vld [vmem:[%s3869 + $0x34] sm:$0xf]
    %v3884 = vld [vmem:[%s3869 + $0x38] sm:$0xf]
    %v3885 = vld [vmem:[%s3869 + $0x3c] sm:$0xf]
    %v3902 = vunpack.c.l.b16 %v3870
    %v3903 = vunpack.c.l.b16 %v3871
    %v3904 = vunpack.c.l.b16 %v3872
    %v3905 = vunpack.c.l.b16 %v3873
    %v3906 = vunpack.c.l.b16 %v3874
    %v3907 = vunpack.c.l.b16 %v3875
    %v3908 = vunpack.c.l.b16 %v3876
    %v3909 = vunpack.c.l.b16 %v3877
    %v3910 = vunpack.c.l.b16 %v3878
    %v3911 = vunpack.c.l.b16 %v3879
    %v3912 = vunpack.c.l.b16 %v3880
    %v3913 = vunpack.c.l.b16 %v3881
    %v3914 = vunpack.c.l.b16 %v3882
    %v3915 = vunpack.c.l.b16 %v3883
    %v3916 = vunpack.c.l.b16 %v3884
    %v3917 = vunpack.c.l.b16 %v3885
    %v3918 = vpack.c.b16 %v3903, %v3902
    %v3919 = vpack.c.b16 %v3905, %v3904
    %v3920 = vpack.c.b16 %v3907, %v3906
    %v3921 = vpack.c.b16 %v3909, %v3908
    %v3922 = vpack.c.b16 %v3911, %v3910
    %v3923 = vpack.c.b16 %v3913, %v3912
    %v3924 = vpack.c.b16 %v3915, %v3914
    %v3925 = vpack.c.b16 %v3917, %v3916
    %3934 = vmatprep.subr.bf16.mxu0 0
    %3935 = vmatpush1.bf16.msra.mxu0 %v3918
    %3936 = vmatprep.subr.bf16.mxu0 0
    %3937 = vmatpush1.bf16.msra.mxu0 %v3919
    %3938 = vmatprep.subr.bf16.mxu0 0
    %3939 = vmatpush1.bf16.msra.mxu0 %v3920
    %3940 = vmatprep.subr.bf16.mxu0 0
    %3941 = vmatpush1.bf16.msra.mxu0 %v3921
    %3942 = vmatprep.subr.bf16.mxu0 0
    %3943 = vmatpush1.bf16.msra.mxu0 %v3922
    %3944 = vmatprep.subr.bf16.mxu0 0
    %3945 = vmatpush1.bf16.msra.mxu0 %v3923
    %3946 = vmatprep.subr.bf16.mxu0 0
    %3947 = vmatpush1.bf16.msra.mxu0 %v3924
    %3948 = vmatprep.subr.bf16.mxu0 0
    %3949 = vmatpush1.bf16.msra.mxu0 %v3925
    %3950 = vmatprep.subr.bf16.mxu0 0
    %3951 = vmatpush1.bf16.msra.mxu0 0
    %3952 = vmatprep.subr.bf16.mxu0 0
    %3953 = vmatpush1.bf16.msra.mxu0 0
    %3954 = vmatprep.subr.bf16.mxu0 0
    %3955 = vmatpush1.bf16.msra.mxu0 0
    %3956 = vmatprep.subr.bf16.mxu0 0
    %3957 = vmatpush1.bf16.msra.mxu0 0
    %3958 = vmatprep.subr.bf16.mxu0 0
    %3959 = vmatpush1.bf16.msra.mxu0 0
    %3960 = vmatprep.subr.bf16.mxu0 0
    %3961 = vmatpush1.bf16.msra.mxu0 0
    %3962 = vmatprep.subr.bf16.mxu0 0
    %3963 = vmatpush1.bf16.msra.mxu0 0
    %3964 = vmatprep.subr.bf16.mxu0 0
    %3965 = vmatpush1.bf16.msra.mxu0 0
    %3966 = vmatprep.mubr.bf16.mxu0 0
    %3967 = vmatmul.mubr.bf16.gmra.mrb[0].mxu0 %v3442
    %v3968 = vpop.f32.mrb[0].mxu0
    %v3969 = vadd.f32 0.0, %v3968
    %v3970 = vpop.f32.mrb[0].mxu0
    %v3971 = vpop.f32.mrb[0].mxu0
    %v3972 = vadd.f32 0.0, %v3971
    %v3973 = vpop.f32.mrb[0].mxu0
    %3974 = vmatprep.mubr.bf16.mxu0 0
    %3975 = vmatmul.mubr.bf16.gmra.mrb[0].mxu0 %v3443
    %v3976 = vpop.f32.mrb[0].mxu0
    %v3977 = vadd.f32 0.0, %v3976
    %v3978 = vpop.f32.mrb[0].mxu0
    %v3979 = vpop.f32.mrb[0].mxu0
    %v3980 = vadd.f32 0.0, %v3979
    %v3981 = vpop.f32.mrb[0].mxu0
    %3982 = vmatprep.mubr.bf16.mxu0 0
    %3983 = vmatmul.mubr.bf16.gmra.mrb[0].mxu0 %v3444
    %v3984 = vpop.f32.mrb[0].mxu0
    %v3985 = vadd.f32 0.0, %v3984
    %v3986 = vpop.f32.mrb[0].mxu0
    %v3987 = vpop.f32.mrb[0].mxu0
    %v3988 = vadd.f32 0.0, %v3987
    %v3989 = vpop.f32.mrb[0].mxu0
    %3990 = vmatprep.mubr.bf16.mxu0 0
    %3991 = vmatmul.mubr.bf16.gmra.mrb[0].mxu0 %v3445
    %v3992 = vpop.f32.mrb[0].mxu0
    %v3993 = vadd.f32 0.0, %v3992
    %v3994 = vpop.f32.mrb[0].mxu0
    %v3995 = vpop.f32.mrb[0].mxu0
    %v3996 = vadd.f32 0.0, %v3995
    %v3997 = vpop.f32.mrb[0].mxu0
    %3998 = vdwg.mxu0
    %v3999 = vadd.f32 %v3861, %v3969
    %v4000 = vadd.f32 %v3862, %v3972
    %v4001 = vadd.f32 %v3863, %v3977
    %v4002 = vadd.f32 %v3864, %v3980
    %v4003 = vadd.f32 %v3865, %v3985
    %v4004 = vadd.f32 %v3866, %v3988
    %v4005 = vadd.f32 %v3867, %v3993
    %v4006 = vadd.f32 %v3868, %v3996
    %v4007 = vmul.f32 %v3999, %v1487
    %v4008 = vmul.f32 %v4000, %v1492
    %v4009 = vmul.f32 %v4001, %v1497
    %v4010 = vmul.f32 %v4002, %v1502
    %v4011 = vmul.f32 %v4003, %v1507
    %v4012 = vmul.f32 %v4004, %v1512
    %v4013 = vmul.f32 %v4005, %v1517
    %v4014 = vmul.f32 %v4006, %v1522
    %v4015 = vpack.c.bf16 %v4008, %v4007
    %v4016 = vpack.c.bf16 %v4010, %v4009
    %v4017 = vpack.c.bf16 %v4012, %v4011
    %v4018 = vpack.c.bf16 %v4014, %v4013
    %s4019 = scalar_lea.vmem [#allocation11], 192
    %v4020 = vld [vmem:[%s4019] sm:$0xff]
    %v4021 = vld [vmem:[%s4019 + $0x8] sm:$0xf]
    %v4022 = vld [vmem:[%s4019 + $0xc] sm:$0xff]
    %v4023 = vld [vmem:[%s4019 + $0x14] sm:$0xf]
    %v4024 = vld [vmem:[%s4019 + $0x18] sm:$0xff]
    %v4025 = vld [vmem:[%s4019 + $0x20] sm:$0xf]
    %v4026 = vld [vmem:[%s4019 + $0x24] sm:$0xff]
    %v4027 = vld [vmem:[%s4019 + $0x2c] sm:$0xf]
    %v4028 = vld [vmem:[%s4019 + $0x30] sm:$0xff]
    %v4029 = vld [vmem:[%s4019 + $0x38] sm:$0xf]
    %v4030 = vld [vmem:[%s4019 + $0x3c] sm:$0xff]
    %v4031 = vld [vmem:[%s4019 + $0x44] sm:$0xf]
    %v4032 = vld [vmem:[%s4019 + $0x48] sm:$0xff]
    %v4033 = vld [vmem:[%s4019 + $0x50] sm:$0xf]
    %v4034 = vld [vmem:[%s4019 + $0x54] sm:$0xff]
    %v4035 = vld [vmem:[%s4019 + $0x5c] sm:$0xf]
    %v4036 = vld [vmem:[%s4019 + $0x60] sm:$0xff]
    %v4037 = vld [vmem:[%s4019 + $0x68] sm:$0xf]
    %v4038 = vld [vmem:[%s4019 + $0x6c] sm:$0xff]
    %v4039 = vld [vmem:[%s4019 + $0x74] sm:$0xf]
    %v4040 = vld [vmem:[%s4019 + $0x78] sm:$0xff]
    %v4041 = vld [vmem:[%s4019 + $0x80] sm:$0xf]
    %v4042 = vld [vmem:[%s4019 + $0x84] sm:$0xff]
    %v4043 = vld [vmem:[%s4019 + $0x8c] sm:$0xf]
    %v4044 = vld [vmem:[%s4019 + $0x90] sm:$0xff]
    %v4045 = vld [vmem:[%s4019 + $0x98] sm:$0xf]
    %v4046 = vld [vmem:[%s4019 + $0x9c] sm:$0xff]
    %v4047 = vld [vmem:[%s4019 + $0xa4] sm:$0xf]
    %v4048 = vld [vmem:[%s4019 + $0xa8] sm:$0xff]
    %v4049 = vld [vmem:[%s4019 + $0xb0] sm:$0xf]
    %v4050 = vld [vmem:[%s4019 + $0xb4] sm:$0xff]
    %v4051 = vld [vmem:[%s4019 + $0xbc] sm:$0xf]
    %s4052 = scalar_lea.vmem [#allocation13], 3
    %v4053 = vld [vmem:[%s4052] sm:$0x7]
    %v4055 = vlaneseq
    %v4056 = vshrl.u32 %v4055, 7
    %v4057 = vsub.s32 0, %v4056
    %v4058 = vrot.slane %v4053, %v4057
    %v4059 = vlaneseq
    %v4060 = vshrl.u32 %v4059, 7
    %v4061 = vsub.s32 1, %v4060
    %v4062 = vrot.slane %v4053, %v4061
    %v4063 = vlaneseq
    %v4064 = vshrl.u32 %v4063, 7
    %v4065 = vsub.s32 2, %v4064
    %v4066 = vrot.slane %v4053, %v4065
    %v4102 = vunpack.c.l.b16 %v4020
    %v4103 = vunpack.c.h.b16 %v4020
    %v4104 = vunpack.c.l.b16 %v4021
    %v4105 = vunpack.c.l.b16 %v4022
    %v4106 = vunpack.c.h.b16 %v4022
    %v4107 = vunpack.c.l.b16 %v4023
    %v4108 = vunpack.c.l.b16 %v4024
    %v4109 = vunpack.c.h.b16 %v4024
    %v4110 = vunpack.c.l.b16 %v4025
    %v4111 = vunpack.c.l.b16 %v4026
    %v4112 = vunpack.c.h.b16 %v4026
    %v4113 = vunpack.c.l.b16 %v4027
    %v4114 = vunpack.c.l.b16 %v4028
    %v4115 = vunpack.c.h.b16 %v4028
    %v4116 = vunpack.c.l.b16 %v4029
    %v4117 = vunpack.c.l.b16 %v4030
    %v4118 = vunpack.c.h.b16 %v4030
    %v4119 = vunpack.c.l.b16 %v4031
    %v4120 = vunpack.c.l.b16 %v4032
    %v4121 = vunpack.c.h.b16 %v4032
    %v4122 = vunpack.c.l.b16 %v4033
    %v4123 = vunpack.c.l.b16 %v4034
    %v4124 = vunpack.c.h.b16 %v4034
    %v4125 = vunpack.c.l.b16 %v4035
    %v4126 = vunpack.c.l.b16 %v4036
    %v4127 = vunpack.c.h.b16 %v4036
    %v4128 = vunpack.c.l.b16 %v4037
    %v4129 = vunpack.c.l.b16 %v4038
    %v4130 = vunpack.c.h.b16 %v4038
    %v4131 = vunpack.c.l.b16 %v4039
    %v4132 = vunpack.c.l.b16 %v4040
    %v4133 = vunpack.c.h.b16 %v4040
    %v4134 = vunpack.c.l.b16 %v4041
    %v4135 = vunpack.c.l.b16 %v4042
    %v4136 = vunpack.c.h.b16 %v4042
    %v4137 = vunpack.c.l.b16 %v4043
    %v4138 = vunpack.c.l.b16 %v4044
    %v4139 = vunpack.c.h.b16 %v4044
    %v4140 = vunpack.c.l.b16 %v4045
    %v4141 = vunpack.c.l.b16 %v4046
    %v4142 = vunpack.c.h.b16 %v4046
    %v4143 = vunpack.c.l.b16 %v4047
    %v4144 = vunpack.c.l.b16 %v4048
    %v4145 = vunpack.c.h.b16 %v4048
    %v4146 = vunpack.c.l.b16 %v4049
    %v4147 = vunpack.c.l.b16 %v4050
    %v4148 = vunpack.c.h.b16 %v4050
    %v4149 = vunpack.c.l.b16 %v4051
    %v4150 = vpack.c.b16 %v4105, %v4102
    %v4151 = vpack.c.b16 %v4106, %v4103
    %v4152 = vpack.c.b16 %v4107, %v4104
    %v4153 = vpack.c.b16 %v4111, %v4108
    %v4154 = vpack.c.b16 %v4112, %v4109
    %v4155 = vpack.c.b16 %v4113, %v4110
    %v4156 = vpack.c.b16 %v4117, %v4114
    %v4157 = vpack.c.b16 %v4118, %v4115
    %v4158 = vpack.c.b16 %v4119, %v4116
    %v4159 = vpack.c.b16 %v4123, %v4120
    %v4160 = vpack.c.b16 %v4124, %v4121
    %v4161 = vpack.c.b16 %v4125, %v4122
    %v4162 = vpack.c.b16 %v4129, %v4126
    %v4163 = vpack.c.b16 %v4130, %v4127
    %v4164 = vpack.c.b16 %v4131, %v4128
    %v4165 = vpack.c.b16 %v4135, %v4132
    %v4166 = vpack.c.b16 %v4136, %v4133
    %v4167 = vpack.c.b16 %v4137, %v4134
    %v4168 = vpack.c.b16 %v4141, %v4138
    %v4169 = vpack.c.b16 %v4142, %v4139
    %v4170 = vpack.c.b16 %v4143, %v4140
    %v4171 = vpack.c.b16 %v4147, %v4144
    %v4172 = vpack.c.b16 %v4148, %v4145
    %v4173 = vpack.c.b16 %v4149, %v4146
    %4198 = vmatprep.subr.bf16.mxu0 %v4151
    %4199 = vmatpush1.bf16.msra.mxu0 %v4150
    %4200 = vmatprep.subr.bf16.mxu0 %v4154
    %4201 = vmatpush1.bf16.msra.mxu0 %v4153
    %4202 = vmatprep.subr.bf16.mxu0 %v4157
    %4203 = vmatpush1.bf16.msra.mxu0 %v4156
    %4204 = vmatprep.subr.bf16.mxu0 %v4160
    %4205 = vmatpush1.bf16.msra.mxu0 %v4159
    %4206 = vmatprep.subr.bf16.mxu0 %v4163
    %4207 = vmatpush1.bf16.msra.mxu0 %v4162
    %4208 = vmatprep.subr.bf16.mxu0 %v4166
    %4209 = vmatpush1.bf16.msra.mxu0 %v4165
    %4210 = vmatprep.subr.bf16.mxu0 %v4169
    %4211 = vmatpush1.bf16.msra.mxu0 %v4168
    %4212 = vmatprep.subr.bf16.mxu0 %v4172
    %4213 = vmatpush1.bf16.msra.mxu0 %v4171
    %4214 = vmatprep.subr.bf16.mxu0 0
    %4215 = vmatpush1.bf16.msra.mxu0 0
    %4216 = vmatprep.subr.bf16.mxu0 0
    %4217 = vmatpush1.bf16.msra.mxu0 0
    %4218 = vmatprep.subr.bf16.mxu0 0
    %4219 = vmatpush1.bf16.msra.mxu0 0
    %4220 = vmatprep.subr.bf16.mxu0 0
    %4221 = vmatpush1.bf16.msra.mxu0 0
    %4222 = vmatprep.subr.bf16.mxu0 0
    %4223 = vmatpush1.bf16.msra.mxu0 0
    %4224 = vmatprep.subr.bf16.mxu0 0
    %4225 = vmatpush1.bf16.msra.mxu0 0
    %4226 = vmatprep.subr.bf16.mxu0 0
    %4227 = vmatpush1.bf16.msra.mxu0 0
    %4228 = vmatprep.subr.bf16.mxu0 0
    %4229 = vmatpush1.bf16.msra.mxu0 0
    %4230 = vmatprep.mubr.bf16.mxu0 0
    %4231 = vmatmul.mubr.bf16.gmra.mrb[0].mxu0 %v4015
    %v4232 = vpop.f32.mrb[0].mxu0
    %v4233 = vadd.f32 %v4058, %v4232
    %v4234 = vpop.f32.mrb[0].mxu0
    %v4235 = vadd.f32 %v4062, %v4234
    %v4236 = vpop.f32.mrb[0].mxu0
    %v4237 = vadd.f32 %v4058, %v4236
    %v4238 = vpop.f32.mrb[0].mxu0
    %v4239 = vadd.f32 %v4062, %v4238
    %4240 = vmatprep.mubr.bf16.mxu0 0
    %4241 = vmatmul.mubr.bf16.gmra.mrb[0].mxu0 %v4016
    %v4242 = vpop.f32.mrb[0].mxu0
    %v4243 = vadd.f32 %v4058, %v4242
    %v4244 = vpop.f32.mrb[0].mxu0
    %v4245 = vadd.f32 %v4062, %v4244
    %v4246 = vpop.f32.mrb[0].mxu0
    %v4247 = vadd.f32 %v4058, %v4246
    %v4248 = vpop.f32.mrb[0].mxu0
    %v4249 = vadd.f32 %v4062, %v4248
    %4250 = vmatprep.mubr.bf16.mxu0 0
    %4251 = vmatmul.mubr.bf16.gmra.mrb[0].mxu0 %v4017
    %v4252 = vpop.f32.mrb[0].mxu0
    %v4253 = vadd.f32 %v4058, %v4252
    %v4254 = vpop.f32.mrb[0].mxu0
    %v4255 = vadd.f32 %v4062, %v4254
    %v4256 = vpop.f32.mrb[0].mxu0
    %v4257 = vadd.f32 %v4058, %v4256
    %v4258 = vpop.f32.mrb[0].mxu0
    %v4259 = vadd.f32 %v4062, %v4258
    %4260 = vmatprep.mubr.bf16.mxu0 0
    %4261 = vmatmul.mubr.bf16.gmra.mrb[0].mxu0 %v4018
    %v4262 = vpop.f32.mrb[0].mxu0
    %v4263 = vadd.f32 %v4058, %v4262
    %v4264 = vpop.f32.mrb[0].mxu0
    %v4265 = vadd.f32 %v4062, %v4264
    %v4266 = vpop.f32.mrb[0].mxu0
    %v4267 = vadd.f32 %v4058, %v4266
    %v4268 = vpop.f32.mrb[0].mxu0
    %v4269 = vadd.f32 %v4062, %v4268
    %4270 = vdwg.mxu0
    %4271 = vmatprep.subr.bf16.mxu0 0
    %4272 = vmatpush1.bf16.msra.mxu0 %v4152
    %4273 = vmatprep.subr.bf16.mxu0 0
    %4274 = vmatpush1.bf16.msra.mxu0 %v4155
    %4275 = vmatprep.subr.bf16.mxu0 0
    %4276 = vmatpush1.bf16.msra.mxu0 %v4158
    %4277 = vmatprep.subr.bf16.mxu0 0
    %4278 = vmatpush1.bf16.msra.mxu0 %v4161
    %4279 = vmatprep.subr.bf16.mxu0 0
    %4280 = vmatpush1.bf16.msra.mxu0 %v4164
    %4281 = vmatprep.subr.bf16.mxu0 0
    %4282 = vmatpush1.bf16.msra.mxu0 %v4167
    %4283 = vmatprep.subr.bf16.mxu0 0
    %4284 = vmatpush1.bf16.msra.mxu0 %v4170
    %4285 = vmatprep.subr.bf16.mxu0 0
    %4286 = vmatpush1.bf16.msra.mxu0 %v4173
    %4287 = vmatprep.subr.bf16.mxu0 0
    %4288 = vmatpush1.bf16.msra.mxu0 0
    %4289 = vmatprep.subr.bf16.mxu0 0
    %4290 = vmatpush1.bf16.msra.mxu0 0
    %4291 = vmatprep.subr.bf16.mxu0 0
    %4292 = vmatpush1.bf16.msra.mxu0 0
    %4293 = vmatprep.subr.bf16.mxu0 0
    %4294 = vmatpush1.bf16.msra.mxu0 0
    %4295 = vmatprep.subr.bf16.mxu0 0
    %4296 = vmatpush1.bf16.msra.mxu0 0
    %4297 = vmatprep.subr.bf16.mxu0 0
    %4298 = vmatpush1.bf16.msra.mxu0 0
    %4299 = vmatprep.subr.bf16.mxu0 0
    %4300 = vmatpush1.bf16.msra.mxu0 0
    %4301 = vmatprep.subr.bf16.mxu0 0
    %4302 = vmatpush1.bf16.msra.mxu0 0
    %4303 = vmatprep.mubr.bf16.mxu0 0
    %4304 = vmatmul.mubr.bf16.gmra.mrb[0].mxu0 %v4015
    %v4305 = vpop.f32.mrb[0].mxu0
    %v4306 = vadd.f32 %v4066, %v4305
    %v4307 = vpop.f32.mrb[0].mxu0
    %v4308 = vpop.f32.mrb[0].mxu0
    %v4309 = vadd.f32 %v4066, %v4308
    %v4310 = vpop.f32.mrb[0].mxu0
    %4311 = vmatprep.mubr.bf16.mxu0 0
    %4312 = vmatmul.mubr.bf16.gmra.mrb[0].mxu0 %v4016
    %v4313 = vpop.f32.mrb[0].mxu0
    %v4314 = vadd.f32 %v4066, %v4313
    %v4315 = vpop.f32.mrb[0].mxu0
    %v4316 = vpop.f32.mrb[0].mxu0
    %v4317 = vadd.f32 %v4066, %v4316
    %v4318 = vpop.f32.mrb[0].mxu0
    %4319 = vmatprep.mubr.bf16.mxu0 0
    %4320 = vmatmul.mubr.bf16.gmra.mrb[0].mxu0 %v4017
    %v4321 = vpop.f32.mrb[0].mxu0
    %v4322 = vadd.f32 %v4066, %v4321
    %v4323 = vpop.f32.mrb[0].mxu0
    %v4324 = vpop.f32.mrb[0].mxu0
    %v4325 = vadd.f32 %v4066, %v4324
    %v4326 = vpop.f32.mrb[0].mxu0
    %4327 = vmatprep.mubr.bf16.mxu0 0
    %4328 = vmatmul.mubr.bf16.gmra.mrb[0].mxu0 %v4018
    %v4329 = vpop.f32.mrb[0].mxu0
    %v4330 = vadd.f32 %v4066, %v4329
    %v4331 = vpop.f32.mrb[0].mxu0
    %v4332 = vpop.f32.mrb[0].mxu0
    %v4333 = vadd.f32 %v4066, %v4332
    %v4334 = vpop.f32.mrb[0].mxu0
    %4335 = vdwg.mxu0
    %v4336 = vadd.f32 %v4233, %v3166
    %v4337 = vadd.f32 %v4237, %v3170
    %v4338 = vadd.f32 %v4243, %v3176
    %v4339 = vadd.f32 %v4247, %v3180
    %v4340 = vadd.f32 %v4253, %v3186
    %v4341 = vadd.f32 %v4257, %v3190
    %v4342 = vadd.f32 %v4263, %v3196
    %v4343 = vadd.f32 %v4267, %v3200
    %v4344 = vxor.u32 %v4336, 2147483648
    %v4345 = vxor.u32 %v4337, 2147483648
    %v4346 = vxor.u32 %v4338, 2147483648
    %v4347 = vxor.u32 %v4339, 2147483648
    %v4348 = vxor.u32 %v4340, 2147483648
    %v4349 = vxor.u32 %v4341, 2147483648
    %v4350 = vxor.u32 %v4342, 2147483648
    %v4351 = vxor.u32 %v4343, 2147483648
    %v4352 = vmul.f32 %v4344, 1.442695
    %v4353 = vpow.pop %v4352
    %v4354 = vmul.f32 %v4345, 1.442695
    %v4355 = vpow.pop %v4354
    %v4356 = vmul.f32 %v4346, 1.442695
    %v4357 = vpow.pop %v4356
    %v4358 = vmul.f32 %v4347, 1.442695
    %v4359 = vpow.pop %v4358
    %v4360 = vmul.f32 %v4348, 1.442695
    %v4361 = vpow.pop %v4360
    %v4362 = vmul.f32 %v4349, 1.442695
    %v4363 = vpow.pop %v4362
    %v4364 = vmul.f32 %v4350, 1.442695
    %v4365 = vpow.pop %v4364
    %v4366 = vmul.f32 %v4351, 1.442695
    %v4367 = vpow.pop %v4366
    %v4368 = vadd.f32 %v4353, 1.0
    %v4369 = vadd.f32 %v4355, 1.0
    %v4370 = vadd.f32 %v4357, 1.0
    %v4371 = vadd.f32 %v4359, 1.0
    %v4372 = vadd.f32 %v4361, 1.0
    %v4373 = vadd.f32 %v4363, 1.0
    %v4374 = vadd.f32 %v4365, 1.0
    %v4375 = vadd.f32 %v4367, 1.0
    %v4376 = vrcp.pop %v4368
    %v4377 = vmul.f32 1.0, %v4376
    %v4378 = vrcp.pop %v4369
    %v4379 = vmul.f32 1.0, %v4378
    %v4380 = vrcp.pop %v4370
    %v4381 = vmul.f32 1.0, %v4380
    %v4382 = vrcp.pop %v4371
    %v4383 = vmul.f32 1.0, %v4382
    %v4384 = vrcp.pop %v4372
    %v4385 = vmul.f32 1.0, %v4384
    %v4386 = vrcp.pop %v4373
    %v4387 = vmul.f32 1.0, %v4386
    %v4388 = vrcp.pop %v4374
    %v4389 = vmul.f32 1.0, %v4388
    %v4390 = vrcp.pop %v4375
    %v4391 = vmul.f32 1.0, %v4390
    %v4392 = vadd.f32 %v4235, %v3168
    %v4393 = vadd.f32 %v4239, %v3172
    %v4394 = vadd.f32 %v4245, %v3178
    %v4395 = vadd.f32 %v4249, %v3182
    %v4396 = vadd.f32 %v4255, %v3188
    %v4397 = vadd.f32 %v4259, %v3192
    %v4398 = vadd.f32 %v4265, %v3198
    %v4399 = vadd.f32 %v4269, %v3202
    %v4400 = vxor.u32 %v4392, 2147483648
    %v4401 = vxor.u32 %v4393, 2147483648
    %v4402 = vxor.u32 %v4394, 2147483648
    %v4403 = vxor.u32 %v4395, 2147483648
    %v4404 = vxor.u32 %v4396, 2147483648
    %v4405 = vxor.u32 %v4397, 2147483648
    %v4406 = vxor.u32 %v4398, 2147483648
    %v4407 = vxor.u32 %v4399, 2147483648
    %v4408 = vmul.f32 %v4400, 1.442695
    %v4409 = vpow.pop %v4408
    %v4410 = vmul.f32 %v4401, 1.442695
    %v4411 = vpow.pop %v4410
    %v4412 = vmul.f32 %v4402, 1.442695
    %v4413 = vpow.pop %v4412
    %v4414 = vmul.f32 %v4403, 1.442695
    %v4415 = vpow.pop %v4414
    %v4416 = vmul.f32 %v4404, 1.442695
    %v4417 = vpow.pop %v4416
    %v4418 = vmul.f32 %v4405, 1.442695
    %v4419 = vpow.pop %v4418
    %v4420 = vmul.f32 %v4406, 1.442695
    %v4421 = vpow.pop %v4420
    %v4422 = vmul.f32 %v4407, 1.442695
    %v4423 = vpow.pop %v4422
    %v4424 = vadd.f32 %v4409, 1.0
    %v4425 = vadd.f32 %v4411, 1.0
    %v4426 = vadd.f32 %v4413, 1.0
    %v4427 = vadd.f32 %v4415, 1.0
    %v4428 = vadd.f32 %v4417, 1.0
    %v4429 = vadd.f32 %v4419, 1.0
    %v4430 = vadd.f32 %v4421, 1.0
    %v4431 = vadd.f32 %v4423, 1.0
    %v4432 = vrcp.pop %v4424
    %v4433 = vmul.f32 1.0, %v4432
    %v4434 = vrcp.pop %v4425
    %v4435 = vmul.f32 1.0, %v4434
    %v4436 = vrcp.pop %v4426
    %v4437 = vmul.f32 1.0, %v4436
    %v4438 = vrcp.pop %v4427
    %v4439 = vmul.f32 1.0, %v4438
    %v4440 = vrcp.pop %v4428
    %v4441 = vmul.f32 1.0, %v4440
    %v4442 = vrcp.pop %v4429
    %v4443 = vmul.f32 1.0, %v4442
    %v4444 = vrcp.pop %v4430
    %v4445 = vmul.f32 1.0, %v4444
    %v4446 = vrcp.pop %v4431
    %v4447 = vmul.f32 1.0, %v4446
    %v4448 = vmul.f32 %v4377, %v3239
    %v4449 = vmul.f32 %v4379, %v3242
    %v4450 = vmul.f32 %v4381, %v3247
    %v4451 = vmul.f32 %v4383, %v3250
    %v4452 = vmul.f32 %v4385, %v3255
    %v4453 = vmul.f32 %v4387, %v3258
    %v4454 = vmul.f32 %v4389, %v3263
    %v4455 = vmul.f32 %v4391, %v3266
    %v4456 = vadd.f32 %v4306, %v4448
    %v4457 = vadd.f32 %v4309, %v4449
    %v4458 = vadd.f32 %v4314, %v4450
    %v4459 = vadd.f32 %v4317, %v4451
    %v4460 = vadd.f32 %v4322, %v4452
    %v4461 = vadd.f32 %v4325, %v4453
    %v4462 = vadd.f32 %v4330, %v4454
    %v4463 = vadd.f32 %v4333, %v4455
    %v4464 = vtanh.pop %v4456
    %v4465 = vtanh.pop %v4457
    %v4466 = vtanh.pop %v4458
    %v4467 = vtanh.pop %v4459
    %v4468 = vtanh.pop %v4460
    %v4469 = vtanh.pop %v4461
    %v4470 = vtanh.pop %v4462
    %v4471 = vtanh.pop %v4463
    %v4472 = vsub.f32 1.0, %v4433
    %v4473 = vsub.f32 1.0, %v4435
    %v4474 = vsub.f32 1.0, %v4437
    %v4475 = vsub.f32 1.0, %v4439
    %v4476 = vsub.f32 1.0, %v4441
    %v4477 = vsub.f32 1.0, %v4443
    %v4478 = vsub.f32 1.0, %v4445
    %v4479 = vsub.f32 1.0, %v4447
    %v4480 = vmul.f32 %v4472, %v4464
    %v4481 = vmul.f32 %v4473, %v4465
    %v4482 = vmul.f32 %v4474, %v4466
    %v4483 = vmul.f32 %v4475, %v4467
    %v4484 = vmul.f32 %v4476, %v4468
    %v4485 = vmul.f32 %v4477, %v4469
    %v4486 = vmul.f32 %v4478, %v4470
    %v4487 = vmul.f32 %v4479, %v4471
    %v4488 = vmul.f32 %v4433, %v2940
    %v4489 = vmul.f32 %v4435, %v2941
    %v4490 = vmul.f32 %v4437, %v2942
    %v4491 = vmul.f32 %v4439, %v2943
    %v4492 = vmul.f32 %v4441, %v2944
    %v4493 = vmul.f32 %v4443, %v2945
    %v4494 = vmul.f32 %v4445, %v2946
    %v4495 = vmul.f32 %v4447, %v2947
    %v4496 = vadd.f32 %v4480, %v4488
    %v4497 = vadd.f32 %v4481, %v4489
    %v4498 = vadd.f32 %v4482, %v4490
    %v4499 = vadd.f32 %v4483, %v4491
    %v4500 = vadd.f32 %v4484, %v4492
    %v4501 = vadd.f32 %v4485, %v4493
    %v4502 = vadd.f32 %v4486, %v4494
    %v4503 = vadd.f32 %v4487, %v4495
    %v4504 = vpack.c.bf16 %v4497, %v4496
    %v4505 = vpack.c.bf16 %v4499, %v4498
    %v4506 = vpack.c.bf16 %v4501, %v4500
    %v4507 = vpack.c.bf16 %v4503, %v4502
    %v4508 = vld [vmem:[#allocation19] sm:$0xf]
    %v4509 = vld [vmem:[#allocation19 + $0x4] sm:$0xf]
    %v4510 = vld [vmem:[#allocation19 + $0x8] sm:$0xf]
    %v4511 = vld [vmem:[#allocation19 + $0xc] sm:$0xf]
    %v4512 = vld [vmem:[#allocation19 + $0x10] sm:$0xf]
    %v4513 = vld [vmem:[#allocation19 + $0x14] sm:$0xf]
    %v4514 = vld [vmem:[#allocation19 + $0x18] sm:$0xf]
    %v4515 = vld [vmem:[#allocation19 + $0x1c] sm:$0xf]
    %v4516 = vld [vmem:[#allocation19 + $0x20] sm:$0xf]
    %v4517 = vld [vmem:[#allocation19 + $0x24] sm:$0xf]
    %v4518 = vld [vmem:[#allocation19 + $0x28] sm:$0xf]
    %v4519 = vld [vmem:[#allocation19 + $0x2c] sm:$0xf]
    %v4520 = vld [vmem:[#allocation19 + $0x30] sm:$0xf]
    %v4521 = vld [vmem:[#allocation19 + $0x34] sm:$0xf]
    %v4522 = vld [vmem:[#allocation19 + $0x38] sm:$0xf]
    %v4523 = vld [vmem:[#allocation19 + $0x3c] sm:$0xf]
    %v4524 = vld [vmem:[#allocation20] sm:$0xf]
    %v4525 = vld [vmem:[#allocation20 + $0x4] sm:$0xf]
    %v4526 = vld [vmem:[#allocation20 + $0x8] sm:$0xf]
    %v4527 = vld [vmem:[#allocation20 + $0xc] sm:$0xf]
    %v4528 = vld [vmem:[#allocation20 + $0x10] sm:$0xf]
    %v4529 = vld [vmem:[#allocation20 + $0x14] sm:$0xf]
    %v4530 = vld [vmem:[#allocation20 + $0x18] sm:$0xf]
    %v4531 = vld [vmem:[#allocation20 + $0x1c] sm:$0xf]
    %v4532 = vld [vmem:[#allocation20 + $0x20] sm:$0xf]
    %v4533 = vld [vmem:[#allocation20 + $0x24] sm:$0xf]
    %v4534 = vld [vmem:[#allocation20 + $0x28] sm:$0xf]
    %v4535 = vld [vmem:[#allocation20 + $0x2c] sm:$0xf]
    %v4536 = vld [vmem:[#allocation20 + $0x30] sm:$0xf]
    %v4537 = vld [vmem:[#allocation20 + $0x34] sm:$0xf]
    %v4538 = vld [vmem:[#allocation20 + $0x38] sm:$0xf]
    %v4539 = vld [vmem:[#allocation20 + $0x3c] sm:$0xf]
    %v4556 = vunpack.c.l.b16 %v4524
    %v4557 = vunpack.c.l.b16 %v4525
    %v4558 = vunpack.c.l.b16 %v4526
    %v4559 = vunpack.c.l.b16 %v4527
    %v4560 = vunpack.c.l.b16 %v4528
    %v4561 = vunpack.c.l.b16 %v4529
    %v4562 = vunpack.c.l.b16 %v4530
    %v4563 = vunpack.c.l.b16 %v4531
    %v4564 = vunpack.c.l.b16 %v4532
    %v4565 = vunpack.c.l.b16 %v4533
    %v4566 = vunpack.c.l.b16 %v4534
    %v4567 = vunpack.c.l.b16 %v4535
    %v4568 = vunpack.c.l.b16 %v4536
    %v4569 = vunpack.c.l.b16 %v4537
    %v4570 = vunpack.c.l.b16 %v4538
    %v4571 = vunpack.c.l.b16 %v4539
    %v4572 = vpack.c.b16 %v4557, %v4556
    %v4573 = vpack.c.b16 %v4559, %v4558
    %v4574 = vpack.c.b16 %v4561, %v4560
    %v4575 = vpack.c.b16 %v4563, %v4562
    %v4576 = vpack.c.b16 %v4565, %v4564
    %v4577 = vpack.c.b16 %v4567, %v4566
    %v4578 = vpack.c.b16 %v4569, %v4568
    %v4579 = vpack.c.b16 %v4571, %v4570
    %4588 = vmatprep.subr.bf16.mxu0 0
    %4589 = vmatpush1.bf16.msra.mxu0 %v4572
    %4590 = vmatprep.subr.bf16.mxu0 0
    %4591 = vmatpush1.bf16.msra.mxu0 %v4573
    %4592 = vmatprep.subr.bf16.mxu0 0
    %4593 = vmatpush1.bf16.msra.mxu0 %v4574
    %4594 = vmatprep.subr.bf16.mxu0 0
    %4595 = vmatpush1.bf16.msra.mxu0 %v4575
    %4596 = vmatprep.subr.bf16.mxu0 0
    %4597 = vmatpush1.bf16.msra.mxu0 %v4576
    %4598 = vmatprep.subr.bf16.mxu0 0
    %4599 = vmatpush1.bf16.msra.mxu0 %v4577
    %4600 = vmatprep.subr.bf16.mxu0 0
    %4601 = vmatpush1.bf16.msra.mxu0 %v4578
    %4602 = vmatprep.subr.bf16.mxu0 0
    %4603 = vmatpush1.bf16.msra.mxu0 %v4579
    %4604 = vmatprep.subr.bf16.mxu0 0
    %4605 = vmatpush1.bf16.msra.mxu0 0
    %4606 = vmatprep.subr.bf16.mxu0 0
    %4607 = vmatpush1.bf16.msra.mxu0 0
    %4608 = vmatprep.subr.bf16.mxu0 0
    %4609 = vmatpush1.bf16.msra.mxu0 0
    %4610 = vmatprep.subr.bf16.mxu0 0
    %4611 = vmatpush1.bf16.msra.mxu0 0
    %4612 = vmatprep.subr.bf16.mxu0 0
    %4613 = vmatpush1.bf16.msra.mxu0 0
    %4614 = vmatprep.subr.bf16.mxu0 0
    %4615 = vmatpush1.bf16.msra.mxu0 0
    %4616 = vmatprep.subr.bf16.mxu0 0
    %4617 = vmatpush1.bf16.msra.mxu0 0
    %4618 = vmatprep.subr.bf16.mxu0 0
    %4619 = vmatpush1.bf16.msra.mxu0 0
    %4620 = vmatprep.mubr.bf16.mxu0 0
    %4621 = vmatmul.mubr.bf16.gmra.mrb[0].mxu0 %v4504
    %v4622 = vpop.f32.mrb[0].mxu0
    %v4623 = vadd.f32 0.0, %v4622
    %v4624 = vpop.f32.mrb[0].mxu0
    %v4625 = vpop.f32.mrb[0].mxu0
    %v4626 = vadd.f32 0.0, %v4625
    %v4627 = vpop.f32.mrb[0].mxu0
    %4628 = vmatprep.mubr.bf16.mxu0 0
    %4629 = vmatmul.mubr.bf16.gmra.mrb[0].mxu0 %v4505
    %v4630 = vpop.f32.mrb[0].mxu0
    %v4631 = vadd.f32 0.0, %v4630
    %v4632 = vpop.f32.mrb[0].mxu0
    %v4633 = vpop.f32.mrb[0].mxu0
    %v4634 = vadd.f32 0.0, %v4633
    %v4635 = vpop.f32.mrb[0].mxu0
    %4636 = vmatprep.mubr.bf16.mxu0 0
    %4637 = vmatmul.mubr.bf16.gmra.mrb[0].mxu0 %v4506
    %v4638 = vpop.f32.mrb[0].mxu0
    %v4639 = vadd.f32 0.0, %v4638
    %v4640 = vpop.f32.mrb[0].mxu0
    %v4641 = vpop.f32.mrb[0].mxu0
    %v4642 = vadd.f32 0.0, %v4641
    %v4643 = vpop.f32.mrb[0].mxu0
    %4644 = vmatprep.mubr.bf16.mxu0 0
    %4645 = vmatmul.mubr.bf16.gmra.mrb[0].mxu0 %v4507
    %v4646 = vpop.f32.mrb[0].mxu0
    %v4647 = vadd.f32 0.0, %v4646
    %v4648 = vpop.f32.mrb[0].mxu0
    %v4649 = vpop.f32.mrb[0].mxu0
    %v4650 = vadd.f32 0.0, %v4649
    %v4651 = vpop.f32.mrb[0].mxu0
    %4652 = vdwg.mxu0
    %v4669 = vunpack.c.l.b16 %v4508
    %v4670 = vunpack.c.l.b16 %v4509
    %v4671 = vunpack.c.l.b16 %v4510
    %v4672 = vunpack.c.l.b16 %v4511
    %v4673 = vunpack.c.l.b16 %v4512
    %v4674 = vunpack.c.l.b16 %v4513
    %v4675 = vunpack.c.l.b16 %v4514
    %v4676 = vunpack.c.l.b16 %v4515
    %v4677 = vunpack.c.l.b16 %v4516
    %v4678 = vunpack.c.l.b16 %v4517
    %v4679 = vunpack.c.l.b16 %v4518
    %v4680 = vunpack.c.l.b16 %v4519
    %v4681 = vunpack.c.l.b16 %v4520
    %v4682 = vunpack.c.l.b16 %v4521
    %v4683 = vunpack.c.l.b16 %v4522
    %v4684 = vunpack.c.l.b16 %v4523
    %v4685 = vpack.c.b16 %v4670, %v4669
    %v4686 = vpack.c.b16 %v4672, %v4671
    %v4687 = vpack.c.b16 %v4674, %v4673
    %v4688 = vpack.c.b16 %v4676, %v4675
    %v4689 = vpack.c.b16 %v4678, %v4677
    %v4690 = vpack.c.b16 %v4680, %v4679
    %v4691 = vpack.c.b16 %v4682, %v4681
    %v4692 = vpack.c.b16 %v4684, %v4683
    %4701 = vmatprep.subr.bf16.mxu0 0
    %4702 = vmatpush1.bf16.msra.mxu0 %v4685
    %4703 = vmatprep.subr.bf16.mxu0 0
    %4704 = vmatpush1.bf16.msra.mxu0 %v4686
    %4705 = vmatprep.subr.bf16.mxu0 0
    %4706 = vmatpush1.bf16.msra.mxu0 %v4687
    %4707 = vmatprep.subr.bf16.mxu0 0
    %4708 = vmatpush1.bf16.msra.mxu0 %v4688
    %4709 = vmatprep.subr.bf16.mxu0 0
    %4710 = vmatpush1.bf16.msra.mxu0 %v4689
    %4711 = vmatprep.subr.bf16.mxu0 0
    %4712 = vmatpush1.bf16.msra.mxu0 %v4690
    %4713 = vmatprep.subr.bf16.mxu0 0
    %4714 = vmatpush1.bf16.msra.mxu0 %v4691
    %4715 = vmatprep.subr.bf16.mxu0 0
    %4716 = vmatpush1.bf16.msra.mxu0 %v4692
    %4717 = vmatprep.subr.bf16.mxu0 0
    %4718 = vmatpush1.bf16.msra.mxu0 0
    %4719 = vmatprep.subr.bf16.mxu0 0
    %4720 = vmatpush1.bf16.msra.mxu0 0
    %4721 = vmatprep.subr.bf16.mxu0 0
    %4722 = vmatpush1.bf16.msra.mxu0 0
    %4723 = vmatprep.subr.bf16.mxu0 0
    %4724 = vmatpush1.bf16.msra.mxu0 0
    %4725 = vmatprep.subr.bf16.mxu0 0
    %4726 = vmatpush1.bf16.msra.mxu0 0
    %4727 = vmatprep.subr.bf16.mxu0 0
    %4728 = vmatpush1.bf16.msra.mxu0 0
    %4729 = vmatprep.subr.bf16.mxu0 0
    %4730 = vmatpush1.bf16.msra.mxu0 0
    %4731 = vmatprep.subr.bf16.mxu0 0
    %4732 = vmatpush1.bf16.msra.mxu0 0
    %4733 = vmatprep.mubr.bf16.mxu0 0
    %4734 = vmatmul.mubr.bf16.gmra.mrb[0].mxu0 %v260
    %v4735 = vpop.f32.mrb[0].mxu0
    %v4736 = vadd.f32 %v4623, %v4735
    %v4737 = vpop.f32.mrb[0].mxu0
    %v4738 = vpop.f32.mrb[0].mxu0
    %v4739 = vadd.f32 %v4626, %v4738
    %v4740 = vpop.f32.mrb[0].mxu0
    %4741 = vmatprep.mubr.bf16.mxu0 0
    %4742 = vmatmul.mubr.bf16.gmra.mrb[0].mxu0 %v261
    %v4743 = vpop.f32.mrb[0].mxu0
    %v4744 = vadd.f32 %v4631, %v4743
    %v4745 = vpop.f32.mrb[0].mxu0
    %v4746 = vpop.f32.mrb[0].mxu0
    %v4747 = vadd.f32 %v4634, %v4746
    %v4748 = vpop.f32.mrb[0].mxu0
    %4749 = vmatprep.mubr.bf16.mxu0 0
    %4750 = vmatmul.mubr.bf16.gmra.mrb[0].mxu0 %v262
    %v4751 = vpop.f32.mrb[0].mxu0
    %v4752 = vadd.f32 %v4639, %v4751
    %v4753 = vpop.f32.mrb[0].mxu0
    %v4754 = vpop.f32.mrb[0].mxu0
    %v4755 = vadd.f32 %v4642, %v4754
    %v4756 = vpop.f32.mrb[0].mxu0
    %4757 = vmatprep.mubr.bf16.mxu0 0
    %4758 = vmatmul.mubr.bf16.gmra.mrb[0].mxu0 %v263
    %v4759 = vpop.f32.mrb[0].mxu0
    %v4760 = vadd.f32 %v4647, %v4759
    %v4761 = vpop.f32.mrb[0].mxu0
    %v4762 = vpop.f32.mrb[0].mxu0
    %v4763 = vadd.f32 %v4650, %v4762
    %v4764 = vpop.f32.mrb[0].mxu0
    %4765 = vdwg.mxu0
    %v4766 = vld [vmem:[#allocation22] sm:$0x1]
    %v4768 = vlaneseq
    %v4769 = vshrl.u32 %v4768, 7
    %v4770 = vsub.s32 0, %v4769
    %v4771 = vrot.slane %v4766, %v4770
    %v4773 = vadd.f32 %v4736, %v4771
    %v4774 = vadd.f32 %v4739, %v4771
    %v4775 = vadd.f32 %v4744, %v4771
    %v4776 = vadd.f32 %v4747, %v4771
    %v4777 = vadd.f32 %v4752, %v4771
    %v4778 = vadd.f32 %v4755, %v4771
    %v4779 = vadd.f32 %v4760, %v4771
    %v4780 = vadd.f32 %v4763, %v4771
    %v4781 = vxor.u32 %v4773, 2147483648
    %v4782 = vxor.u32 %v4774, 2147483648
    %v4783 = vxor.u32 %v4775, 2147483648
    %v4784 = vxor.u32 %v4776, 2147483648
    %v4785 = vxor.u32 %v4777, 2147483648
    %v4786 = vxor.u32 %v4778, 2147483648
    %v4787 = vxor.u32 %v4779, 2147483648
    %v4788 = vxor.u32 %v4780, 2147483648
    %v4789 = vmul.f32 %v4781, 1.442695
    %v4790 = vpow.pop %v4789
    %v4791 = vmul.f32 %v4782, 1.442695
    %v4792 = vpow.pop %v4791
    %v4793 = vmul.f32 %v4783, 1.442695
    %v4794 = vpow.pop %v4793
    %v4795 = vmul.f32 %v4784, 1.442695
    %v4796 = vpow.pop %v4795
    %v4797 = vmul.f32 %v4785, 1.442695
    %v4798 = vpow.pop %v4797
    %v4799 = vmul.f32 %v4786, 1.442695
    %v4800 = vpow.pop %v4799
    %v4801 = vmul.f32 %v4787, 1.442695
    %v4802 = vpow.pop %v4801
    %v4803 = vmul.f32 %v4788, 1.442695
    %v4804 = vpow.pop %v4803
    %v4805 = vadd.f32 %v4790, 1.0
    %v4806 = vadd.f32 %v4792, 1.0
    %v4807 = vadd.f32 %v4794, 1.0
    %v4808 = vadd.f32 %v4796, 1.0
    %v4809 = vadd.f32 %v4798, 1.0
    %v4810 = vadd.f32 %v4800, 1.0
    %v4811 = vadd.f32 %v4802, 1.0
    %v4812 = vadd.f32 %v4804, 1.0
    %v4813 = vrcp.pop %v4805
    %v4814 = vmul.f32 1.0, %v4813
    %v4815 = vrcp.pop %v4806
    %v4816 = vmul.f32 1.0, %v4815
    %v4817 = vrcp.pop %v4807
    %v4818 = vmul.f32 1.0, %v4817
    %v4819 = vrcp.pop %v4808
    %v4820 = vmul.f32 1.0, %v4819
    %v4821 = vrcp.pop %v4809
    %v4822 = vmul.f32 1.0, %v4821
    %v4823 = vrcp.pop %v4810
    %v4824 = vmul.f32 1.0, %v4823
    %v4825 = vrcp.pop %v4811
    %v4826 = vmul.f32 1.0, %v4825
    %v4827 = vrcp.pop %v4812
    %v4828 = vmul.f32 1.0, %v4827
    %v4829 = vld [vmem:[#allocation23] sm:$0xf]
    %v4830 = vld [vmem:[#allocation23 + $0x4] sm:$0xf]
    %v4831 = vld [vmem:[#allocation23 + $0x8] sm:$0xf]
    %v4832 = vld [vmem:[#allocation23 + $0xc] sm:$0xf]
    %v4833 = vld [vmem:[#allocation23 + $0x10] sm:$0xf]
    %v4834 = vld [vmem:[#allocation23 + $0x14] sm:$0xf]
    %v4835 = vld [vmem:[#allocation23 + $0x18] sm:$0xf]
    %v4836 = vld [vmem:[#allocation23 + $0x1c] sm:$0xf]
    %v4837 = vld [vmem:[#allocation23 + $0x20] sm:$0xf]
    %v4838 = vld [vmem:[#allocation23 + $0x24] sm:$0xf]
    %v4839 = vld [vmem:[#allocation23 + $0x28] sm:$0xf]
    %v4840 = vld [vmem:[#allocation23 + $0x2c] sm:$0xf]
    %v4841 = vld [vmem:[#allocation23 + $0x30] sm:$0xf]
    %v4842 = vld [vmem:[#allocation23 + $0x34] sm:$0xf]
    %v4843 = vld [vmem:[#allocation23 + $0x38] sm:$0xf]
    %v4844 = vld [vmem:[#allocation23 + $0x3c] sm:$0xf]
    %v4845 = vld [vmem:[#allocation25] sm:$0x1]
    %v4847 = vlaneseq
    %v4848 = vshrl.u32 %v4847, 7
    %v4849 = vsub.s32 0, %v4848
    %v4850 = vrot.slane %v4845, %v4849
    %v4868 = vunpack.c.l.b16 %v4829
    %v4869 = vunpack.c.l.b16 %v4830
    %v4870 = vunpack.c.l.b16 %v4831
    %v4871 = vunpack.c.l.b16 %v4832
    %v4872 = vunpack.c.l.b16 %v4833
    %v4873 = vunpack.c.l.b16 %v4834
    %v4874 = vunpack.c.l.b16 %v4835
    %v4875 = vunpack.c.l.b16 %v4836
    %v4876 = vunpack.c.l.b16 %v4837
    %v4877 = vunpack.c.l.b16 %v4838
    %v4878 = vunpack.c.l.b16 %v4839
    %v4879 = vunpack.c.l.b16 %v4840
    %v4880 = vunpack.c.l.b16 %v4841
    %v4881 = vunpack.c.l.b16 %v4842
    %v4882 = vunpack.c.l.b16 %v4843
    %v4883 = vunpack.c.l.b16 %v4844
    %v4884 = vpack.c.b16 %v4869, %v4868
    %v4885 = vpack.c.b16 %v4871, %v4870
    %v4886 = vpack.c.b16 %v4873, %v4872
    %v4887 = vpack.c.b16 %v4875, %v4874
    %v4888 = vpack.c.b16 %v4877, %v4876
    %v4889 = vpack.c.b16 %v4879, %v4878
    %v4890 = vpack.c.b16 %v4881, %v4880
    %v4891 = vpack.c.b16 %v4883, %v4882
    %4900 = vmatprep.subr.bf16.mxu0 0
    %4901 = vmatpush1.bf16.msra.mxu0 %v4884
    %4902 = vmatprep.subr.bf16.mxu0 0
    %4903 = vmatpush1.bf16.msra.mxu0 %v4885
    %4904 = vmatprep.subr.bf16.mxu0 0
    %4905 = vmatpush1.bf16.msra.mxu0 %v4886
    %4906 = vmatprep.subr.bf16.mxu0 0
    %4907 = vmatpush1.bf16.msra.mxu0 %v4887
    %4908 = vmatprep.subr.bf16.mxu0 0
    %4909 = vmatpush1.bf16.msra.mxu0 %v4888
    %4910 = vmatprep.subr.bf16.mxu0 0
    %4911 = vmatpush1.bf16.msra.mxu0 %v4889
    %4912 = vmatprep.subr.bf16.mxu0 0
    %4913 = vmatpush1.bf16.msra.mxu0 %v4890
    %4914 = vmatprep.subr.bf16.mxu0 0
    %4915 = vmatpush1.bf16.msra.mxu0 %v4891
    %4916 = vmatprep.subr.bf16.mxu0 0
    %4917 = vmatpush1.bf16.msra.mxu0 0
    %4918 = vmatprep.subr.bf16.mxu0 0
    %4919 = vmatpush1.bf16.msra.mxu0 0
    %4920 = vmatprep.subr.bf16.mxu0 0
    %4921 = vmatpush1.bf16.msra.mxu0 0
    %4922 = vmatprep.subr.bf16.mxu0 0
    %4923 = vmatpush1.bf16.msra.mxu0 0
    %4924 = vmatprep.subr.bf16.mxu0 0
    %4925 = vmatpush1.bf16.msra.mxu0 0
    %4926 = vmatprep.subr.bf16.mxu0 0
    %4927 = vmatpush1.bf16.msra.mxu0 0
    %4928 = vmatprep.subr.bf16.mxu0 0
    %4929 = vmatpush1.bf16.msra.mxu0 0
    %4930 = vmatprep.subr.bf16.mxu0 0
    %4931 = vmatpush1.bf16.msra.mxu0 0
    %4932 = vmatprep.mubr.bf16.mxu0 0
    %4933 = vmatmul.mubr.bf16.gmra.mrb[0].mxu0 %v4504
    %v4934 = vpop.f32.mrb[0].mxu0
    %v4935 = vadd.f32 %v4850, %v4934
    %v4936 = vpop.f32.mrb[0].mxu0
    %v4937 = vpop.f32.mrb[0].mxu0
    %v4938 = vadd.f32 %v4850, %v4937
    %v4939 = vpop.f32.mrb[0].mxu0
    %4940 = vmatprep.mubr.bf16.mxu0 0
    %4941 = vmatmul.mubr.bf16.gmra.mrb[0].mxu0 %v4505
    %v4942 = vpop.f32.mrb[0].mxu0
    %v4943 = vadd.f32 %v4850, %v4942
    %v4944 = vpop.f32.mrb[0].mxu0
    %v4945 = vpop.f32.mrb[0].mxu0
    %v4946 = vadd.f32 %v4850, %v4945
    %v4947 = vpop.f32.mrb[0].mxu0
    %4948 = vmatprep.mubr.bf16.mxu0 0
    %4949 = vmatmul.mubr.bf16.gmra.mrb[0].mxu0 %v4506
    %v4950 = vpop.f32.mrb[0].mxu0
    %v4951 = vadd.f32 %v4850, %v4950
    %v4952 = vpop.f32.mrb[0].mxu0
    %v4953 = vpop.f32.mrb[0].mxu0
    %v4954 = vadd.f32 %v4850, %v4953
    %v4955 = vpop.f32.mrb[0].mxu0
    %4956 = vmatprep.mubr.bf16.mxu0 0
    %4957 = vmatmul.mubr.bf16.gmra.mrb[0].mxu0 %v4507
    %v4958 = vpop.f32.mrb[0].mxu0
    %v4959 = vadd.f32 %v4850, %v4958
    %v4960 = vpop.f32.mrb[0].mxu0
    %v4961 = vpop.f32.mrb[0].mxu0
    %v4962 = vadd.f32 %v4850, %v4961
    %v4963 = vpop.f32.mrb[0].mxu0
    %4964 = vdwg.mxu0
    %v4965 = vmul.f32 %v4814, %v4935
    %v4966 = vmul.f32 %v4816, %v4938
    %v4967 = vmul.f32 %v4818, %v4943
    %v4968 = vmul.f32 %v4820, %v4946
    %v4969 = vmul.f32 %v4822, %v4951
    %v4970 = vmul.f32 %v4824, %v4954
    %v4971 = vmul.f32 %v4826, %v4959
    %v4972 = vmul.f32 %v4828, %v4962
    %4973 = vst [vmem:[#allocation26] sm:$0xff] %v4965
    %4974 = vst [vmem:[#allocation26 + $0x8] sm:$0xff] %v4966
    %4975 = vst [vmem:[#allocation26 + $0x10] sm:$0xff] %v4967
    %4976 = vst [vmem:[#allocation26 + $0x18] sm:$0xff] %v4968
    %4977 = vst [vmem:[#allocation26 + $0x20] sm:$0xff] %v4969
    %4978 = vst [vmem:[#allocation26 + $0x28] sm:$0xff] %v4970
    %4979 = vst [vmem:[#allocation26 + $0x30] sm:$0xff] %v4971
    %4980 = vst [vmem:[#allocation26 + $0x38] sm:$0xff] %v4972
    %v4981 = vld [vmem:[#allocation17] sm:$0x3]
    %v4983 = vsel %vm691, %v4981, 0
    %4985 = vmatprep.subr.mxu0 0.0
    %4986 = vmatpush1.msra.mxu0 %v4965
    %4987 = vmatprep.subr.mxu0 0.0
    %4988 = vmatpush1.msra.mxu0 %v4966
    %4989 = vmatprep.subr.mxu0 0.0
    %4990 = vmatpush1.msra.mxu0 %v4967
    %4991 = vmatprep.subr.mxu0 0.0
    %4992 = vmatpush1.msra.mxu0 %v4968
    %4993 = vmatprep.subr.mxu0 0.0
    %4994 = vmatpush1.msra.mxu0 %v4969
    %4995 = vmatprep.subr.mxu0 0.0
    %4996 = vmatpush1.msra.mxu0 %v4970
    %4997 = vmatprep.subr.mxu0 0.0
    %4998 = vmatpush1.msra.mxu0 %v4971
    %4999 = vmatprep.subr.mxu0 0.0
    %5000 = vmatpush1.msra.mxu0 %v4972
    %5001 = vmatprep.subr.mxu0 0.0
    %5002 = vmatpush1.msra.mxu0 0.0
    %5003 = vmatprep.subr.mxu0 0.0
    %5004 = vmatpush1.msra.mxu0 0.0
    %5005 = vmatprep.subr.mxu0 0.0
    %5006 = vmatpush1.msra.mxu0 0.0
    %5007 = vmatprep.subr.mxu0 0.0
    %5008 = vmatpush1.msra.mxu0 0.0
    %5009 = vmatprep.subr.mxu0 0.0
    %5010 = vmatpush1.msra.mxu0 0.0
    %5011 = vmatprep.subr.mxu0 0.0
    %5012 = vmatpush1.msra.mxu0 0.0
    %5013 = vmatprep.subr.mxu0 0.0
    %5014 = vmatpush1.msra.mxu0 0.0
    %5015 = vmatprep.subr.mxu0 0.0
    %5016 = vmatpush1.msra.mxu0 0.0
    %5017 = vmatprep.subr.mxu0 0.0
    %5018 = vmatpush1.msra.mxu0 0.0
    %5019 = vmatprep.subr.mxu0 0.0
    %5020 = vmatpush1.msra.mxu0 0.0
    %5021 = vmatprep.subr.mxu0 0.0
    %5022 = vmatpush1.msra.mxu0 0.0
    %5023 = vmatprep.subr.mxu0 0.0
    %5024 = vmatpush1.msra.mxu0 0.0
    %5025 = vmatprep.subr.mxu0 0.0
    %5026 = vmatpush1.msra.mxu0 0.0
    %5027 = vmatprep.subr.mxu0 0.0
    %5028 = vmatpush1.msra.mxu0 0.0
    %5029 = vmatprep.subr.mxu0 0.0
    %5030 = vmatpush1.msra.mxu0 0.0
    %5031 = vmatprep.subr.mxu0 0.0
    %5032 = vmatpush1.msra.mxu0 0.0
    %5033 = vmatprep.subr.mxu0 0.0
    %5034 = vmatpush1.msra.mxu0 0.0
    %5035 = vmatprep.subr.mxu0 0.0
    %5036 = vmatpush1.msra.mxu0 0.0
    %5037 = vmatprep.subr.mxu0 0.0
    %5038 = vmatpush1.msra.mxu0 0.0
    %5039 = vmatprep.subr.mxu0 0.0
    %5040 = vmatpush1.msra.mxu0 0.0
    %5041 = vmatprep.subr.mxu0 0.0
    %5042 = vmatpush1.msra.mxu0 0.0
    %5043 = vmatprep.subr.mxu0 0.0
    %5044 = vmatpush1.msra.mxu0 0.0
    %5045 = vmatprep.subr.mxu0 0.0
    %5046 = vmatpush1.msra.mxu0 0.0
    %5047 = vmatprep.subr.mxu0 0.0
    %5048 = vmatpush1.msra.mxu0 0.0
    %5049 = vmatprep.mubr.f32.mxu0 0.0
    %5050 = vmatmul.mubr.f32.gmra.mrb[0].mxu0 %v4983
    %v5051 = vpop.f32.mrb[0].mxu0
    %v5052 = vadd.f32 0.0, %v5051
    %v5053 = vpop.f32.mrb[0].mxu0
    %5054 = vdwg.mxu0
    %5055 = vst [vmem:[#allocation27] sm:$0x3] %v5052
    // Predicated region
    $region122: #{tpu_custom_call.1} parent=1 // pred_check
      _
    $region123: #{tpu_custom_call.1} parent=1 // pred_check_branch
      %5057 = sbr.rel (0) target = $region125
    $region124: #{tpu_custom_call.1} parent=1 // pred_region
      %s5059 = ssub.s32 1024, 1024
      %5060 = vsyncadd [#allocation4], %s5059
      %s5061 = sshll.u32 [#allocation26], 4
      %s5062 = int_to_ptr.vmem [resolvable:$true] %s5061
      %5067 = dma.vmem_to_hbm [thread:$0]  %s5062, 1024, %s15, [#allocation4], 128, 128, 8
    $region125: #{tpu_custom_call.1} parent=1 // pred_fallthru
      _
    // Predicated region
    $region126: #{tpu_custom_call.1} parent=1 // pred_check
      _
    $region127: #{tpu_custom_call.1} parent=1 // pred_check_branch
      %5069 = sbr.rel (0) target = $region129
    $region128: #{tpu_custom_call.1} parent=1 // pred_region
      %s5071 = ssub.s32 32, 32
      %5072 = vsyncadd [#allocation28], %s5071
      %s5074 = sshll.u32 [#allocation27], 4
      %s5075 = int_to_ptr.vmem [resolvable:$true] %s5074
      %5077 = dma.vmem_to_hbm [thread:$0]  %s5075, 32, %s16, [#allocation28]
    $region129: #{tpu_custom_call.1} parent=1 // pred_fallthru
      _
    // Predicated region
    $region130: #{tpu_custom_call.1} parent=1 // pred_check
      _
    $region131: #{tpu_custom_call.1} parent=1 // pred_check_branch
      %5079 = sbr.rel (0) target = $region133
    $region132: #{tpu_custom_call.1} parent=1 // pred_region
      %5080 = dma.done [#allocation4], 1024
    $region133: #{tpu_custom_call.1} parent=1 // pred_fallthru
      _
    // Predicated region
    $region134: #{tpu_custom_call.1} parent=1 // pred_check
      _
    $region135: #{tpu_custom_call.1} parent=1 // pred_check_branch
      %5082 = sbr.rel (0) target = $region137
    $region136: #{tpu_custom_call.1} parent=1 // pred_region
      %5083 = dma.done [#allocation28], 32
    $region137: #{tpu_custom_call.1} parent=1 // pred_fallthru
      _
    %5084 = vsyncpa [#allocation3], 1
    %5085 = vsyncpa [#allocation6], 1
    %5086 = vsyncpa [#allocation9], 1
    %5087 = vsyncpa [#allocation12], 1
    %5088 = vsyncpa [#allocation15], 1
    %5089 = vsyncpa [#allocation18], 1
    %5090 = vsyncpa [#allocation21], 1
    %5091 = vsyncpa [#allocation24], 1
    %5092 = vsyncpa [#allocation4], 1
    %5093 = vsyncpa [#allocation28], 1

</llo_original>
